<compile_context>
chip_gen: v5e
topology: v5e:2x2
jax: 0.10.0
libtpu: 0.0.40
codegen_flags: <defaults>
</compile_context>

<pallas_src>
import functools

import jax
import jax.numpy as jnp
import numpy as np
from jax.experimental import pallas as pl
from jax.experimental.pallas import tpu as pltpu


# ---------------------------------------------------------------------------
# Pallas kernel: 3x3 'same' conv tile as 9 in-kernel taps -> 9 MXU matmuls
# with f32 accumulation, + bias + LeakyReLU, bf16 store.
# ---------------------------------------------------------------------------
def _conv3x3_leaky_kernel(xp_ref, w_ref, b_ref, o_ref, *, H, W, neg_slope):
    # xp_ref: (N, H+2, W+2, Cin) bf16   zero-padded activation (whole image)
    # w_ref : (9, Cin, tco)      bf16   weight slice for this Cout tile
    # b_ref : (1, tco)           f32
    # o_ref : (N*H*W, tco)       bf16
    N = xp_ref.shape[0]
    Cin = xp_ref.shape[-1]
    tco = o_ref.shape[-1]
    M = N * H * W

    acc = jnp.zeros((M, tco), jnp.float32)
    for kh in range(3):                       # 9 static taps, fully unrolled
        for kw in range(3):
            tap = xp_ref[:, pl.ds(kh, H), pl.ds(kw, W), :]       # (N, H, W, Cin)
            tap = tap.reshape(M, Cin)          # in-register im2col rows (W % 8 == 0)
            acc = acc + jnp.dot(tap, w_ref[kh * 3 + kw],
                                preferred_element_type=jnp.float32)
    acc = acc + b_ref[...]                     # (1, tco) broadcasts over rows
    acc = jnp.where(acc >= 0, acc, neg_slope * acc)              # LeakyReLU
    o_ref[...] = acc.astype(o_ref.dtype)       # bf16 store (lane-dense)


def _pick_cout_tile(cout):
    # Aim for >= 4 grid steps (v7x megacore: >= 2 steps per TensorCore) while
    # keeping the tile a multiple of 128 lanes so stores are unmasked.
    if cout % 128 != 0:
        return cout                            # tiny Cout: full extent
    tco = max(128, cout // 4)
    while cout % tco != 0:
        tco -= 128
    return tco


def conv3x3_leaky(x_nhwc, w_hwio, b, *, neg_slope=0.1, block_cout=None):
    """3x3 'same' conv + bias + LeakyReLU in NHWC; returns bf16 NHWC.

    The whole padded activation is kept as one VMEM block (fetched once) and
    the 9 taps are formed in-kernel -> no im2col materialisation in HBM; the
    weight is streamed in Cout tiles through the BlockSpec pipeline.
    """
    N, H, W, Cin = x_nhwc.shape
    Cout = w_hwio.shape[-1]
    M = N * H * W

    xp = jnp.pad(x_nhwc.astype(jnp.bfloat16), ((0, 0), (1, 1), (1, 1), (0, 0)))
    wk = w_hwio.astype(jnp.bfloat16).reshape(9, Cin, Cout)   # tap-major weights
    b2 = b.reshape(1, Cout).astype(jnp.float32)

    tco = block_cout if block_cout is not None else _pick_cout_tile(Cout)
    assert Cout % tco == 0, (Cout, tco)
    grid = (Cout // tco,)

    kern = functools.partial(_conv3x3_leaky_kernel, H=H, W=W, neg_slope=neg_slope)
    out = pl.pallas_call(
        kern,
        out_shape=jax.ShapeDtypeStruct((M, Cout), jnp.bfloat16),
        grid_spec=pltpu.PrefetchScalarGridSpec(
            num_scalar_prefetch=0,
            grid=grid,
            in_specs=[
                # Constant index -> padded activation DMA'd once for the call.
                pl.BlockSpec((N, H + 2, W + 2, Cin), lambda j: (0, 0, 0, 0)),
                # Cout-tiled weights stream through the pipeline (double-buffered).
                pl.BlockSpec((9, Cin, tco), lambda j: (0, 0, j)),
                pl.BlockSpec((1, tco), lambda j: (0, j)),
            ],
            out_specs=pl.BlockSpec((M, tco), lambda j: (0, j)),
        ),
        compiler_params=pltpu.CompilerParams(
            dimension_semantics=("parallel",),
            vmem_limit_bytes=32 * 1024 * 1024,
        ),
    )(xp, wk, b2)
    return out.reshape(N, H, W, Cout)


# ---------------------------------------------------------------------------
# depth_to_space (NHWC form of the quick96 NCHW helper: channel = (s1, s2, oc))
# ---------------------------------------------------------------------------
def depth_to_space_nhwc(x, size=2):
    n, h, w, c = x.shape
    oc = c // (size * size)
    x = x.reshape(n, h, w, size, size, oc)     # channel splits as (s1, s2, oc)
    x = x.transpose(0, 1, 3, 2, 4, 5)          # (n, h, s1, w, s2, oc)
    return x.reshape(n, h * size, w * size, oc)


# ---------------------------------------------------------------------------
# Upsample forward (Pallas path): conv3x3 + leaky(0.1) + depth_to_space(2)
# ---------------------------------------------------------------------------
def upsample_forward(x_nchw, w_oihw, b):
    x = jnp.transpose(x_nchw, (0, 2, 3, 1))            # NCHW -> NHWC
    w_hwio = jnp.transpose(w_oihw, (2, 3, 1, 0))       # OIHW -> HWIO
    y = conv3x3_leaky(x, w_hwio, b, neg_slope=0.1)     # bf16 NHWC
    y = depth_to_space_nhwc(y, 2)                      # bf16, cheap glue
    return jnp.transpose(y, (0, 3, 1, 2)).astype(jnp.float32)   # NCHW f32


# ---------------------------------------------------------------------------
# Pure-JAX reference: literal NCHW port of the PyTorch module
# ---------------------------------------------------------------------------
def _depth_to_space_nchw(x, size=2):           # exact port of quick96.depth_to_space
    b_, c, h, w = x.shape
    oc = c // (size * size)
    x = x.reshape(b_, size, size, oc, h, w)
    x = x.transpose(0, 3, 4, 1, 5, 2)
    return x.reshape(b_, oc, h * size, w * size)


def upsample_reference(x_nchw, w_oihw, b):
    y = jax.lax.conv_general_dilated(
        x_nchw.astype(jnp.bfloat16), w_oihw.astype(jnp.bfloat16), (1, 1), "SAME",
        dimension_numbers=("NCHW", "OIHW", "NCHW"),
        preferred_element_type=jnp.float32,
    )
    y = y + b.reshape(1, -1, 1, 1)
    y = jnp.where(y >= 0, y, 0.1 * y)          # LeakyReLU(0.1)
    return _depth_to_space_nchw(y, 2)


# ---------------------------------------------------------------------------
# Deterministic PyTorch-style init (Conv2d default: U(-k, k), k = 1/sqrt(fan_in))
# ---------------------------------------------------------------------------
def init_params(seed, in_channels, out_channels):
    kw_, kb_ = jax.random.split(jax.random.PRNGKey(seed))
    k = 1.0 / np.sqrt(in_channels * 9)
    w = jax.random.uniform(kw_, (out_channels, in_channels, 3, 3), jnp.float32, -k, k)
    b = jax.random.uniform(kb_, (out_channels,), jnp.float32, -k, k)
    return w, b


# ---------------------------------------------------------------------------
if __name__ == "__main__":
    # Small shapes consistent with the module: Upsample(128, 512) on a
    # batch-2, 8x8 feature map (PyTorch NCHW convention).
    N, Cin, Cout, H, W = 2, 128, 512, 8, 8
    w_oihw, bias = init_params(0, Cin, Cout)
    x_nchw = jax.random.normal(jax.random.PRNGKey(0), (N, Cin, H, W), jnp.float32)

    fwd = jax.jit(upsample_forward)
    y = jax.block_until_ready(fwd(x_nchw, w_oihw, bias))

    # shape / finiteness checks: depth_to_space(2) -> (N, Cout/4, 2H, 2W)
    assert y.shape == (N, Cout // 4, 2 * H, 2 * W), y.shape
    y_np = np.asarray(y)
    assert np.all(np.isfinite(y_np))

    y_ref = jax.block_until_ready(jax.jit(upsample_reference)(x_nchw, w_oihw, bias))
    # Tolerance covers the bf16 store of the conv output (reference keeps f32)
    # plus bf16-product / accumulation-order differences on the MXU.
    np.testing.assert_allclose(y_np, np.asarray(y_ref), atol=2e-2, rtol=2e-2)

    print("KERNEL_OK")
</pallas_src>

<mosaic_0001>
module attributes {stable_mosaic.version = 11 : i64} {
  func.func @_conv3x3_leaky_kernel(%arg0: i32, %arg1: memref<2x10x10x128xbf16, #tpu.memory_space<vmem>>, %arg2: memref<9x128x128xbf16, #tpu.memory_space<vmem>>, %arg3: memref<1x128xf32, #tpu.memory_space<vmem>>, %arg4: memref<128x128xbf16, #tpu.memory_space<vmem>>) attributes {dimension_semantics = [#tpu.dimension_semantics<parallel>], iteration_bounds = array<i64: 4>, scalar_prefetch = 0 : i64, scratch_operands = 0 : i64, tpu.core_type = #tpu.core_type<tc>, window_params = [{pipeline_mode = #tpu.pipeline_mode<synchronous>, transform_indices = @transform_0, window_bounds = array<i64: 2, 10, 10, 128>}, {transform_indices = @transform_1, window_bounds = array<i64: 9, 128, 128>}, {transform_indices = @transform_2, window_bounds = array<i64: 1, 128>}, {transform_indices = @transform_3, window_bounds = array<i64: 128, 128>}]} {
    %cst = arith.constant 0.000000e+00 : f32
    %0 = vector.broadcast %cst : f32 to vector<128x128xf32>
    %c0 = arith.constant 0 : index
    %c0_0 = arith.constant 0 : index
    %c0_1 = arith.constant 0 : index
    %c0_2 = arith.constant 0 : index
    %1 = vector.load %arg1[%c0, %c0_0, %c0_1, %c0_2] : memref<2x10x10x128xbf16, #tpu.memory_space<vmem>>, vector<2x8x8x128xbf16>
    %2 = vector.shape_cast %1 : vector<2x8x8x128xbf16> to vector<128x128xbf16>
    %c0_3 = arith.constant 0 : index
    %c0_4 = arith.constant 0 : index
    %c0_5 = arith.constant 0 : index
    %3 = vector.load %arg2[%c0_3, %c0_4, %c0_5] : memref<9x128x128xbf16, #tpu.memory_space<vmem>>, vector<1x128x128xbf16>
    %4 = vector.shape_cast %3 : vector<1x128x128xbf16> to vector<128x128xbf16>
    %cst_6 = arith.constant dense<0.000000e+00> : vector<128x128xf32>
    %5 = tpu.matmul %2, %4, %cst_6 {dimension_numbers = #tpu.dot_dimension_numbers<[1], [0], [0], [1], [0, 0, 1, 1], [], []>} : vector<128x128xbf16>, vector<128x128xbf16>, vector<128x128xf32> -> vector<128x128xf32>
    %6 = arith.addf %0, %5 : vector<128x128xf32>
    %c0_7 = arith.constant 0 : index
    %c0_8 = arith.constant 0 : index
    %c1 = arith.constant 1 : index
    %c0_9 = arith.constant 0 : index
    %7 = vector.load %arg1[%c0_7, %c0_8, %c1, %c0_9] : memref<2x10x10x128xbf16, #tpu.memory_space<vmem>>, vector<2x8x8x128xbf16>
    %8 = vector.shape_cast %7 : vector<2x8x8x128xbf16> to vector<128x128xbf16>
    %c1_10 = arith.constant 1 : index
    %c0_11 = arith.constant 0 : index
    %c0_12 = arith.constant 0 : index
    %9 = vector.load %arg2[%c1_10, %c0_11, %c0_12] : memref<9x128x128xbf16, #tpu.memory_space<vmem>>, vector<1x128x128xbf16>
    %10 = vector.shape_cast %9 : vector<1x128x128xbf16> to vector<128x128xbf16>
    %cst_13 = arith.constant dense<0.000000e+00> : vector<128x128xf32>
    %11 = tpu.matmul %8, %10, %cst_13 {dimension_numbers = #tpu.dot_dimension_numbers<[1], [0], [0], [1], [0, 0, 1, 1], [], []>} : vector<128x128xbf16>, vector<128x128xbf16>, vector<128x128xf32> -> vector<128x128xf32>
    %12 = arith.addf %6, %11 : vector<128x128xf32>
    %c0_14 = arith.constant 0 : index
    %c0_15 = arith.constant 0 : index
    %c2 = arith.constant 2 : index
    %c0_16 = arith.constant 0 : index
    %13 = vector.load %arg1[%c0_14, %c0_15, %c2, %c0_16] : memref<2x10x10x128xbf16, #tpu.memory_space<vmem>>, vector<2x8x8x128xbf16>
    %14 = vector.shape_cast %13 : vector<2x8x8x128xbf16> to vector<128x128xbf16>
    %c2_17 = arith.constant 2 : index
    %c0_18 = arith.constant 0 : index
    %c0_19 = arith.constant 0 : index
    %15 = vector.load %arg2[%c2_17, %c0_18, %c0_19] : memref<9x128x128xbf16, #tpu.memory_space<vmem>>, vector<1x128x128xbf16>
    %16 = vector.shape_cast %15 : vector<1x128x128xbf16> to vector<128x128xbf16>
    %cst_20 = arith.constant dense<0.000000e+00> : vector<128x128xf32>
    %17 = tpu.matmul %14, %16, %cst_20 {dimension_numbers = #tpu.dot_dimension_numbers<[1], [0], [0], [1], [0, 0, 1, 1], [], []>} : vector<128x128xbf16>, vector<128x128xbf16>, vector<128x128xf32> -> vector<128x128xf32>
    %18 = arith.addf %12, %17 : vector<128x128xf32>
    %c0_21 = arith.constant 0 : index
    %c1_22 = arith.constant 1 : index
    %c0_23 = arith.constant 0 : index
    %c0_24 = arith.constant 0 : index
    %19 = vector.load %arg1[%c0_21, %c1_22, %c0_23, %c0_24] : memref<2x10x10x128xbf16, #tpu.memory_space<vmem>>, vector<2x8x8x128xbf16>
    %20 = vector.shape_cast %19 : vector<2x8x8x128xbf16> to vector<128x128xbf16>
    %c3 = arith.constant 3 : index
    %c0_25 = arith.constant 0 : index
    %c0_26 = arith.constant 0 : index
    %21 = vector.load %arg2[%c3, %c0_25, %c0_26] : memref<9x128x128xbf16, #tpu.memory_space<vmem>>, vector<1x128x128xbf16>
    %22 = vector.shape_cast %21 : vector<1x128x128xbf16> to vector<128x128xbf16>
    %cst_27 = arith.constant dense<0.000000e+00> : vector<128x128xf32>
    %23 = tpu.matmul %20, %22, %cst_27 {dimension_numbers = #tpu.dot_dimension_numbers<[1], [0], [0], [1], [0, 0, 1, 1], [], []>} : vector<128x128xbf16>, vector<128x128xbf16>, vector<128x128xf32> -> vector<128x128xf32>
    %24 = arith.addf %18, %23 : vector<128x128xf32>
    %c0_28 = arith.constant 0 : index
    %c1_29 = arith.constant 1 : index
    %c1_30 = arith.constant 1 : index
    %c0_31 = arith.constant 0 : index
    %25 = vector.load %arg1[%c0_28, %c1_29, %c1_30, %c0_31] : memref<2x10x10x128xbf16, #tpu.memory_space<vmem>>, vector<2x8x8x128xbf16>
    %26 = vector.shape_cast %25 : vector<2x8x8x128xbf16> to vector<128x128xbf16>
    %c4 = arith.constant 4 : index
    %c0_32 = arith.constant 0 : index
    %c0_33 = arith.constant 0 : index
    %27 = vector.load %arg2[%c4, %c0_32, %c0_33] : memref<9x128x128xbf16, #tpu.memory_space<vmem>>, vector<1x128x128xbf16>
    %28 = vector.shape_cast %27 : vector<1x128x128xbf16> to vector<128x128xbf16>
    %cst_34 = arith.constant dense<0.000000e+00> : vector<128x128xf32>
    %29 = tpu.matmul %26, %28, %cst_34 {dimension_numbers = #tpu.dot_dimension_numbers<[1], [0], [0], [1], [0, 0, 1, 1], [], []>} : vector<128x128xbf16>, vector<128x128xbf16>, vector<128x128xf32> -> vector<128x128xf32>
    %30 = arith.addf %24, %29 : vector<128x128xf32>
    %c0_35 = arith.constant 0 : index
    %c1_36 = arith.constant 1 : index
    %c2_37 = arith.constant 2 : index
    %c0_38 = arith.constant 0 : index
    %31 = vector.load %arg1[%c0_35, %c1_36, %c2_37, %c0_38] : memref<2x10x10x128xbf16, #tpu.memory_space<vmem>>, vector<2x8x8x128xbf16>
    %32 = vector.shape_cast %31 : vector<2x8x8x128xbf16> to vector<128x128xbf16>
    %c5 = arith.constant 5 : index
    %c0_39 = arith.constant 0 : index
    %c0_40 = arith.constant 0 : index
    %33 = vector.load %arg2[%c5, %c0_39, %c0_40] : memref<9x128x128xbf16, #tpu.memory_space<vmem>>, vector<1x128x128xbf16>
    %34 = vector.shape_cast %33 : vector<1x128x128xbf16> to vector<128x128xbf16>
    %cst_41 = arith.constant dense<0.000000e+00> : vector<128x128xf32>
    %35 = tpu.matmul %32, %34, %cst_41 {dimension_numbers = #tpu.dot_dimension_numbers<[1], [0], [0], [1], [0, 0, 1, 1], [], []>} : vector<128x128xbf16>, vector<128x128xbf16>, vector<128x128xf32> -> vector<128x128xf32>
    %36 = arith.addf %30, %35 : vector<128x128xf32>
    %c0_42 = arith.constant 0 : index
    %c2_43 = arith.constant 2 : index
    %c0_44 = arith.constant 0 : index
    %c0_45 = arith.constant 0 : index
    %37 = vector.load %arg1[%c0_42, %c2_43, %c0_44, %c0_45] : memref<2x10x10x128xbf16, #tpu.memory_space<vmem>>, vector<2x8x8x128xbf16>
    %38 = vector.shape_cast %37 : vector<2x8x8x128xbf16> to vector<128x128xbf16>
    %c6 = arith.constant 6 : index
    %c0_46 = arith.constant 0 : index
    %c0_47 = arith.constant 0 : index
    %39 = vector.load %arg2[%c6, %c0_46, %c0_47] : memref<9x128x128xbf16, #tpu.memory_space<vmem>>, vector<1x128x128xbf16>
    %40 = vector.shape_cast %39 : vector<1x128x128xbf16> to vector<128x128xbf16>
    %cst_48 = arith.constant dense<0.000000e+00> : vector<128x128xf32>
    %41 = tpu.matmul %38, %40, %cst_48 {dimension_numbers = #tpu.dot_dimension_numbers<[1], [0], [0], [1], [0, 0, 1, 1], [], []>} : vector<128x128xbf16>, vector<128x128xbf16>, vector<128x128xf32> -> vector<128x128xf32>
    %42 = arith.addf %36, %41 : vector<128x128xf32>
    %c0_49 = arith.constant 0 : index
    %c2_50 = arith.constant 2 : index
    %c1_51 = arith.constant 1 : index
    %c0_52 = arith.constant 0 : index
    %43 = vector.load %arg1[%c0_49, %c2_50, %c1_51, %c0_52] : memref<2x10x10x128xbf16, #tpu.memory_space<vmem>>, vector<2x8x8x128xbf16>
    %44 = vector.shape_cast %43 : vector<2x8x8x128xbf16> to vector<128x128xbf16>
    %c7 = arith.constant 7 : index
    %c0_53 = arith.constant 0 : index
    %c0_54 = arith.constant 0 : index
    %45 = vector.load %arg2[%c7, %c0_53, %c0_54] : memref<9x128x128xbf16, #tpu.memory_space<vmem>>, vector<1x128x128xbf16>
    %46 = vector.shape_cast %45 : vector<1x128x128xbf16> to vector<128x128xbf16>
    %cst_55 = arith.constant dense<0.000000e+00> : vector<128x128xf32>
    %47 = tpu.matmul %44, %46, %cst_55 {dimension_numbers = #tpu.dot_dimension_numbers<[1], [0], [0], [1], [0, 0, 1, 1], [], []>} : vector<128x128xbf16>, vector<128x128xbf16>, vector<128x128xf32> -> vector<128x128xf32>
    %48 = arith.addf %42, %47 : vector<128x128xf32>
    %c0_56 = arith.constant 0 : index
    %c2_57 = arith.constant 2 : index
    %c2_58 = arith.constant 2 : index
    %c0_59 = arith.constant 0 : index
    %49 = vector.load %arg1[%c0_56, %c2_57, %c2_58, %c0_59] : memref<2x10x10x128xbf16, #tpu.memory_space<vmem>>, vector<2x8x8x128xbf16>
    %50 = vector.shape_cast %49 : vector<2x8x8x128xbf16> to vector<128x128xbf16>
    %c8 = arith.constant 8 : index
    %c0_60 = arith.constant 0 : index
    %c0_61 = arith.constant 0 : index
    %51 = vector.load %arg2[%c8, %c0_60, %c0_61] : memref<9x128x128xbf16, #tpu.memory_space<vmem>>, vector<1x128x128xbf16>
    %52 = vector.shape_cast %51 : vector<1x128x128xbf16> to vector<128x128xbf16>
    %cst_62 = arith.constant dense<0.000000e+00> : vector<128x128xf32>
    %53 = tpu.matmul %50, %52, %cst_62 {dimension_numbers = #tpu.dot_dimension_numbers<[1], [0], [0], [1], [0, 0, 1, 1], [], []>} : vector<128x128xbf16>, vector<128x128xbf16>, vector<128x128xf32> -> vector<128x128xf32>
    %54 = arith.addf %48, %53 : vector<128x128xf32>
    %c0_63 = arith.constant 0 : index
    %c0_64 = arith.constant 0 : index
    %55 = vector.load %arg3[%c0_63, %c0_64] : memref<1x128xf32, #tpu.memory_space<vmem>>, vector<1x128xf32>
    %56 = vector.broadcast %55 : vector<1x128xf32> to vector<128x128xf32>
    %57 = arith.addf %54, %56 : vector<128x128xf32>
    %cst_65 = arith.constant 0.000000e+00 : f32
    %58 = vector.broadcast %cst_65 : f32 to vector<128x128xf32>
    %59 = arith.cmpf oge, %57, %58 : vector<128x128xf32>
    %cst_66 = arith.constant 1.000000e-01 : f32
    %60 = vector.broadcast %cst_66 : f32 to vector<128x128xf32>
    %61 = arith.mulf %60, %57 : vector<128x128xf32>
    %62 = arith.select %59, %57, %61 : vector<128x128xi1>, vector<128x128xf32>
    %63 = arith.truncf %62 : vector<128x128xf32> to vector<128x128xbf16>
    %c0_67 = arith.constant 0 : index
    %c0_68 = arith.constant 0 : index
    %64 = vector.load %arg4[%c0_67, %c0_68] : memref<128x128xbf16, #tpu.memory_space<vmem>>, vector<128x128xbf16>
    tpu.vector_store %arg4[%c0_67, %c0_68], %63 {strides = array<i32>} : memref<128x128xbf16, #tpu.memory_space<vmem>>, vector<128x128xbf16>,
    return
  }
  func.func @transform_0(%arg0: i32) -> (i32, i32, i32, i32) {
    %c0_i32 = arith.constant 0 : i32
    %c0_i32_0 = arith.constant 0 : i32
    %c0_i32_1 = arith.constant 0 : i32
    %c0_i32_2 = arith.constant 0 : i32
    %c0_i32_3 = arith.constant 0 : i32
    return %c0_i32, %c0_i32_0, %c0_i32_1, %c0_i32_2 : i32, i32, i32, i32
  }
  func.func @transform_1(%arg0: i32) -> (i32, i32, i32) {
    %c0_i32 = arith.constant 0 : i32
    %c0_i32_0 = arith.constant 0 : i32
    %c0_i32_1 = arith.constant 0 : i32
    return %c0_i32, %c0_i32_0, %arg0 : i32, i32, i32
  }
  func.func @transform_2(%arg0: i32) -> (i32, i32) {
    %c0_i32 = arith.constant 0 : i32
    %c0_i32_0 = arith.constant 0 : i32
    return %c0_i32, %arg0 : i32, i32
  }
  func.func @transform_3(%arg0: i32) -> (i32, i32) {
    %c0_i32 = arith.constant 0 : i32
    %c0_i32_0 = arith.constant 0 : i32
    return %c0_i32, %arg0 : i32, i32
  }
}

</mosaic_0001>

<llo_original>
// kernel: upsample_forward.1
$region0: #{upsample_forward.1}
  #allocation0 [shape = 'u32[]', space=smem, size = 0x4, offset = 0x4, fixed_abs, tag = 'smem constant byte address 0x4 - core index']
  #allocation1 [shape = 'u32[72,128]{1,0:T(1,128)}', space=vmem, size = 0x9000, scoped, tag = 'internal scratch']
  %s0 = inlined_call_operand.vmem [shape: bf16[2,10,10,128], index: 0, kind: input, shape index: {}]
  %s1 = inlined_call_operand.vmem [shape: bf16[9,128,512], index: 1, kind: input, shape index: {}]
  %s2 = inlined_call_operand.vmem [shape: f32[1,512], index: 2, kind: input, shape index: {}]
  %s3 = inlined_call_operand.vmem [shape: bf16[128,512], index: 3, kind: output, shape index: {}]
  %s4 = sld [smem:[#allocation0]]
  $region123: #{upsample_forward.1} parent=0
    _
  %s6 = ssub.s32 1, %s4
  %s7 = scalar_select 0, %s6, %s4
  $region1: #{upsample_forward.1} parent=0
    #allocation2 [shape = 'u8[589824]{0}', space=vmem, size = 0x90000, scoped, tag = 'input window, operand 1']
    #allocation3 [shape = 'u8[65536]{0}', space=vmem, size = 0x10000, scoped, tag = 'output window, operand 0']
    loop: start=0, step=1, limit=6
    $region2: #{upsample_forward.1} parent=1 // loop_pre_header
      _
    $region3: #{upsample_forward.1} parent=1 // loop_header
      %s9 = sphi 0, %s13
      %p10 = scmp.ge.s32.totalorder %s9, 6
      %s17 = sphi 0, %s17
      %s19 = sphi 0, %s17
      %s20 = sphi 0, %s19
      %s34 = sphi 0, %s20
      %s40 = sphi 0, %s42
      %s43 = sphi 0, %s40
      %s44 = sphi 0, %s43
      %s60 = sphi 0, %s44
      %s66 = sphi 0, %s68
      %s69 = sphi 0, %s66
      %s70 = sphi 0, %s69
      %s86 = sphi 0, %s70
      %s92 = sphi 0, %s94
      %s95 = sphi 0, %s92
      %s96 = sphi 0, %s95
      %s112 = sphi 0, %s96
    $region4: #{upsample_forward.1} parent=1 // loop_header_branch
      %12 = sbr.rel (%p10) target = $region8
    $region5: #{upsample_forward.1} parent=1 // loop_body
      %s14 = ssub.s32 %s9, 1
      %s15 = ssub.s32 %s9, 2
      %s16 = sadd.s32 %s9, 1
      %s18 = sadd.s32 %s17, 1
      %p21 = scmp.eq.s32.totalorder %s9, 3
      %p22 = scmp.ne.s32.totalorder %s17, %s19
      %p23 = scmp.eq.s32.totalorder %s9, 0
      %p24 = por %p22, %p23
      %p25 = scmp.ne.s32.totalorder %s17, %s19
      %p26 = scmp.eq.s32.totalorder %s14, 3
      %p27 = por %p25, %p26
      %p28 = scmp.ne.s32.totalorder %s19, %s20
      %p29 = scmp.eq.s32.totalorder %s14, 0
      %p30 = por %p28, %p29
      %p31 = scmp.ne.s32.totalorder %s19, %s20
      %p32 = scmp.eq.s32.totalorder %s15, 3
      %p33 = por %p31, %p32
      %p35 = scmp.ne.s32.totalorder %s20, %s34
      %p36 = scmp.eq.s32.totalorder %s15, 0
      %p37 = por %p35, %p36
      %s38 = ssub.s32 %s9, %s16
      %p39 = scmp.eq.s32.totalorder %s38, 0
      %s41 = sadd.s32 %s40, 1
      %s42 = scalar_select %p39, %s40, %s41
      %p45 = pneg %p39
      %p46 = scmp.eq.s32.totalorder %s9, 3
      %p47 = por %p45, %p46
      %p48 = scmp.ne.s32.totalorder %s40, %s43
      %p49 = scmp.eq.s32.totalorder %s9, 0
      %p50 = por %p48, %p49
      %p51 = scmp.ne.s32.totalorder %s40, %s43
      %p52 = scmp.eq.s32.totalorder %s14, 3
      %p53 = por %p51, %p52
      %p54 = scmp.ne.s32.totalorder %s43, %s44
      %p55 = scmp.eq.s32.totalorder %s14, 0
      %p56 = por %p54, %p55
      %p57 = scmp.ne.s32.totalorder %s43, %s44
      %p58 = scmp.eq.s32.totalorder %s15, 3
      %p59 = por %p57, %p58
      %p61 = scmp.ne.s32.totalorder %s44, %s60
      %p62 = scmp.eq.s32.totalorder %s15, 0
      %p63 = por %p61, %p62
      %s64 = ssub.s32 %s9, %s16
      %p65 = scmp.eq.s32.totalorder %s64, 0
      %s67 = sadd.s32 %s66, 1
      %s68 = scalar_select %p65, %s66, %s67
      %p71 = pneg %p65
      %p72 = scmp.eq.s32.totalorder %s9, 3
      %p73 = por %p71, %p72
      %p74 = scmp.ne.s32.totalorder %s66, %s69
      %p75 = scmp.eq.s32.totalorder %s9, 0
      %p76 = por %p74, %p75
      %p77 = scmp.ne.s32.totalorder %s66, %s69
      %p78 = scmp.eq.s32.totalorder %s14, 3
      %p79 = por %p77, %p78
      %p80 = scmp.ne.s32.totalorder %s69, %s70
      %p81 = scmp.eq.s32.totalorder %s14, 0
      %p82 = por %p80, %p81
      %p83 = scmp.ne.s32.totalorder %s69, %s70
      %p84 = scmp.eq.s32.totalorder %s15, 3
      %p85 = por %p83, %p84
      %p87 = scmp.ne.s32.totalorder %s70, %s86
      %p88 = scmp.eq.s32.totalorder %s15, 0
      %p89 = por %p87, %p88
      %s90 = ssub.s32 %s9, %s16
      %p91 = scmp.eq.s32.totalorder %s90, 0
      %s93 = sadd.s32 %s92, 1
      %s94 = scalar_select %p91, %s92, %s93
      %p97 = pneg %p91
      %p98 = scmp.eq.s32.totalorder %s9, 3
      %p99 = por %p97, %p98
      %p100 = scmp.ne.s32.totalorder %s92, %s95
      %p101 = scmp.eq.s32.totalorder %s9, 0
      %p102 = por %p100, %p101
      %p103 = scmp.ne.s32.totalorder %s92, %s95
      %p104 = scmp.eq.s32.totalorder %s14, 3
      %p105 = por %p103, %p104
      %p106 = scmp.ne.s32.totalorder %s95, %s96
      %p107 = scmp.eq.s32.totalorder %s14, 0
      %p108 = por %p106, %p107
      %p109 = scmp.ne.s32.totalorder %s95, %s96
      %p110 = scmp.eq.s32.totalorder %s15, 3
      %p111 = por %p109, %p110
      %p113 = scmp.ne.s32.totalorder %s96, %s112
      %p114 = scmp.eq.s32.totalorder %s15, 0
      %p115 = por %p113, %p114
      %p116 = scmp.le.s32.totalorder 1, %s9
      %p117 = scmp.lt.s32.totalorder %s9, 5
      %p118 = pnand %p116, %p117
      %p119 = pneg %p118
      // Predicated region
      $region9: #{upsample_forward.1} parent=5 // pred_check
        _
      $region10: #{upsample_forward.1} parent=5 // pred_check_branch
        %121 = sbr.rel (%p118) target = $region12
      $region11: #{upsample_forward.1} parent=5 // pred_region
        %s122 = ssub.s32 %s9, 1
        // Predicated region
        $region13: #{upsample_forward.1} parent=11 // pred_check
          %p123 = pneg %p30
        $region14: #{upsample_forward.1} parent=11 // pred_check_branch
          %125 = sbr.rel (%p123) target = $region16
        $region15: #{upsample_forward.1} parent=11 // pred_region
          _
        $region16: #{upsample_forward.1} parent=11 // pred_fallthru
          _
      $region12: #{upsample_forward.1} parent=5 // pred_fallthru
        _
      %p126 = scmp.lt.s32.totalorder %s9, 4
      // Predicated region
      $region17: #{upsample_forward.1} parent=5 // pred_check
        %p127 = pneg %p126
      $region18: #{upsample_forward.1} parent=5 // pred_check_branch
        %129 = sbr.rel (%p127) target = $region20
      $region19: #{upsample_forward.1} parent=5 // pred_region
        // Predicated region
        $region21: #{upsample_forward.1} parent=19 // pred_check
          %p130 = pneg %p50
        $region22: #{upsample_forward.1} parent=19 // pred_check_branch
          %132 = sbr.rel (%p130) target = $region24
        $region23: #{upsample_forward.1} parent=19 // pred_region
          %s133 = sand.u32 %s40, 1
          %s134 = sand.u32 %s40, 1
          %s135 = smul.addr %s134, 576
          %s136 = scalar_lea.vmem [#allocation2], %s135
          %s137 = smul.addr %s9, 4
          %s138 = scalar_lea.vmem %s1, %s137
          // Predicated region
          $region25: #{upsample_forward.1} parent=23 // pred_check
            _
          $region26: #{upsample_forward.1} parent=23 // pred_check_branch
            %140 = sbr.rel (0) target = $region28
          $region27: #{upsample_forward.1} parent=23 // pred_region
            // Predicated region
            $region29: #{upsample_forward.1} parent=27 // pred_check
              _
            $region30: #{upsample_forward.1} parent=27 // pred_check_branch
              %142 = sbr.rel target = $region32
            $region31: #{upsample_forward.1} parent=27 // pred_region
              // Predicated region
              $region44: #{upsample_forward.1} parent=31 // pred_check
                _
              $region45: #{upsample_forward.1} parent=31 // pred_check_branch
                %444 = sbr.rel (0) target = $region47
              $region46: #{upsample_forward.1} parent=31 // pred_region
                loop: start=0, step=1, limit=1
                $region48: #{upsample_forward.1} parent=46 // loop_pre_header
                  _
                $region49: #{upsample_forward.1} parent=46 // loop_header
                  %s446 = sphi 0, %s450
                  %p447 = scmp.ge.s32.totalorder %s446, 1
                  %s451 = sphi %s138, %s138
                  %s452 = sphi %s136, %s136
                $region50: #{upsample_forward.1} parent=46 // loop_header_branch
                  %449 = sbr.rel (%p447) target = $region54
                $region51: #{upsample_forward.1} parent=46 // loop_body
                  _
                $region52: #{upsample_forward.1} parent=46 // loop_footer
                  %s450 = sadd.s32 1, %s446
                $region53: #{upsample_forward.1} parent=46 // loop_footer_branch
                  %445 = sbr.rel target = $region49
                $region54: #{upsample_forward.1} parent=46 // loop_exit
                  _
                %s454 = ssub.s32 16, 1
                loop: start=0, step=1, limit=1
                $region55: #{upsample_forward.1} parent=46 // loop_pre_header
                  _
                $region56: #{upsample_forward.1} parent=46 // loop_header
                  %s456 = sphi 0, %s460
                  %p457 = scmp.ge.s32.totalorder %s456, 1
                  %s461 = sphi %s138, %s138
                  %s462 = sphi %s136, %s136
                $region57: #{upsample_forward.1} parent=46 // loop_header_branch
                  %459 = sbr.rel (%p457) target = $region61
                $region58: #{upsample_forward.1} parent=46 // loop_body
                  %v463 = vld [vmem:[%s461] sm:%s454]
                  %464 = vst [vmem:[%s462] sm:%s454] %v463
                  %v465 = vld [vmem:[%s461 + $0x10] sm:%s454]
                  %466 = vst [vmem:[%s462 + $0x4] sm:%s454] %v465
                  %v467 = vld [vmem:[%s461 + $0x20] sm:%s454]
                  %468 = vst [vmem:[%s462 + $0x8] sm:%s454] %v467
                  %v469 = vld [vmem:[%s461 + $0x30] sm:%s454]
                  %470 = vst [vmem:[%s462 + $0xc] sm:%s454] %v469
                  %v471 = vld [vmem:[%s461 + $0x40] sm:%s454]
                  %472 = vst [vmem:[%s462 + $0x10] sm:%s454] %v471
                  %v473 = vld [vmem:[%s461 + $0x50] sm:%s454]
                  %474 = vst [vmem:[%s462 + $0x14] sm:%s454] %v473
                  %v475 = vld [vmem:[%s461 + $0x60] sm:%s454]
                  %476 = vst [vmem:[%s462 + $0x18] sm:%s454] %v475
                  %v477 = vld [vmem:[%s461 + $0x70] sm:%s454]
                  %478 = vst [vmem:[%s462 + $0x1c] sm:%s454] %v477
                  %v479 = vld [vmem:[%s461 + $0x80] sm:%s454]
                  %480 = vst [vmem:[%s462 + $0x20] sm:%s454] %v479
                  %v481 = vld [vmem:[%s461 + $0x90] sm:%s454]
                  %482 = vst [vmem:[%s462 + $0x24] sm:%s454] %v481
                  %v483 = vld [vmem:[%s461 + $0xa0] sm:%s454]
                  %484 = vst [vmem:[%s462 + $0x28] sm:%s454] %v483
                  %v485 = vld [vmem:[%s461 + $0xb0] sm:%s454]
                  %486 = vst [vmem:[%s462 + $0x2c] sm:%s454] %v485
                  %v487 = vld [vmem:[%s461 + $0xc0] sm:%s454]
                  %488 = vst [vmem:[%s462 + $0x30] sm:%s454] %v487
                  %v489 = vld [vmem:[%s461 + $0xd0] sm:%s454]
                  %490 = vst [vmem:[%s462 + $0x34] sm:%s454] %v489
                  %v491 = vld [vmem:[%s461 + $0xe0] sm:%s454]
                  %492 = vst [vmem:[%s462 + $0x38] sm:%s454] %v491
                  %v493 = vld [vmem:[%s461 + $0xf0] sm:%s454]
                  %494 = vst [vmem:[%s462 + $0x3c] sm:%s454] %v493
                  %v495 = vld [vmem:[%s461 + $0x100] sm:%s454]
                  %496 = vst [vmem:[%s462 + $0x40] sm:%s454] %v495
                  %v497 = vld [vmem:[%s461 + $0x110] sm:%s454]
                  %498 = vst [vmem:[%s462 + $0x44] sm:%s454] %v497
                  %v499 = vld [vmem:[%s461 + $0x120] sm:%s454]
                  %500 = vst [vmem:[%s462 + $0x48] sm:%s454] %v499
                  %v501 = vld [vmem:[%s461 + $0x130] sm:%s454]
                  %502 = vst [vmem:[%s462 + $0x4c] sm:%s454] %v501
                  %v503 = vld [vmem:[%s461 + $0x140] sm:%s454]
                  %504 = vst [vmem:[%s462 + $0x50] sm:%s454] %v503
                  %v505 = vld [vmem:[%s461 + $0x150] sm:%s454]
                  %506 = vst [vmem:[%s462 + $0x54] sm:%s454] %v505
                  %v507 = vld [vmem:[%s461 + $0x160] sm:%s454]
                  %508 = vst [vmem:[%s462 + $0x58] sm:%s454] %v507
                  %v509 = vld [vmem:[%s461 + $0x170] sm:%s454]
                  %510 = vst [vmem:[%s462 + $0x5c] sm:%s454] %v509
                  %v511 = vld [vmem:[%s461 + $0x180] sm:%s454]
                  %512 = vst [vmem:[%s462 + $0x60] sm:%s454] %v511
                  %v513 = vld [vmem:[%s461 + $0x190] sm:%s454]
                  %514 = vst [vmem:[%s462 + $0x64] sm:%s454] %v513
                  %v515 = vld [vmem:[%s461 + $0x1a0] sm:%s454]
                  %516 = vst [vmem:[%s462 + $0x68] sm:%s454] %v515
                  %v517 = vld [vmem:[%s461 + $0x1b0] sm:%s454]
                  %518 = vst [vmem:[%s462 + $0x6c] sm:%s454] %v517
                  %v519 = vld [vmem:[%s461 + $0x1c0] sm:%s454]
                  %520 = vst [vmem:[%s462 + $0x70] sm:%s454] %v519
                  %v521 = vld [vmem:[%s461 + $0x1d0] sm:%s454]
                  %522 = vst [vmem:[%s462 + $0x74] sm:%s454] %v521
                  %v523 = vld [vmem:[%s461 + $0x1e0] sm:%s454]
                  %524 = vst [vmem:[%s462 + $0x78] sm:%s454] %v523
                  %v525 = vld [vmem:[%s461 + $0x1f0] sm:%s454]
                  %526 = vst [vmem:[%s462 + $0x7c] sm:%s454] %v525
                  %v527 = vld [vmem:[%s461 + $0x200] sm:%s454]
                  %528 = vst [vmem:[%s462 + $0x80] sm:%s454] %v527
                  %v529 = vld [vmem:[%s461 + $0x210] sm:%s454]
                  %530 = vst [vmem:[%s462 + $0x84] sm:%s454] %v529
                  %v531 = vld [vmem:[%s461 + $0x220] sm:%s454]
                  %532 = vst [vmem:[%s462 + $0x88] sm:%s454] %v531
                  %v533 = vld [vmem:[%s461 + $0x230] sm:%s454]
                  %534 = vst [vmem:[%s462 + $0x8c] sm:%s454] %v533
                  %v535 = vld [vmem:[%s461 + $0x240] sm:%s454]
                  %536 = vst [vmem:[%s462 + $0x90] sm:%s454] %v535
                  %v537 = vld [vmem:[%s461 + $0x250] sm:%s454]
                  %538 = vst [vmem:[%s462 + $0x94] sm:%s454] %v537
                  %v539 = vld [vmem:[%s461 + $0x260] sm:%s454]
                  %540 = vst [vmem:[%s462 + $0x98] sm:%s454] %v539
                  %v541 = vld [vmem:[%s461 + $0x270] sm:%s454]
                  %542 = vst [vmem:[%s462 + $0x9c] sm:%s454] %v541
                  %v543 = vld [vmem:[%s461 + $0x280] sm:%s454]
                  %544 = vst [vmem:[%s462 + $0xa0] sm:%s454] %v543
                  %v545 = vld [vmem:[%s461 + $0x290] sm:%s454]
                  %546 = vst [vmem:[%s462 + $0xa4] sm:%s454] %v545
                  %v547 = vld [vmem:[%s461 + $0x2a0] sm:%s454]
                  %548 = vst [vmem:[%s462 + $0xa8] sm:%s454] %v547
                  %v549 = vld [vmem:[%s461 + $0x2b0] sm:%s454]
                  %550 = vst [vmem:[%s462 + $0xac] sm:%s454] %v549
                  %v551 = vld [vmem:[%s461 + $0x2c0] sm:%s454]
                  %552 = vst [vmem:[%s462 + $0xb0] sm:%s454] %v551
                  %v553 = vld [vmem:[%s461 + $0x2d0] sm:%s454]
                  %554 = vst [vmem:[%s462 + $0xb4] sm:%s454] %v553
                  %v555 = vld [vmem:[%s461 + $0x2e0] sm:%s454]
                  %556 = vst [vmem:[%s462 + $0xb8] sm:%s454] %v555
                  %v557 = vld [vmem:[%s461 + $0x2f0] sm:%s454]
                  %558 = vst [vmem:[%s462 + $0xbc] sm:%s454] %v557
                  %v559 = vld [vmem:[%s461 + $0x300] sm:%s454]
                  %560 = vst [vmem:[%s462 + $0xc0] sm:%s454] %v559
                  %v561 = vld [vmem:[%s461 + $0x310] sm:%s454]
                  %562 = vst [vmem:[%s462 + $0xc4] sm:%s454] %v561
                  %v563 = vld [vmem:[%s461 + $0x320] sm:%s454]
                  %564 = vst [vmem:[%s462 + $0xc8] sm:%s454] %v563
                  %v565 = vld [vmem:[%s461 + $0x330] sm:%s454]
                  %566 = vst [vmem:[%s462 + $0xcc] sm:%s454] %v565
                  %v567 = vld [vmem:[%s461 + $0x340] sm:%s454]
                  %568 = vst [vmem:[%s462 + $0xd0] sm:%s454] %v567
                  %v569 = vld [vmem:[%s461 + $0x350] sm:%s454]
                  %570 = vst [vmem:[%s462 + $0xd4] sm:%s454] %v569
                  %v571 = vld [vmem:[%s461 + $0x360] sm:%s454]
                  %572 = vst [vmem:[%s462 + $0xd8] sm:%s454] %v571
                  %v573 = vld [vmem:[%s461 + $0x370] sm:%s454]
                  %574 = vst [vmem:[%s462 + $0xdc] sm:%s454] %v573
                  %v575 = vld [vmem:[%s461 + $0x380] sm:%s454]
                  %576 = vst [vmem:[%s462 + $0xe0] sm:%s454] %v575
                  %v577 = vld [vmem:[%s461 + $0x390] sm:%s454]
                  %578 = vst [vmem:[%s462 + $0xe4] sm:%s454] %v577
                  %v579 = vld [vmem:[%s461 + $0x3a0] sm:%s454]
                  %580 = vst [vmem:[%s462 + $0xe8] sm:%s454] %v579
                  %v581 = vld [vmem:[%s461 + $0x3b0] sm:%s454]
                  %582 = vst [vmem:[%s462 + $0xec] sm:%s454] %v581
                  %v583 = vld [vmem:[%s461 + $0x3c0] sm:%s454]
                  %584 = vst [vmem:[%s462 + $0xf0] sm:%s454] %v583
                  %v585 = vld [vmem:[%s461 + $0x3d0] sm:%s454]
                  %586 = vst [vmem:[%s462 + $0xf4] sm:%s454] %v585
                  %v587 = vld [vmem:[%s461 + $0x3e0] sm:%s454]
                  %588 = vst [vmem:[%s462 + $0xf8] sm:%s454] %v587
                  %v589 = vld [vmem:[%s461 + $0x3f0] sm:%s454]
                  %590 = vst [vmem:[%s462 + $0xfc] sm:%s454] %v589
                  %v591 = vld [vmem:[%s461 + $0x400] sm:%s454]
                  %592 = vst [vmem:[%s462 + $0x100] sm:%s454] %v591
                  %v593 = vld [vmem:[%s461 + $0x410] sm:%s454]
                  %594 = vst [vmem:[%s462 + $0x104] sm:%s454] %v593
                  %v595 = vld [vmem:[%s461 + $0x420] sm:%s454]
                  %596 = vst [vmem:[%s462 + $0x108] sm:%s454] %v595
                  %v597 = vld [vmem:[%s461 + $0x430] sm:%s454]
                  %598 = vst [vmem:[%s462 + $0x10c] sm:%s454] %v597
                  %v599 = vld [vmem:[%s461 + $0x440] sm:%s454]
                  %600 = vst [vmem:[%s462 + $0x110] sm:%s454] %v599
                  %v601 = vld [vmem:[%s461 + $0x450] sm:%s454]
                  %602 = vst [vmem:[%s462 + $0x114] sm:%s454] %v601
                  %v603 = vld [vmem:[%s461 + $0x460] sm:%s454]
                  %604 = vst [vmem:[%s462 + $0x118] sm:%s454] %v603
                  %v605 = vld [vmem:[%s461 + $0x470] sm:%s454]
                  %606 = vst [vmem:[%s462 + $0x11c] sm:%s454] %v605
                  %v607 = vld [vmem:[%s461 + $0x480] sm:%s454]
                  %608 = vst [vmem:[%s462 + $0x120] sm:%s454] %v607
                  %v609 = vld [vmem:[%s461 + $0x490] sm:%s454]
                  %610 = vst [vmem:[%s462 + $0x124] sm:%s454] %v609
                  %v611 = vld [vmem:[%s461 + $0x4a0] sm:%s454]
                  %612 = vst [vmem:[%s462 + $0x128] sm:%s454] %v611
                  %v613 = vld [vmem:[%s461 + $0x4b0] sm:%s454]
                  %614 = vst [vmem:[%s462 + $0x12c] sm:%s454] %v613
                  %v615 = vld [vmem:[%s461 + $0x4c0] sm:%s454]
                  %616 = vst [vmem:[%s462 + $0x130] sm:%s454] %v615
                  %v617 = vld [vmem:[%s461 + $0x4d0] sm:%s454]
                  %618 = vst [vmem:[%s462 + $0x134] sm:%s454] %v617
                  %v619 = vld [vmem:[%s461 + $0x4e0] sm:%s454]
                  %620 = vst [vmem:[%s462 + $0x138] sm:%s454] %v619
                  %v621 = vld [vmem:[%s461 + $0x4f0] sm:%s454]
                  %622 = vst [vmem:[%s462 + $0x13c] sm:%s454] %v621
                  %v623 = vld [vmem:[%s461 + $0x500] sm:%s454]
                  %624 = vst [vmem:[%s462 + $0x140] sm:%s454] %v623
                  %v625 = vld [vmem:[%s461 + $0x510] sm:%s454]
                  %626 = vst [vmem:[%s462 + $0x144] sm:%s454] %v625
                  %v627 = vld [vmem:[%s461 + $0x520] sm:%s454]
                  %628 = vst [vmem:[%s462 + $0x148] sm:%s454] %v627
                  %v629 = vld [vmem:[%s461 + $0x530] sm:%s454]
                  %630 = vst [vmem:[%s462 + $0x14c] sm:%s454] %v629
                  %v631 = vld [vmem:[%s461 + $0x540] sm:%s454]
                  %632 = vst [vmem:[%s462 + $0x150] sm:%s454] %v631
                  %v633 = vld [vmem:[%s461 + $0x550] sm:%s454]
                  %634 = vst [vmem:[%s462 + $0x154] sm:%s454] %v633
                  %v635 = vld [vmem:[%s461 + $0x560] sm:%s454]
                  %636 = vst [vmem:[%s462 + $0x158] sm:%s454] %v635
                  %v637 = vld [vmem:[%s461 + $0x570] sm:%s454]
                  %638 = vst [vmem:[%s462 + $0x15c] sm:%s454] %v637
                  %v639 = vld [vmem:[%s461 + $0x580] sm:%s454]
                  %640 = vst [vmem:[%s462 + $0x160] sm:%s454] %v639
                  %v641 = vld [vmem:[%s461 + $0x590] sm:%s454]
                  %642 = vst [vmem:[%s462 + $0x164] sm:%s454] %v641
                  %v643 = vld [vmem:[%s461 + $0x5a0] sm:%s454]
                  %644 = vst [vmem:[%s462 + $0x168] sm:%s454] %v643
                  %v645 = vld [vmem:[%s461 + $0x5b0] sm:%s454]
                  %646 = vst [vmem:[%s462 + $0x16c] sm:%s454] %v645
                  %v647 = vld [vmem:[%s461 + $0x5c0] sm:%s454]
                  %648 = vst [vmem:[%s462 + $0x170] sm:%s454] %v647
                  %v649 = vld [vmem:[%s461 + $0x5d0] sm:%s454]
                  %650 = vst [vmem:[%s462 + $0x174] sm:%s454] %v649
                  %v651 = vld [vmem:[%s461 + $0x5e0] sm:%s454]
                  %652 = vst [vmem:[%s462 + $0x178] sm:%s454] %v651
                  %v653 = vld [vmem:[%s461 + $0x5f0] sm:%s454]
                  %654 = vst [vmem:[%s462 + $0x17c] sm:%s454] %v653
                  %v655 = vld [vmem:[%s461 + $0x600] sm:%s454]
                  %656 = vst [vmem:[%s462 + $0x180] sm:%s454] %v655
                  %v657 = vld [vmem:[%s461 + $0x610] sm:%s454]
                  %658 = vst [vmem:[%s462 + $0x184] sm:%s454] %v657
                  %v659 = vld [vmem:[%s461 + $0x620] sm:%s454]
                  %660 = vst [vmem:[%s462 + $0x188] sm:%s454] %v659
                  %v661 = vld [vmem:[%s461 + $0x630] sm:%s454]
                  %662 = vst [vmem:[%s462 + $0x18c] sm:%s454] %v661
                  %v663 = vld [vmem:[%s461 + $0x640] sm:%s454]
                  %664 = vst [vmem:[%s462 + $0x190] sm:%s454] %v663
                  %v665 = vld [vmem:[%s461 + $0x650] sm:%s454]
                  %666 = vst [vmem:[%s462 + $0x194] sm:%s454] %v665
                  %v667 = vld [vmem:[%s461 + $0x660] sm:%s454]
                  %668 = vst [vmem:[%s462 + $0x198] sm:%s454] %v667
                  %v669 = vld [vmem:[%s461 + $0x670] sm:%s454]
                  %670 = vst [vmem:[%s462 + $0x19c] sm:%s454] %v669
                  %v671 = vld [vmem:[%s461 + $0x680] sm:%s454]
                  %672 = vst [vmem:[%s462 + $0x1a0] sm:%s454] %v671
                  %v673 = vld [vmem:[%s461 + $0x690] sm:%s454]
                  %674 = vst [vmem:[%s462 + $0x1a4] sm:%s454] %v673
                  %v675 = vld [vmem:[%s461 + $0x6a0] sm:%s454]
                  %676 = vst [vmem:[%s462 + $0x1a8] sm:%s454] %v675
                  %v677 = vld [vmem:[%s461 + $0x6b0] sm:%s454]
                  %678 = vst [vmem:[%s462 + $0x1ac] sm:%s454] %v677
                  %v679 = vld [vmem:[%s461 + $0x6c0] sm:%s454]
                  %680 = vst [vmem:[%s462 + $0x1b0] sm:%s454] %v679
                  %v681 = vld [vmem:[%s461 + $0x6d0] sm:%s454]
                  %682 = vst [vmem:[%s462 + $0x1b4] sm:%s454] %v681
                  %v683 = vld [vmem:[%s461 + $0x6e0] sm:%s454]
                  %684 = vst [vmem:[%s462 + $0x1b8] sm:%s454] %v683
                  %v685 = vld [vmem:[%s461 + $0x6f0] sm:%s454]
                  %686 = vst [vmem:[%s462 + $0x1bc] sm:%s454] %v685
                  %v687 = vld [vmem:[%s461 + $0x700] sm:%s454]
                  %688 = vst [vmem:[%s462 + $0x1c0] sm:%s454] %v687
                  %v689 = vld [vmem:[%s461 + $0x710] sm:%s454]
                  %690 = vst [vmem:[%s462 + $0x1c4] sm:%s454] %v689
                  %v691 = vld [vmem:[%s461 + $0x720] sm:%s454]
                  %692 = vst [vmem:[%s462 + $0x1c8] sm:%s454] %v691
                  %v693 = vld [vmem:[%s461 + $0x730] sm:%s454]
                  %694 = vst [vmem:[%s462 + $0x1cc] sm:%s454] %v693
                  %v695 = vld [vmem:[%s461 + $0x740] sm:%s454]
                  %696 = vst [vmem:[%s462 + $0x1d0] sm:%s454] %v695
                  %v697 = vld [vmem:[%s461 + $0x750] sm:%s454]
                  %698 = vst [vmem:[%s462 + $0x1d4] sm:%s454] %v697
                  %v699 = vld [vmem:[%s461 + $0x760] sm:%s454]
                  %700 = vst [vmem:[%s462 + $0x1d8] sm:%s454] %v699
                  %v701 = vld [vmem:[%s461 + $0x770] sm:%s454]
                  %702 = vst [vmem:[%s462 + $0x1dc] sm:%s454] %v701
                  %v703 = vld [vmem:[%s461 + $0x780] sm:%s454]
                  %704 = vst [vmem:[%s462 + $0x1e0] sm:%s454] %v703
                  %v705 = vld [vmem:[%s461 + $0x790] sm:%s454]
                  %706 = vst [vmem:[%s462 + $0x1e4] sm:%s454] %v705
                  %v707 = vld [vmem:[%s461 + $0x7a0] sm:%s454]
                  %708 = vst [vmem:[%s462 + $0x1e8] sm:%s454] %v707
                  %v709 = vld [vmem:[%s461 + $0x7b0] sm:%s454]
                  %710 = vst [vmem:[%s462 + $0x1ec] sm:%s454] %v709
                  %v711 = vld [vmem:[%s461 + $0x7c0] sm:%s454]
                  %712 = vst [vmem:[%s462 + $0x1f0] sm:%s454] %v711
                  %v713 = vld [vmem:[%s461 + $0x7d0] sm:%s454]
                  %714 = vst [vmem:[%s462 + $0x1f4] sm:%s454] %v713
                  %v715 = vld [vmem:[%s461 + $0x7e0] sm:%s454]
                  %716 = vst [vmem:[%s462 + $0x1f8] sm:%s454] %v715
                  %v717 = vld [vmem:[%s461 + $0x7f0] sm:%s454]
                  %718 = vst [vmem:[%s462 + $0x1fc] sm:%s454] %v717
                  %v719 = vld [vmem:[%s461 + $0x800] sm:%s454]
                  %720 = vst [vmem:[%s462 + $0x200] sm:%s454] %v719
                  %v721 = vld [vmem:[%s461 + $0x810] sm:%s454]
                  %722 = vst [vmem:[%s462 + $0x204] sm:%s454] %v721
                  %v723 = vld [vmem:[%s461 + $0x820] sm:%s454]
                  %724 = vst [vmem:[%s462 + $0x208] sm:%s454] %v723
                  %v725 = vld [vmem:[%s461 + $0x830] sm:%s454]
                  %726 = vst [vmem:[%s462 + $0x20c] sm:%s454] %v725
                  %v727 = vld [vmem:[%s461 + $0x840] sm:%s454]
                  %728 = vst [vmem:[%s462 + $0x210] sm:%s454] %v727
                  %v729 = vld [vmem:[%s461 + $0x850] sm:%s454]
                  %730 = vst [vmem:[%s462 + $0x214] sm:%s454] %v729
                  %v731 = vld [vmem:[%s461 + $0x860] sm:%s454]
                  %732 = vst [vmem:[%s462 + $0x218] sm:%s454] %v731
                  %v733 = vld [vmem:[%s461 + $0x870] sm:%s454]
                  %734 = vst [vmem:[%s462 + $0x21c] sm:%s454] %v733
                  %v735 = vld [vmem:[%s461 + $0x880] sm:%s454]
                  %736 = vst [vmem:[%s462 + $0x220] sm:%s454] %v735
                  %v737 = vld [vmem:[%s461 + $0x890] sm:%s454]
                  %738 = vst [vmem:[%s462 + $0x224] sm:%s454] %v737
                  %v739 = vld [vmem:[%s461 + $0x8a0] sm:%s454]
                  %740 = vst [vmem:[%s462 + $0x228] sm:%s454] %v739
                  %v741 = vld [vmem:[%s461 + $0x8b0] sm:%s454]
                  %742 = vst [vmem:[%s462 + $0x22c] sm:%s454] %v741
                  %v743 = vld [vmem:[%s461 + $0x8c0] sm:%s454]
                  %744 = vst [vmem:[%s462 + $0x230] sm:%s454] %v743
                  %v745 = vld [vmem:[%s461 + $0x8d0] sm:%s454]
                  %746 = vst [vmem:[%s462 + $0x234] sm:%s454] %v745
                  %v747 = vld [vmem:[%s461 + $0x8e0] sm:%s454]
                  %748 = vst [vmem:[%s462 + $0x238] sm:%s454] %v747
                  %v749 = vld [vmem:[%s461 + $0x8f0] sm:%s454]
                  %750 = vst [vmem:[%s462 + $0x23c] sm:%s454] %v749
                $region59: #{upsample_forward.1} parent=46 // loop_footer
                  %s460 = sadd.s32 1, %s456
                $region60: #{upsample_forward.1} parent=46 // loop_footer_branch
                  %455 = sbr.rel target = $region56
                $region61: #{upsample_forward.1} parent=46 // loop_exit
                  _
              $region47: #{upsample_forward.1} parent=31 // pred_fallthru
                _
            $region32: #{upsample_forward.1} parent=27 // pred_fallthru
              _
            // Predicated region
            $region33: #{upsample_forward.1} parent=27 // pred_check
              _
            $region34: #{upsample_forward.1} parent=27 // pred_check_branch
              %144 = sbr.rel (0) target = $region36
            $region35: #{upsample_forward.1} parent=27 // pred_region
              %s146 = ssub.s32 16, 1
              loop: start=0, step=1, limit=1
              $region37: #{upsample_forward.1} parent=35 // loop_pre_header
                _
              $region38: #{upsample_forward.1} parent=35 // loop_header
                %s148 = sphi 0, %s152
                %p149 = scmp.ge.s32.totalorder %s148, 1
                %s153 = sphi %s138, %s138
                %s154 = sphi %s136, %s136
              $region39: #{upsample_forward.1} parent=35 // loop_header_branch
                %151 = sbr.rel (%p149) target = $region43
              $region40: #{upsample_forward.1} parent=35 // loop_body
                %v155 = vld [vmem:[%s153] sm:%s146]
                %156 = vst [vmem:[%s154] sm:%s146] %v155
                %v157 = vld [vmem:[%s153 + $0x10] sm:%s146]
                %158 = vst [vmem:[%s154 + $0x4] sm:%s146] %v157
                %v159 = vld [vmem:[%s153 + $0x20] sm:%s146]
                %160 = vst [vmem:[%s154 + $0x8] sm:%s146] %v159
                %v161 = vld [vmem:[%s153 + $0x30] sm:%s146]
                %162 = vst [vmem:[%s154 + $0xc] sm:%s146] %v161
                %v163 = vld [vmem:[%s153 + $0x40] sm:%s146]
                %164 = vst [vmem:[%s154 + $0x10] sm:%s146] %v163
                %v165 = vld [vmem:[%s153 + $0x50] sm:%s146]
                %166 = vst [vmem:[%s154 + $0x14] sm:%s146] %v165
                %v167 = vld [vmem:[%s153 + $0x60] sm:%s146]
                %168 = vst [vmem:[%s154 + $0x18] sm:%s146] %v167
                %v169 = vld [vmem:[%s153 + $0x70] sm:%s146]
                %170 = vst [vmem:[%s154 + $0x1c] sm:%s146] %v169
                %v171 = vld [vmem:[%s153 + $0x80] sm:%s146]
                %172 = vst [vmem:[%s154 + $0x20] sm:%s146] %v171
                %v173 = vld [vmem:[%s153 + $0x90] sm:%s146]
                %174 = vst [vmem:[%s154 + $0x24] sm:%s146] %v173
                %v175 = vld [vmem:[%s153 + $0xa0] sm:%s146]
                %176 = vst [vmem:[%s154 + $0x28] sm:%s146] %v175
                %v177 = vld [vmem:[%s153 + $0xb0] sm:%s146]
                %178 = vst [vmem:[%s154 + $0x2c] sm:%s146] %v177
                %v179 = vld [vmem:[%s153 + $0xc0] sm:%s146]
                %180 = vst [vmem:[%s154 + $0x30] sm:%s146] %v179
                %v181 = vld [vmem:[%s153 + $0xd0] sm:%s146]
                %182 = vst [vmem:[%s154 + $0x34] sm:%s146] %v181
                %v183 = vld [vmem:[%s153 + $0xe0] sm:%s146]
                %184 = vst [vmem:[%s154 + $0x38] sm:%s146] %v183
                %v185 = vld [vmem:[%s153 + $0xf0] sm:%s146]
                %186 = vst [vmem:[%s154 + $0x3c] sm:%s146] %v185
                %v187 = vld [vmem:[%s153 + $0x100] sm:%s146]
                %188 = vst [vmem:[%s154 + $0x40] sm:%s146] %v187
                %v189 = vld [vmem:[%s153 + $0x110] sm:%s146]
                %190 = vst [vmem:[%s154 + $0x44] sm:%s146] %v189
                %v191 = vld [vmem:[%s153 + $0x120] sm:%s146]
                %192 = vst [vmem:[%s154 + $0x48] sm:%s146] %v191
                %v193 = vld [vmem:[%s153 + $0x130] sm:%s146]
                %194 = vst [vmem:[%s154 + $0x4c] sm:%s146] %v193
                %v195 = vld [vmem:[%s153 + $0x140] sm:%s146]
                %196 = vst [vmem:[%s154 + $0x50] sm:%s146] %v195
                %v197 = vld [vmem:[%s153 + $0x150] sm:%s146]
                %198 = vst [vmem:[%s154 + $0x54] sm:%s146] %v197
                %v199 = vld [vmem:[%s153 + $0x160] sm:%s146]
                %200 = vst [vmem:[%s154 + $0x58] sm:%s146] %v199
                %v201 = vld [vmem:[%s153 + $0x170] sm:%s146]
                %202 = vst [vmem:[%s154 + $0x5c] sm:%s146] %v201
                %v203 = vld [vmem:[%s153 + $0x180] sm:%s146]
                %204 = vst [vmem:[%s154 + $0x60] sm:%s146] %v203
                %v205 = vld [vmem:[%s153 + $0x190] sm:%s146]
                %206 = vst [vmem:[%s154 + $0x64] sm:%s146] %v205
                %v207 = vld [vmem:[%s153 + $0x1a0] sm:%s146]
                %208 = vst [vmem:[%s154 + $0x68] sm:%s146] %v207
                %v209 = vld [vmem:[%s153 + $0x1b0] sm:%s146]
                %210 = vst [vmem:[%s154 + $0x6c] sm:%s146] %v209
                %v211 = vld [vmem:[%s153 + $0x1c0] sm:%s146]
                %212 = vst [vmem:[%s154 + $0x70] sm:%s146] %v211
                %v213 = vld [vmem:[%s153 + $0x1d0] sm:%s146]
                %214 = vst [vmem:[%s154 + $0x74] sm:%s146] %v213
                %v215 = vld [vmem:[%s153 + $0x1e0] sm:%s146]
                %216 = vst [vmem:[%s154 + $0x78] sm:%s146] %v215
                %v217 = vld [vmem:[%s153 + $0x1f0] sm:%s146]
                %218 = vst [vmem:[%s154 + $0x7c] sm:%s146] %v217
                %v219 = vld [vmem:[%s153 + $0x200] sm:%s146]
                %220 = vst [vmem:[%s154 + $0x80] sm:%s146] %v219
                %v221 = vld [vmem:[%s153 + $0x210] sm:%s146]
                %222 = vst [vmem:[%s154 + $0x84] sm:%s146] %v221
                %v223 = vld [vmem:[%s153 + $0x220] sm:%s146]
                %224 = vst [vmem:[%s154 + $0x88] sm:%s146] %v223
                %v225 = vld [vmem:[%s153 + $0x230] sm:%s146]
                %226 = vst [vmem:[%s154 + $0x8c] sm:%s146] %v225
                %v227 = vld [vmem:[%s153 + $0x240] sm:%s146]
                %228 = vst [vmem:[%s154 + $0x90] sm:%s146] %v227
                %v229 = vld [vmem:[%s153 + $0x250] sm:%s146]
                %230 = vst [vmem:[%s154 + $0x94] sm:%s146] %v229
                %v231 = vld [vmem:[%s153 + $0x260] sm:%s146]
                %232 = vst [vmem:[%s154 + $0x98] sm:%s146] %v231
                %v233 = vld [vmem:[%s153 + $0x270] sm:%s146]
                %234 = vst [vmem:[%s154 + $0x9c] sm:%s146] %v233
                %v235 = vld [vmem:[%s153 + $0x280] sm:%s146]
                %236 = vst [vmem:[%s154 + $0xa0] sm:%s146] %v235
                %v237 = vld [vmem:[%s153 + $0x290] sm:%s146]
                %238 = vst [vmem:[%s154 + $0xa4] sm:%s146] %v237
                %v239 = vld [vmem:[%s153 + $0x2a0] sm:%s146]
                %240 = vst [vmem:[%s154 + $0xa8] sm:%s146] %v239
                %v241 = vld [vmem:[%s153 + $0x2b0] sm:%s146]
                %242 = vst [vmem:[%s154 + $0xac] sm:%s146] %v241
                %v243 = vld [vmem:[%s153 + $0x2c0] sm:%s146]
                %244 = vst [vmem:[%s154 + $0xb0] sm:%s146] %v243
                %v245 = vld [vmem:[%s153 + $0x2d0] sm:%s146]
                %246 = vst [vmem:[%s154 + $0xb4] sm:%s146] %v245
                %v247 = vld [vmem:[%s153 + $0x2e0] sm:%s146]
                %248 = vst [vmem:[%s154 + $0xb8] sm:%s146] %v247
                %v249 = vld [vmem:[%s153 + $0x2f0] sm:%s146]
                %250 = vst [vmem:[%s154 + $0xbc] sm:%s146] %v249
                %v251 = vld [vmem:[%s153 + $0x300] sm:%s146]
                %252 = vst [vmem:[%s154 + $0xc0] sm:%s146] %v251
                %v253 = vld [vmem:[%s153 + $0x310] sm:%s146]
                %254 = vst [vmem:[%s154 + $0xc4] sm:%s146] %v253
                %v255 = vld [vmem:[%s153 + $0x320] sm:%s146]
                %256 = vst [vmem:[%s154 + $0xc8] sm:%s146] %v255
                %v257 = vld [vmem:[%s153 + $0x330] sm:%s146]
                %258 = vst [vmem:[%s154 + $0xcc] sm:%s146] %v257
                %v259 = vld [vmem:[%s153 + $0x340] sm:%s146]
                %260 = vst [vmem:[%s154 + $0xd0] sm:%s146] %v259
                %v261 = vld [vmem:[%s153 + $0x350] sm:%s146]
                %262 = vst [vmem:[%s154 + $0xd4] sm:%s146] %v261
                %v263 = vld [vmem:[%s153 + $0x360] sm:%s146]
                %264 = vst [vmem:[%s154 + $0xd8] sm:%s146] %v263
                %v265 = vld [vmem:[%s153 + $0x370] sm:%s146]
                %266 = vst [vmem:[%s154 + $0xdc] sm:%s146] %v265
                %v267 = vld [vmem:[%s153 + $0x380] sm:%s146]
                %268 = vst [vmem:[%s154 + $0xe0] sm:%s146] %v267
                %v269 = vld [vmem:[%s153 + $0x390] sm:%s146]
                %270 = vst [vmem:[%s154 + $0xe4] sm:%s146] %v269
                %v271 = vld [vmem:[%s153 + $0x3a0] sm:%s146]
                %272 = vst [vmem:[%s154 + $0xe8] sm:%s146] %v271
                %v273 = vld [vmem:[%s153 + $0x3b0] sm:%s146]
                %274 = vst [vmem:[%s154 + $0xec] sm:%s146] %v273
                %v275 = vld [vmem:[%s153 + $0x3c0] sm:%s146]
                %276 = vst [vmem:[%s154 + $0xf0] sm:%s146] %v275
                %v277 = vld [vmem:[%s153 + $0x3d0] sm:%s146]
                %278 = vst [vmem:[%s154 + $0xf4] sm:%s146] %v277
                %v279 = vld [vmem:[%s153 + $0x3e0] sm:%s146]
                %280 = vst [vmem:[%s154 + $0xf8] sm:%s146] %v279
                %v281 = vld [vmem:[%s153 + $0x3f0] sm:%s146]
                %282 = vst [vmem:[%s154 + $0xfc] sm:%s146] %v281
                %v283 = vld [vmem:[%s153 + $0x400] sm:%s146]
                %284 = vst [vmem:[%s154 + $0x100] sm:%s146] %v283
                %v285 = vld [vmem:[%s153 + $0x410] sm:%s146]
                %286 = vst [vmem:[%s154 + $0x104] sm:%s146] %v285
                %v287 = vld [vmem:[%s153 + $0x420] sm:%s146]
                %288 = vst [vmem:[%s154 + $0x108] sm:%s146] %v287
                %v289 = vld [vmem:[%s153 + $0x430] sm:%s146]
                %290 = vst [vmem:[%s154 + $0x10c] sm:%s146] %v289
                %v291 = vld [vmem:[%s153 + $0x440] sm:%s146]
                %292 = vst [vmem:[%s154 + $0x110] sm:%s146] %v291
                %v293 = vld [vmem:[%s153 + $0x450] sm:%s146]
                %294 = vst [vmem:[%s154 + $0x114] sm:%s146] %v293
                %v295 = vld [vmem:[%s153 + $0x460] sm:%s146]
                %296 = vst [vmem:[%s154 + $0x118] sm:%s146] %v295
                %v297 = vld [vmem:[%s153 + $0x470] sm:%s146]
                %298 = vst [vmem:[%s154 + $0x11c] sm:%s146] %v297
                %v299 = vld [vmem:[%s153 + $0x480] sm:%s146]
                %300 = vst [vmem:[%s154 + $0x120] sm:%s146] %v299
                %v301 = vld [vmem:[%s153 + $0x490] sm:%s146]
                %302 = vst [vmem:[%s154 + $0x124] sm:%s146] %v301
                %v303 = vld [vmem:[%s153 + $0x4a0] sm:%s146]
                %304 = vst [vmem:[%s154 + $0x128] sm:%s146] %v303
                %v305 = vld [vmem:[%s153 + $0x4b0] sm:%s146]
                %306 = vst [vmem:[%s154 + $0x12c] sm:%s146] %v305
                %v307 = vld [vmem:[%s153 + $0x4c0] sm:%s146]
                %308 = vst [vmem:[%s154 + $0x130] sm:%s146] %v307
                %v309 = vld [vmem:[%s153 + $0x4d0] sm:%s146]
                %310 = vst [vmem:[%s154 + $0x134] sm:%s146] %v309
                %v311 = vld [vmem:[%s153 + $0x4e0] sm:%s146]
                %312 = vst [vmem:[%s154 + $0x138] sm:%s146] %v311
                %v313 = vld [vmem:[%s153 + $0x4f0] sm:%s146]
                %314 = vst [vmem:[%s154 + $0x13c] sm:%s146] %v313
                %v315 = vld [vmem:[%s153 + $0x500] sm:%s146]
                %316 = vst [vmem:[%s154 + $0x140] sm:%s146] %v315
                %v317 = vld [vmem:[%s153 + $0x510] sm:%s146]
                %318 = vst [vmem:[%s154 + $0x144] sm:%s146] %v317
                %v319 = vld [vmem:[%s153 + $0x520] sm:%s146]
                %320 = vst [vmem:[%s154 + $0x148] sm:%s146] %v319
                %v321 = vld [vmem:[%s153 + $0x530] sm:%s146]
                %322 = vst [vmem:[%s154 + $0x14c] sm:%s146] %v321
                %v323 = vld [vmem:[%s153 + $0x540] sm:%s146]
                %324 = vst [vmem:[%s154 + $0x150] sm:%s146] %v323
                %v325 = vld [vmem:[%s153 + $0x550] sm:%s146]
                %326 = vst [vmem:[%s154 + $0x154] sm:%s146] %v325
                %v327 = vld [vmem:[%s153 + $0x560] sm:%s146]
                %328 = vst [vmem:[%s154 + $0x158] sm:%s146] %v327
                %v329 = vld [vmem:[%s153 + $0x570] sm:%s146]
                %330 = vst [vmem:[%s154 + $0x15c] sm:%s146] %v329
                %v331 = vld [vmem:[%s153 + $0x580] sm:%s146]
                %332 = vst [vmem:[%s154 + $0x160] sm:%s146] %v331
                %v333 = vld [vmem:[%s153 + $0x590] sm:%s146]
                %334 = vst [vmem:[%s154 + $0x164] sm:%s146] %v333
                %v335 = vld [vmem:[%s153 + $0x5a0] sm:%s146]
                %336 = vst [vmem:[%s154 + $0x168] sm:%s146] %v335
                %v337 = vld [vmem:[%s153 + $0x5b0] sm:%s146]
                %338 = vst [vmem:[%s154 + $0x16c] sm:%s146] %v337
                %v339 = vld [vmem:[%s153 + $0x5c0] sm:%s146]
                %340 = vst [vmem:[%s154 + $0x170] sm:%s146] %v339
                %v341 = vld [vmem:[%s153 + $0x5d0] sm:%s146]
                %342 = vst [vmem:[%s154 + $0x174] sm:%s146] %v341
                %v343 = vld [vmem:[%s153 + $0x5e0] sm:%s146]
                %344 = vst [vmem:[%s154 + $0x178] sm:%s146] %v343
                %v345 = vld [vmem:[%s153 + $0x5f0] sm:%s146]
                %346 = vst [vmem:[%s154 + $0x17c] sm:%s146] %v345
                %v347 = vld [vmem:[%s153 + $0x600] sm:%s146]
                %348 = vst [vmem:[%s154 + $0x180] sm:%s146] %v347
                %v349 = vld [vmem:[%s153 + $0x610] sm:%s146]
                %350 = vst [vmem:[%s154 + $0x184] sm:%s146] %v349
                %v351 = vld [vmem:[%s153 + $0x620] sm:%s146]
                %352 = vst [vmem:[%s154 + $0x188] sm:%s146] %v351
                %v353 = vld [vmem:[%s153 + $0x630] sm:%s146]
                %354 = vst [vmem:[%s154 + $0x18c] sm:%s146] %v353
                %v355 = vld [vmem:[%s153 + $0x640] sm:%s146]
                %356 = vst [vmem:[%s154 + $0x190] sm:%s146] %v355
                %v357 = vld [vmem:[%s153 + $0x650] sm:%s146]
                %358 = vst [vmem:[%s154 + $0x194] sm:%s146] %v357
                %v359 = vld [vmem:[%s153 + $0x660] sm:%s146]
                %360 = vst [vmem:[%s154 + $0x198] sm:%s146] %v359
                %v361 = vld [vmem:[%s153 + $0x670] sm:%s146]
                %362 = vst [vmem:[%s154 + $0x19c] sm:%s146] %v361
                %v363 = vld [vmem:[%s153 + $0x680] sm:%s146]
                %364 = vst [vmem:[%s154 + $0x1a0] sm:%s146] %v363
                %v365 = vld [vmem:[%s153 + $0x690] sm:%s146]
                %366 = vst [vmem:[%s154 + $0x1a4] sm:%s146] %v365
                %v367 = vld [vmem:[%s153 + $0x6a0] sm:%s146]
                %368 = vst [vmem:[%s154 + $0x1a8] sm:%s146] %v367
                %v369 = vld [vmem:[%s153 + $0x6b0] sm:%s146]
                %370 = vst [vmem:[%s154 + $0x1ac] sm:%s146] %v369
                %v371 = vld [vmem:[%s153 + $0x6c0] sm:%s146]
                %372 = vst [vmem:[%s154 + $0x1b0] sm:%s146] %v371
                %v373 = vld [vmem:[%s153 + $0x6d0] sm:%s146]
                %374 = vst [vmem:[%s154 + $0x1b4] sm:%s146] %v373
                %v375 = vld [vmem:[%s153 + $0x6e0] sm:%s146]
                %376 = vst [vmem:[%s154 + $0x1b8] sm:%s146] %v375
                %v377 = vld [vmem:[%s153 + $0x6f0] sm:%s146]
                %378 = vst [vmem:[%s154 + $0x1bc] sm:%s146] %v377
                %v379 = vld [vmem:[%s153 + $0x700] sm:%s146]
                %380 = vst [vmem:[%s154 + $0x1c0] sm:%s146] %v379
                %v381 = vld [vmem:[%s153 + $0x710] sm:%s146]
                %382 = vst [vmem:[%s154 + $0x1c4] sm:%s146] %v381
                %v383 = vld [vmem:[%s153 + $0x720] sm:%s146]
                %384 = vst [vmem:[%s154 + $0x1c8] sm:%s146] %v383
                %v385 = vld [vmem:[%s153 + $0x730] sm:%s146]
                %386 = vst [vmem:[%s154 + $0x1cc] sm:%s146] %v385
                %v387 = vld [vmem:[%s153 + $0x740] sm:%s146]
                %388 = vst [vmem:[%s154 + $0x1d0] sm:%s146] %v387
                %v389 = vld [vmem:[%s153 + $0x750] sm:%s146]
                %390 = vst [vmem:[%s154 + $0x1d4] sm:%s146] %v389
                %v391 = vld [vmem:[%s153 + $0x760] sm:%s146]
                %392 = vst [vmem:[%s154 + $0x1d8] sm:%s146] %v391
                %v393 = vld [vmem:[%s153 + $0x770] sm:%s146]
                %394 = vst [vmem:[%s154 + $0x1dc] sm:%s146] %v393
                %v395 = vld [vmem:[%s153 + $0x780] sm:%s146]
                %396 = vst [vmem:[%s154 + $0x1e0] sm:%s146] %v395
                %v397 = vld [vmem:[%s153 + $0x790] sm:%s146]
                %398 = vst [vmem:[%s154 + $0x1e4] sm:%s146] %v397
                %v399 = vld [vmem:[%s153 + $0x7a0] sm:%s146]
                %400 = vst [vmem:[%s154 + $0x1e8] sm:%s146] %v399
                %v401 = vld [vmem:[%s153 + $0x7b0] sm:%s146]
                %402 = vst [vmem:[%s154 + $0x1ec] sm:%s146] %v401
                %v403 = vld [vmem:[%s153 + $0x7c0] sm:%s146]
                %404 = vst [vmem:[%s154 + $0x1f0] sm:%s146] %v403
                %v405 = vld [vmem:[%s153 + $0x7d0] sm:%s146]
                %406 = vst [vmem:[%s154 + $0x1f4] sm:%s146] %v405
                %v407 = vld [vmem:[%s153 + $0x7e0] sm:%s146]
                %408 = vst [vmem:[%s154 + $0x1f8] sm:%s146] %v407
                %v409 = vld [vmem:[%s153 + $0x7f0] sm:%s146]
                %410 = vst [vmem:[%s154 + $0x1fc] sm:%s146] %v409
                %v411 = vld [vmem:[%s153 + $0x800] sm:%s146]
                %412 = vst [vmem:[%s154 + $0x200] sm:%s146] %v411
                %v413 = vld [vmem:[%s153 + $0x810] sm:%s146]
                %414 = vst [vmem:[%s154 + $0x204] sm:%s146] %v413
                %v415 = vld [vmem:[%s153 + $0x820] sm:%s146]
                %416 = vst [vmem:[%s154 + $0x208] sm:%s146] %v415
                %v417 = vld [vmem:[%s153 + $0x830] sm:%s146]
                %418 = vst [vmem:[%s154 + $0x20c] sm:%s146] %v417
                %v419 = vld [vmem:[%s153 + $0x840] sm:%s146]
                %420 = vst [vmem:[%s154 + $0x210] sm:%s146] %v419
                %v421 = vld [vmem:[%s153 + $0x850] sm:%s146]
                %422 = vst [vmem:[%s154 + $0x214] sm:%s146] %v421
                %v423 = vld [vmem:[%s153 + $0x860] sm:%s146]
                %424 = vst [vmem:[%s154 + $0x218] sm:%s146] %v423
                %v425 = vld [vmem:[%s153 + $0x870] sm:%s146]
                %426 = vst [vmem:[%s154 + $0x21c] sm:%s146] %v425
                %v427 = vld [vmem:[%s153 + $0x880] sm:%s146]
                %428 = vst [vmem:[%s154 + $0x220] sm:%s146] %v427
                %v429 = vld [vmem:[%s153 + $0x890] sm:%s146]
                %430 = vst [vmem:[%s154 + $0x224] sm:%s146] %v429
                %v431 = vld [vmem:[%s153 + $0x8a0] sm:%s146]
                %432 = vst [vmem:[%s154 + $0x228] sm:%s146] %v431
                %v433 = vld [vmem:[%s153 + $0x8b0] sm:%s146]
                %434 = vst [vmem:[%s154 + $0x22c] sm:%s146] %v433
                %v435 = vld [vmem:[%s153 + $0x8c0] sm:%s146]
                %436 = vst [vmem:[%s154 + $0x230] sm:%s146] %v435
                %v437 = vld [vmem:[%s153 + $0x8d0] sm:%s146]
                %438 = vst [vmem:[%s154 + $0x234] sm:%s146] %v437
                %v439 = vld [vmem:[%s153 + $0x8e0] sm:%s146]
                %440 = vst [vmem:[%s154 + $0x238] sm:%s146] %v439
                %v441 = vld [vmem:[%s153 + $0x8f0] sm:%s146]
                %442 = vst [vmem:[%s154 + $0x23c] sm:%s146] %v441
              $region41: #{upsample_forward.1} parent=35 // loop_footer
                %s152 = sadd.s32 1, %s148
              $region42: #{upsample_forward.1} parent=35 // loop_footer_branch
                %147 = sbr.rel target = $region38
              $region43: #{upsample_forward.1} parent=35 // loop_exit
                _
            $region36: #{upsample_forward.1} parent=27 // pred_fallthru
              _
          $region28: #{upsample_forward.1} parent=23 // pred_fallthru
            _
          %751 = vnop
        $region24: #{upsample_forward.1} parent=19 // pred_fallthru
          _
        // Predicated region
        $region62: #{upsample_forward.1} parent=19 // pred_check
          %p752 = pneg %p76
        $region63: #{upsample_forward.1} parent=19 // pred_check_branch
          %754 = sbr.rel (%p752) target = $region65
        $region64: #{upsample_forward.1} parent=19 // pred_region
          %p755 = scmp.lt.s32.totalorder %s9, 3
          %s756 = scalar_select %p755, %s9, 3
          %s757 = scalar_lea.vmem %s2, %s756
        $region65: #{upsample_forward.1} parent=19 // pred_fallthru
          _
      $region20: #{upsample_forward.1} parent=5 // pred_fallthru
        _
      %p758 = scmp.le.s32.totalorder 1, %s9
      %p759 = scmp.lt.s32.totalorder %s9, 5
      %p760 = pnand %p758, %p759
      %p761 = pneg %p760
      // Predicated region
      $region66: #{upsample_forward.1} parent=5 // pred_check
        _
      $region67: #{upsample_forward.1} parent=5 // pred_check_branch
        %763 = sbr.rel (%p760) target = $region69
      $region68: #{upsample_forward.1} parent=5 // pred_region
        %s764 = ssub.s32 %s9, 1
        %s765 = sand.u32 %s43, 1
        %s766 = sand.u32 %s43, 1
        %s767 = smul.addr %s766, 576
        %s768 = scalar_lea.vmem [#allocation2], %s767
        // Predicated region
        $region70: #{upsample_forward.1} parent=68 // pred_check
          %p769 = pneg %p56
        $region71: #{upsample_forward.1} parent=68 // pred_check_branch
          %771 = sbr.rel (%p769) target = $region73
        $region72: #{upsample_forward.1} parent=68 // pred_region
          _
        $region73: #{upsample_forward.1} parent=68 // pred_fallthru
          _
        %p772 = pneg %p30
        %p773 = pneg %p27
        %s774 = sand.u32 %s43, 1
        %s775 = sand.u32 %s43, 1
        %s776 = smul.addr %s775, 576
        %s777 = scalar_lea.vmem [#allocation2], %s776
        %p778 = pneg %p56
        %p779 = pneg %p53
        %p780 = scmp.lt.s32.totalorder %s14, 3
        %s781 = scalar_select %p780, %s14, 3
        %s782 = scalar_lea.vmem %s2, %s781
        %p783 = pneg %p82
        %p784 = pneg %p79
        %p785 = pneg %p108
        %p786 = pneg %p105
        %s787 = sand.u32 %s95, 1
        %s788 = sand.u32 %s95, 1
        %s789 = smul.addr %s788, 64
        %s790 = scalar_lea.vmem [#allocation3], %s789
        %p791 = scmp.lt.s32.totalorder %s14, 3
        %s792 = scalar_select %p791, %s14, 3
        %s793 = scalar_lea.vmem %s2, %s792
        %v794 = vld [vmem:[%s0] sm:$0xf]
        %v795 = vld [vmem:[%s0 + $0x8] sm:$0xf]
        %v796 = vld [vmem:[%s0 + $0x10] sm:$0xf]
        %v797 = vld [vmem:[%s0 + $0x18] sm:$0xf]
        %v798 = vld [vmem:[%s0 + $0x20] sm:$0xf]
        %v799 = vld [vmem:[%s0 + $0x28] sm:$0xf]
        %v800 = vld [vmem:[%s0 + $0x30] sm:$0xf]
        %v801 = vld [vmem:[%s0 + $0x38] sm:$0xf]
        %v802 = vld [vmem:[%s0 + $0x50] sm:$0xf]
        %v803 = vld [vmem:[%s0 + $0x58] sm:$0xf]
        %v804 = vld [vmem:[%s0 + $0x60] sm:$0xf]
        %v805 = vld [vmem:[%s0 + $0x68] sm:$0xf]
        %v806 = vld [vmem:[%s0 + $0x70] sm:$0xf]
        %v807 = vld [vmem:[%s0 + $0x78] sm:$0xf]
        %v808 = vld [vmem:[%s0 + $0x80] sm:$0xf]
        %v809 = vld [vmem:[%s0 + $0x88] sm:$0xf]
        %v810 = vld [vmem:[%s768] sm:$0xf]
        %v811 = vld [vmem:[%s768 + $0x4] sm:$0xf]
        %v812 = vld [vmem:[%s768 + $0x8] sm:$0xf]
        %v813 = vld [vmem:[%s768 + $0xc] sm:$0xf]
        %v814 = vld [vmem:[%s768 + $0x10] sm:$0xf]
        %v815 = vld [vmem:[%s768 + $0x14] sm:$0xf]
        %v816 = vld [vmem:[%s768 + $0x18] sm:$0xf]
        %v817 = vld [vmem:[%s768 + $0x1c] sm:$0xf]
        %v818 = vld [vmem:[%s768 + $0x20] sm:$0xf]
        %v819 = vld [vmem:[%s768 + $0x24] sm:$0xf]
        %v820 = vld [vmem:[%s768 + $0x28] sm:$0xf]
        %v821 = vld [vmem:[%s768 + $0x2c] sm:$0xf]
        %v822 = vld [vmem:[%s768 + $0x30] sm:$0xf]
        %v823 = vld [vmem:[%s768 + $0x34] sm:$0xf]
        %v824 = vld [vmem:[%s768 + $0x38] sm:$0xf]
        %v825 = vld [vmem:[%s768 + $0x3c] sm:$0xf]
        %v826 = vld [vmem:[%s0 + $0x4] sm:$0x1]
        %v827 = vld [vmem:[%s0 + $0xc] sm:$0x1]
        %v828 = vld [vmem:[%s0 + $0x14] sm:$0x1]
        %v829 = vld [vmem:[%s0 + $0x1c] sm:$0x1]
        %v830 = vld [vmem:[%s0 + $0x24] sm:$0x1]
        %v831 = vld [vmem:[%s0 + $0x2c] sm:$0x1]
        %v832 = vld [vmem:[%s0 + $0x34] sm:$0x1]
        %v833 = vld [vmem:[%s0 + $0x3c] sm:$0x1]
        %v834 = vld [vmem:[%s0 + $0x54] sm:$0x1]
        %v835 = vld [vmem:[%s0 + $0x5c] sm:$0x1]
        %v836 = vld [vmem:[%s0 + $0x64] sm:$0x1]
        %v837 = vld [vmem:[%s0 + $0x6c] sm:$0x1]
        %v838 = vld [vmem:[%s0 + $0x74] sm:$0x1]
        %v839 = vld [vmem:[%s0 + $0x7c] sm:$0x1]
        %v840 = vld [vmem:[%s0 + $0x84] sm:$0x1]
        %v841 = vld [vmem:[%s0 + $0x8c] sm:$0x1]
        %vm842 = vsmask.f32 3328
        %vm843 = vsmask.f32 7440
        %vm844 = vmor %vm842, %vm843
        %v846 = vshrl.u32 %v794, 16
        %v848 = vrot.slane %v846, 4
        %v849 = vshll.u32 %v794, 16
        %v851 = vrot.slane %v849, 5
        %v852 = vor.u32 %v848, %v851
        %v853 = vrot.slane %v852, 4
        %v855 = vshll.u32 %v826, 16
        %v857 = vrot.slane %v855, 5
        %v858 = vsel %vm844, %v853, %v857
        %v860 = vshrl.u32 %v795, 16
        %v862 = vrot.slane %v860, 4
        %v863 = vshll.u32 %v795, 16
        %v865 = vrot.slane %v863, 5
        %v866 = vor.u32 %v862, %v865
        %v867 = vrot.slane %v866, 4
        %v869 = vshll.u32 %v827, 16
        %v871 = vrot.slane %v869, 5
        %v872 = vsel %vm844, %v867, %v871
        %v874 = vshrl.u32 %v796, 16
        %v876 = vrot.slane %v874, 4
        %v877 = vshll.u32 %v796, 16
        %v879 = vrot.slane %v877, 5
        %v880 = vor.u32 %v876, %v879
        %v881 = vrot.slane %v880, 4
        %v883 = vshll.u32 %v828, 16
        %v885 = vrot.slane %v883, 5
        %v886 = vsel %vm844, %v881, %v885
        %v888 = vshrl.u32 %v797, 16
        %v890 = vrot.slane %v888, 4
        %v891 = vshll.u32 %v797, 16
        %v893 = vrot.slane %v891, 5
        %v894 = vor.u32 %v890, %v893
        %v895 = vrot.slane %v894, 4
        %v897 = vshll.u32 %v829, 16
        %v899 = vrot.slane %v897, 5
        %v900 = vsel %vm844, %v895, %v899
        %v902 = vshrl.u32 %v798, 16
        %v904 = vrot.slane %v902, 4
        %v905 = vshll.u32 %v798, 16
        %v907 = vrot.slane %v905, 5
        %v908 = vor.u32 %v904, %v907
        %v909 = vrot.slane %v908, 4
        %v911 = vshll.u32 %v830, 16
        %v913 = vrot.slane %v911, 5
        %v914 = vsel %vm844, %v909, %v913
        %v916 = vshrl.u32 %v799, 16
        %v918 = vrot.slane %v916, 4
        %v919 = vshll.u32 %v799, 16
        %v921 = vrot.slane %v919, 5
        %v922 = vor.u32 %v918, %v921
        %v923 = vrot.slane %v922, 4
        %v925 = vshll.u32 %v831, 16
        %v927 = vrot.slane %v925, 5
        %v928 = vsel %vm844, %v923, %v927
        %v930 = vshrl.u32 %v800, 16
        %v932 = vrot.slane %v930, 4
        %v933 = vshll.u32 %v800, 16
        %v935 = vrot.slane %v933, 5
        %v936 = vor.u32 %v932, %v935
        %v937 = vrot.slane %v936, 4
        %v939 = vshll.u32 %v832, 16
        %v941 = vrot.slane %v939, 5
        %v942 = vsel %vm844, %v937, %v941
        %v944 = vshrl.u32 %v801, 16
        %v946 = vrot.slane %v944, 4
        %v947 = vshll.u32 %v801, 16
        %v949 = vrot.slane %v947, 5
        %v950 = vor.u32 %v946, %v949
        %v951 = vrot.slane %v950, 4
        %v953 = vshll.u32 %v833, 16
        %v955 = vrot.slane %v953, 5
        %v956 = vsel %vm844, %v951, %v955
        %v958 = vshrl.u32 %v802, 16
        %v960 = vrot.slane %v958, 4
        %v961 = vshll.u32 %v802, 16
        %v963 = vrot.slane %v961, 5
        %v964 = vor.u32 %v960, %v963
        %v965 = vrot.slane %v964, 4
        %v967 = vshll.u32 %v834, 16
        %v969 = vrot.slane %v967, 5
        %v970 = vsel %vm844, %v965, %v969
        %v972 = vshrl.u32 %v803, 16
        %v974 = vrot.slane %v972, 4
        %v975 = vshll.u32 %v803, 16
        %v977 = vrot.slane %v975, 5
        %v978 = vor.u32 %v974, %v977
        %v979 = vrot.slane %v978, 4
        %v981 = vshll.u32 %v835, 16
        %v983 = vrot.slane %v981, 5
        %v984 = vsel %vm844, %v979, %v983
        %v986 = vshrl.u32 %v804, 16
        %v988 = vrot.slane %v986, 4
        %v989 = vshll.u32 %v804, 16
        %v991 = vrot.slane %v989, 5
        %v992 = vor.u32 %v988, %v991
        %v993 = vrot.slane %v992, 4
        %v995 = vshll.u32 %v836, 16
        %v997 = vrot.slane %v995, 5
        %v998 = vsel %vm844, %v993, %v997
        %v1000 = vshrl.u32 %v805, 16
        %v1002 = vrot.slane %v1000, 4
        %v1003 = vshll.u32 %v805, 16
        %v1005 = vrot.slane %v1003, 5
        %v1006 = vor.u32 %v1002, %v1005
        %v1007 = vrot.slane %v1006, 4
        %v1009 = vshll.u32 %v837, 16
        %v1011 = vrot.slane %v1009, 5
        %v1012 = vsel %vm844, %v1007, %v1011
        %v1014 = vshrl.u32 %v806, 16
        %v1016 = vrot.slane %v1014, 4
        %v1017 = vshll.u32 %v806, 16
        %v1019 = vrot.slane %v1017, 5
        %v1020 = vor.u32 %v1016, %v1019
        %v1021 = vrot.slane %v1020, 4
        %v1023 = vshll.u32 %v838, 16
        %v1025 = vrot.slane %v1023, 5
        %v1026 = vsel %vm844, %v1021, %v1025
        %v1028 = vshrl.u32 %v807, 16
        %v1030 = vrot.slane %v1028, 4
        %v1031 = vshll.u32 %v807, 16
        %v1033 = vrot.slane %v1031, 5
        %v1034 = vor.u32 %v1030, %v1033
        %v1035 = vrot.slane %v1034, 4
        %v1037 = vshll.u32 %v839, 16
        %v1039 = vrot.slane %v1037, 5
        %v1040 = vsel %vm844, %v1035, %v1039
        %v1042 = vshrl.u32 %v808, 16
        %v1044 = vrot.slane %v1042, 4
        %v1045 = vshll.u32 %v808, 16
        %v1047 = vrot.slane %v1045, 5
        %v1048 = vor.u32 %v1044, %v1047
        %v1049 = vrot.slane %v1048, 4
        %v1051 = vshll.u32 %v840, 16
        %v1053 = vrot.slane %v1051, 5
        %v1054 = vsel %vm844, %v1049, %v1053
        %v1056 = vshrl.u32 %v809, 16
        %v1058 = vrot.slane %v1056, 4
        %v1059 = vshll.u32 %v809, 16
        %v1061 = vrot.slane %v1059, 5
        %v1062 = vor.u32 %v1058, %v1061
        %v1063 = vrot.slane %v1062, 4
        %v1065 = vshll.u32 %v841, 16
        %v1067 = vrot.slane %v1065, 5
        %v1068 = vsel %vm844, %v1063, %v1067
        %s1069 = scalar_lea.vmem %s768, 64 [#allocation2]
        %v1070 = vld [vmem:[%s1069] sm:$0xf]
        %v1071 = vld [vmem:[%s1069 + $0x4] sm:$0xf]
        %v1072 = vld [vmem:[%s1069 + $0x8] sm:$0xf]
        %v1073 = vld [vmem:[%s1069 + $0xc] sm:$0xf]
        %v1074 = vld [vmem:[%s1069 + $0x10] sm:$0xf]
        %v1075 = vld [vmem:[%s1069 + $0x14] sm:$0xf]
        %v1076 = vld [vmem:[%s1069 + $0x18] sm:$0xf]
        %v1077 = vld [vmem:[%s1069 + $0x1c] sm:$0xf]
        %v1078 = vld [vmem:[%s1069 + $0x20] sm:$0xf]
        %v1079 = vld [vmem:[%s1069 + $0x24] sm:$0xf]
        %v1080 = vld [vmem:[%s1069 + $0x28] sm:$0xf]
        %v1081 = vld [vmem:[%s1069 + $0x2c] sm:$0xf]
        %v1082 = vld [vmem:[%s1069 + $0x30] sm:$0xf]
        %v1083 = vld [vmem:[%s1069 + $0x34] sm:$0xf]
        %v1084 = vld [vmem:[%s1069 + $0x38] sm:$0xf]
        %v1085 = vld [vmem:[%s1069 + $0x3c] sm:$0xf]
        %v1086 = vunpack.c.l.b16 %v858
        %v1087 = vunpack.c.l.b16 %v872
        %v1088 = vunpack.c.l.b16 %v886
        %v1089 = vunpack.c.l.b16 %v900
        %v1090 = vunpack.c.l.b16 %v914
        %v1091 = vunpack.c.l.b16 %v928
        %v1092 = vunpack.c.l.b16 %v942
        %v1093 = vunpack.c.l.b16 %v956
        %v1094 = vunpack.c.l.b16 %v970
        %v1095 = vunpack.c.l.b16 %v984
        %v1096 = vunpack.c.l.b16 %v998
        %v1097 = vunpack.c.l.b16 %v1012
        %v1098 = vunpack.c.l.b16 %v1026
        %v1099 = vunpack.c.l.b16 %v1040
        %v1100 = vunpack.c.l.b16 %v1054
        %v1101 = vunpack.c.l.b16 %v1068
        %v1102 = vpack.c.b16 %v1087, %v1086
        %v1103 = vpack.c.b16 %v1089, %v1088
        %v1104 = vpack.c.b16 %v1091, %v1090
        %v1105 = vpack.c.b16 %v1093, %v1092
        %v1106 = vpack.c.b16 %v1095, %v1094
        %v1107 = vpack.c.b16 %v1097, %v1096
        %v1108 = vpack.c.b16 %v1099, %v1098
        %v1109 = vpack.c.b16 %v1101, %v1100
        %v1134 = vunpack.c.l.b16 %v1070
        %v1135 = vunpack.c.l.b16 %v1071
        %v1136 = vunpack.c.l.b16 %v1072
        %v1137 = vunpack.c.l.b16 %v1073
        %v1138 = vunpack.c.l.b16 %v1074
        %v1139 = vunpack.c.l.b16 %v1075
        %v1140 = vunpack.c.l.b16 %v1076
        %v1141 = vunpack.c.l.b16 %v1077
        %v1142 = vunpack.c.l.b16 %v1078
        %v1143 = vunpack.c.l.b16 %v1079
        %v1144 = vunpack.c.l.b16 %v1080
        %v1145 = vunpack.c.l.b16 %v1081
        %v1146 = vunpack.c.l.b16 %v1082
        %v1147 = vunpack.c.l.b16 %v1083
        %v1148 = vunpack.c.l.b16 %v1084
        %v1149 = vunpack.c.l.b16 %v1085
        %v1150 = vpack.c.b16 %v1135, %v1134
        %v1151 = vpack.c.b16 %v1137, %v1136
        %v1152 = vpack.c.b16 %v1139, %v1138
        %v1153 = vpack.c.b16 %v1141, %v1140
        %v1154 = vpack.c.b16 %v1143, %v1142
        %v1155 = vpack.c.b16 %v1145, %v1144
        %v1156 = vpack.c.b16 %v1147, %v1146
        %v1157 = vpack.c.b16 %v1149, %v1148
        %1166 = vmatpush.bf16.msra.mxu0 %v1157
        %1167 = vmatpush.bf16.msra.mxu0 %v1156
        %1168 = vmatpush.bf16.msra.mxu0 %v1155
        %1169 = vmatpush.bf16.msra.mxu0 %v1154
        %1170 = vmatpush.bf16.msra.mxu0 %v1153
        %1171 = vmatpush.bf16.msra.mxu0 %v1152
        %1172 = vmatpush.bf16.msra.mxu0 %v1151
        %1173 = vmatpush.bf16.msra.mxu0 %v1150
        %1174 = vmatmul.bf16.gmra.mxu0 %v1102
        %v1175 = vpop.f32.mrf.mxu0
        %v1176 = vadd.f32 0.0, %v1175
        %v1177 = vpop.f32.mrf.mxu0
        %v1178 = vadd.f32 0.0, %v1177
        %1179 = vmatmul.bf16.gmra.mxu0 %v1103
        %v1180 = vpop.f32.mrf.mxu0
        %v1181 = vadd.f32 0.0, %v1180
        %v1182 = vpop.f32.mrf.mxu0
        %v1183 = vadd.f32 0.0, %v1182
        %1184 = vmatmul.bf16.gmra.mxu0 %v1104
        %v1185 = vpop.f32.mrf.mxu0
        %v1186 = vadd.f32 0.0, %v1185
        %v1187 = vpop.f32.mrf.mxu0
        %v1188 = vadd.f32 0.0, %v1187
        %1189 = vmatmul.bf16.gmra.mxu0 %v1105
        %v1190 = vpop.f32.mrf.mxu0
        %v1191 = vadd.f32 0.0, %v1190
        %v1192 = vpop.f32.mrf.mxu0
        %v1193 = vadd.f32 0.0, %v1192
        %1194 = vmatmul.bf16.gmra.mxu0 %v1106
        %v1195 = vpop.f32.mrf.mxu0
        %v1196 = vadd.f32 0.0, %v1195
        %v1197 = vpop.f32.mrf.mxu0
        %v1198 = vadd.f32 0.0, %v1197
        %1199 = vmatmul.bf16.gmra.mxu0 %v1107
        %v1200 = vpop.f32.mrf.mxu0
        %v1201 = vadd.f32 0.0, %v1200
        %v1202 = vpop.f32.mrf.mxu0
        %v1203 = vadd.f32 0.0, %v1202
        %1204 = vmatmul.bf16.gmra.mxu0 %v1108
        %v1205 = vpop.f32.mrf.mxu0
        %v1206 = vadd.f32 0.0, %v1205
        %v1207 = vpop.f32.mrf.mxu0
        %v1208 = vadd.f32 0.0, %v1207
        %1209 = vmatmul.bf16.gmra.mxu0 %v1109
        %v1210 = vpop.f32.mrf.mxu0
        %v1211 = vadd.f32 0.0, %v1210
        %v1212 = vpop.f32.mrf.mxu0
        %v1213 = vadd.f32 0.0, %v1212
        %1214 = vdwg.mxu0
        %v1231 = vunpack.c.l.b16 %v794
        %v1232 = vunpack.c.l.b16 %v795
        %v1233 = vunpack.c.l.b16 %v796
        %v1234 = vunpack.c.l.b16 %v797
        %v1235 = vunpack.c.l.b16 %v798
        %v1236 = vunpack.c.l.b16 %v799
        %v1237 = vunpack.c.l.b16 %v800
        %v1238 = vunpack.c.l.b16 %v801
        %v1239 = vunpack.c.l.b16 %v802
        %v1240 = vunpack.c.l.b16 %v803
        %v1241 = vunpack.c.l.b16 %v804
        %v1242 = vunpack.c.l.b16 %v805
        %v1243 = vunpack.c.l.b16 %v806
        %v1244 = vunpack.c.l.b16 %v807
        %v1245 = vunpack.c.l.b16 %v808
        %v1246 = vunpack.c.l.b16 %v809
        %v1247 = vpack.c.b16 %v1232, %v1231
        %v1248 = vpack.c.b16 %v1234, %v1233
        %v1249 = vpack.c.b16 %v1236, %v1235
        %v1250 = vpack.c.b16 %v1238, %v1237
        %v1251 = vpack.c.b16 %v1240, %v1239
        %v1252 = vpack.c.b16 %v1242, %v1241
        %v1253 = vpack.c.b16 %v1244, %v1243
        %v1254 = vpack.c.b16 %v1246, %v1245
        %v1279 = vunpack.c.l.b16 %v810
        %v1280 = vunpack.c.l.b16 %v811
        %v1281 = vunpack.c.l.b16 %v812
        %v1282 = vunpack.c.l.b16 %v813
        %v1283 = vunpack.c.l.b16 %v814
        %v1284 = vunpack.c.l.b16 %v815
        %v1285 = vunpack.c.l.b16 %v816
        %v1286 = vunpack.c.l.b16 %v817
        %v1287 = vunpack.c.l.b16 %v818
        %v1288 = vunpack.c.l.b16 %v819
        %v1289 = vunpack.c.l.b16 %v820
        %v1290 = vunpack.c.l.b16 %v821
        %v1291 = vunpack.c.l.b16 %v822
        %v1292 = vunpack.c.l.b16 %v823
        %v1293 = vunpack.c.l.b16 %v824
        %v1294 = vunpack.c.l.b16 %v825
        %v1295 = vpack.c.b16 %v1280, %v1279
        %v1296 = vpack.c.b16 %v1282, %v1281
        %v1297 = vpack.c.b16 %v1284, %v1283
        %v1298 = vpack.c.b16 %v1286, %v1285
        %v1299 = vpack.c.b16 %v1288, %v1287
        %v1300 = vpack.c.b16 %v1290, %v1289
        %v1301 = vpack.c.b16 %v1292, %v1291
        %v1302 = vpack.c.b16 %v1294, %v1293
        %1311 = vmatpush.bf16.msra.mxu0 %v1302
        %1312 = vmatpush.bf16.msra.mxu0 %v1301
        %1313 = vmatpush.bf16.msra.mxu0 %v1300
        %1314 = vmatpush.bf16.msra.mxu0 %v1299
        %1315 = vmatpush.bf16.msra.mxu0 %v1298
        %1316 = vmatpush.bf16.msra.mxu0 %v1297
        %1317 = vmatpush.bf16.msra.mxu0 %v1296
        %1318 = vmatpush.bf16.msra.mxu0 %v1295
        %1319 = vmatmul.bf16.gmra.mxu0 %v1247
        %v1320 = vpop.f32.mrf.mxu0
        %v1321 = vadd.f32 %v1176, %v1320
        %v1322 = vpop.f32.mrf.mxu0
        %v1323 = vadd.f32 %v1178, %v1322
        %1324 = vmatmul.bf16.gmra.mxu0 %v1248
        %v1325 = vpop.f32.mrf.mxu0
        %v1326 = vadd.f32 %v1181, %v1325
        %v1327 = vpop.f32.mrf.mxu0
        %v1328 = vadd.f32 %v1183, %v1327
        %1329 = vmatmul.bf16.gmra.mxu0 %v1249
        %v1330 = vpop.f32.mrf.mxu0
        %v1331 = vadd.f32 %v1186, %v1330
        %v1332 = vpop.f32.mrf.mxu0
        %v1333 = vadd.f32 %v1188, %v1332
        %1334 = vmatmul.bf16.gmra.mxu0 %v1250
        %v1335 = vpop.f32.mrf.mxu0
        %v1336 = vadd.f32 %v1191, %v1335
        %v1337 = vpop.f32.mrf.mxu0
        %v1338 = vadd.f32 %v1193, %v1337
        %1339 = vmatmul.bf16.gmra.mxu0 %v1251
        %v1340 = vpop.f32.mrf.mxu0
        %v1341 = vadd.f32 %v1196, %v1340
        %v1342 = vpop.f32.mrf.mxu0
        %v1343 = vadd.f32 %v1198, %v1342
        %1344 = vmatmul.bf16.gmra.mxu0 %v1252
        %v1345 = vpop.f32.mrf.mxu0
        %v1346 = vadd.f32 %v1201, %v1345
        %v1347 = vpop.f32.mrf.mxu0
        %v1348 = vadd.f32 %v1203, %v1347
        %1349 = vmatmul.bf16.gmra.mxu0 %v1253
        %v1350 = vpop.f32.mrf.mxu0
        %v1351 = vadd.f32 %v1206, %v1350
        %v1352 = vpop.f32.mrf.mxu0
        %v1353 = vadd.f32 %v1208, %v1352
        %1354 = vmatmul.bf16.gmra.mxu0 %v1254
        %v1355 = vpop.f32.mrf.mxu0
        %v1356 = vadd.f32 %v1211, %v1355
        %v1357 = vpop.f32.mrf.mxu0
        %v1358 = vadd.f32 %v1213, %v1357
        %1359 = vdwg.mxu0
        %v1360 = vld [vmem:[%s0] sm:$0xe]
        %v1361 = vld [vmem:[%s0 + $0x8] sm:$0xe]
        %v1362 = vld [vmem:[%s0 + $0x10] sm:$0xe]
        %v1363 = vld [vmem:[%s0 + $0x18] sm:$0xe]
        %v1364 = vld [vmem:[%s0 + $0x20] sm:$0xe]
        %v1365 = vld [vmem:[%s0 + $0x28] sm:$0xe]
        %v1366 = vld [vmem:[%s0 + $0x30] sm:$0xe]
        %v1367 = vld [vmem:[%s0 + $0x38] sm:$0xe]
        %v1368 = vld [vmem:[%s0 + $0x50] sm:$0xe]
        %v1369 = vld [vmem:[%s0 + $0x58] sm:$0xe]
        %v1370 = vld [vmem:[%s0 + $0x60] sm:$0xe]
        %v1371 = vld [vmem:[%s0 + $0x68] sm:$0xe]
        %v1372 = vld [vmem:[%s0 + $0x70] sm:$0xe]
        %v1373 = vld [vmem:[%s0 + $0x78] sm:$0xe]
        %v1374 = vld [vmem:[%s0 + $0x80] sm:$0xe]
        %v1375 = vld [vmem:[%s0 + $0x88] sm:$0xe]
        %vm1408 = vcmask 1042432
        %vm1409 = vcmask 1046532
        %vm1410 = vmor %vm1408, %vm1409
        %v1411 = vrot.slane %v1360, 5
        %v1412 = vrot.slane %v1411, 4
        %v1413 = vrot.slane %v826, 5
        %v1414 = vsel %vm1410, %v1412, %v1413
        %v1415 = vrot.slane %v1361, 5
        %v1416 = vrot.slane %v1415, 4
        %v1417 = vrot.slane %v827, 5
        %v1418 = vsel %vm1410, %v1416, %v1417
        %v1419 = vrot.slane %v1362, 5
        %v1420 = vrot.slane %v1419, 4
        %v1421 = vrot.slane %v828, 5
        %v1422 = vsel %vm1410, %v1420, %v1421
        %v1423 = vrot.slane %v1363, 5
        %v1424 = vrot.slane %v1423, 4
        %v1425 = vrot.slane %v829, 5
        %v1426 = vsel %vm1410, %v1424, %v1425
        %v1427 = vrot.slane %v1364, 5
        %v1428 = vrot.slane %v1427, 4
        %v1429 = vrot.slane %v830, 5
        %v1430 = vsel %vm1410, %v1428, %v1429
        %v1431 = vrot.slane %v1365, 5
        %v1432 = vrot.slane %v1431, 4
        %v1433 = vrot.slane %v831, 5
        %v1434 = vsel %vm1410, %v1432, %v1433
        %v1435 = vrot.slane %v1366, 5
        %v1436 = vrot.slane %v1435, 4
        %v1437 = vrot.slane %v832, 5
        %v1438 = vsel %vm1410, %v1436, %v1437
        %v1439 = vrot.slane %v1367, 5
        %v1440 = vrot.slane %v1439, 4
        %v1441 = vrot.slane %v833, 5
        %v1442 = vsel %vm1410, %v1440, %v1441
        %v1443 = vrot.slane %v1368, 5
        %v1444 = vrot.slane %v1443, 4
        %v1445 = vrot.slane %v834, 5
        %v1446 = vsel %vm1410, %v1444, %v1445
        %v1447 = vrot.slane %v1369, 5
        %v1448 = vrot.slane %v1447, 4
        %v1449 = vrot.slane %v835, 5
        %v1450 = vsel %vm1410, %v1448, %v1449
        %v1451 = vrot.slane %v1370, 5
        %v1452 = vrot.slane %v1451, 4
        %v1453 = vrot.slane %v836, 5
        %v1454 = vsel %vm1410, %v1452, %v1453
        %v1455 = vrot.slane %v1371, 5
        %v1456 = vrot.slane %v1455, 4
        %v1457 = vrot.slane %v837, 5
        %v1458 = vsel %vm1410, %v1456, %v1457
        %v1459 = vrot.slane %v1372, 5
        %v1460 = vrot.slane %v1459, 4
        %v1461 = vrot.slane %v838, 5
        %v1462 = vsel %vm1410, %v1460, %v1461
        %v1463 = vrot.slane %v1373, 5
        %v1464 = vrot.slane %v1463, 4
        %v1465 = vrot.slane %v839, 5
        %v1466 = vsel %vm1410, %v1464, %v1465
        %v1467 = vrot.slane %v1374, 5
        %v1468 = vrot.slane %v1467, 4
        %v1469 = vrot.slane %v840, 5
        %v1470 = vsel %vm1410, %v1468, %v1469
        %v1471 = vrot.slane %v1375, 5
        %v1472 = vrot.slane %v1471, 4
        %v1473 = vrot.slane %v841, 5
        %v1474 = vsel %vm1410, %v1472, %v1473
        %s1475 = scalar_lea.vmem %s768, 128 [#allocation2]
        %v1476 = vld [vmem:[%s1475] sm:$0xf]
        %v1477 = vld [vmem:[%s1475 + $0x4] sm:$0xf]
        %v1478 = vld [vmem:[%s1475 + $0x8] sm:$0xf]
        %v1479 = vld [vmem:[%s1475 + $0xc] sm:$0xf]
        %v1480 = vld [vmem:[%s1475 + $0x10] sm:$0xf]
        %v1481 = vld [vmem:[%s1475 + $0x14] sm:$0xf]
        %v1482 = vld [vmem:[%s1475 + $0x18] sm:$0xf]
        %v1483 = vld [vmem:[%s1475 + $0x1c] sm:$0xf]
        %v1484 = vld [vmem:[%s1475 + $0x20] sm:$0xf]
        %v1485 = vld [vmem:[%s1475 + $0x24] sm:$0xf]
        %v1486 = vld [vmem:[%s1475 + $0x28] sm:$0xf]
        %v1487 = vld [vmem:[%s1475 + $0x2c] sm:$0xf]
        %v1488 = vld [vmem:[%s1475 + $0x30] sm:$0xf]
        %v1489 = vld [vmem:[%s1475 + $0x34] sm:$0xf]
        %v1490 = vld [vmem:[%s1475 + $0x38] sm:$0xf]
        %v1491 = vld [vmem:[%s1475 + $0x3c] sm:$0xf]
        %v1492 = vunpack.c.l.b16 %v1414
        %v1493 = vunpack.c.l.b16 %v1418
        %v1494 = vunpack.c.l.b16 %v1422
        %v1495 = vunpack.c.l.b16 %v1426
        %v1496 = vunpack.c.l.b16 %v1430
        %v1497 = vunpack.c.l.b16 %v1434
        %v1498 = vunpack.c.l.b16 %v1438
        %v1499 = vunpack.c.l.b16 %v1442
        %v1500 = vunpack.c.l.b16 %v1446
        %v1501 = vunpack.c.l.b16 %v1450
        %v1502 = vunpack.c.l.b16 %v1454
        %v1503 = vunpack.c.l.b16 %v1458
        %v1504 = vunpack.c.l.b16 %v1462
        %v1505 = vunpack.c.l.b16 %v1466
        %v1506 = vunpack.c.l.b16 %v1470
        %v1507 = vunpack.c.l.b16 %v1474
        %v1508 = vpack.c.b16 %v1493, %v1492
        %v1509 = vpack.c.b16 %v1495, %v1494
        %v1510 = vpack.c.b16 %v1497, %v1496
        %v1511 = vpack.c.b16 %v1499, %v1498
        %v1512 = vpack.c.b16 %v1501, %v1500
        %v1513 = vpack.c.b16 %v1503, %v1502
        %v1514 = vpack.c.b16 %v1505, %v1504
        %v1515 = vpack.c.b16 %v1507, %v1506
        %v1540 = vunpack.c.l.b16 %v1476
        %v1541 = vunpack.c.l.b16 %v1477
        %v1542 = vunpack.c.l.b16 %v1478
        %v1543 = vunpack.c.l.b16 %v1479
        %v1544 = vunpack.c.l.b16 %v1480
        %v1545 = vunpack.c.l.b16 %v1481
        %v1546 = vunpack.c.l.b16 %v1482
        %v1547 = vunpack.c.l.b16 %v1483
        %v1548 = vunpack.c.l.b16 %v1484
        %v1549 = vunpack.c.l.b16 %v1485
        %v1550 = vunpack.c.l.b16 %v1486
        %v1551 = vunpack.c.l.b16 %v1487
        %v1552 = vunpack.c.l.b16 %v1488
        %v1553 = vunpack.c.l.b16 %v1489
        %v1554 = vunpack.c.l.b16 %v1490
        %v1555 = vunpack.c.l.b16 %v1491
        %v1556 = vpack.c.b16 %v1541, %v1540
        %v1557 = vpack.c.b16 %v1543, %v1542
        %v1558 = vpack.c.b16 %v1545, %v1544
        %v1559 = vpack.c.b16 %v1547, %v1546
        %v1560 = vpack.c.b16 %v1549, %v1548
        %v1561 = vpack.c.b16 %v1551, %v1550
        %v1562 = vpack.c.b16 %v1553, %v1552
        %v1563 = vpack.c.b16 %v1555, %v1554
        %1572 = vmatpush.bf16.msra.mxu0 %v1563
        %1573 = vmatpush.bf16.msra.mxu0 %v1562
        %1574 = vmatpush.bf16.msra.mxu0 %v1561
        %1575 = vmatpush.bf16.msra.mxu0 %v1560
        %1576 = vmatpush.bf16.msra.mxu0 %v1559
        %1577 = vmatpush.bf16.msra.mxu0 %v1558
        %1578 = vmatpush.bf16.msra.mxu0 %v1557
        %1579 = vmatpush.bf16.msra.mxu0 %v1556
        %1580 = vmatmul.bf16.gmra.mxu0 %v1508
        %v1581 = vpop.f32.mrf.mxu0
        %v1582 = vadd.f32 0.0, %v1581
        %v1583 = vpop.f32.mrf.mxu0
        %v1584 = vadd.f32 0.0, %v1583
        %1585 = vmatmul.bf16.gmra.mxu0 %v1509
        %v1586 = vpop.f32.mrf.mxu0
        %v1587 = vadd.f32 0.0, %v1586
        %v1588 = vpop.f32.mrf.mxu0
        %v1589 = vadd.f32 0.0, %v1588
        %1590 = vmatmul.bf16.gmra.mxu0 %v1510
        %v1591 = vpop.f32.mrf.mxu0
        %v1592 = vadd.f32 0.0, %v1591
        %v1593 = vpop.f32.mrf.mxu0
        %v1594 = vadd.f32 0.0, %v1593
        %1595 = vmatmul.bf16.gmra.mxu0 %v1511
        %v1596 = vpop.f32.mrf.mxu0
        %v1597 = vadd.f32 0.0, %v1596
        %v1598 = vpop.f32.mrf.mxu0
        %v1599 = vadd.f32 0.0, %v1598
        %1600 = vmatmul.bf16.gmra.mxu0 %v1512
        %v1601 = vpop.f32.mrf.mxu0
        %v1602 = vadd.f32 0.0, %v1601
        %v1603 = vpop.f32.mrf.mxu0
        %v1604 = vadd.f32 0.0, %v1603
        %1605 = vmatmul.bf16.gmra.mxu0 %v1513
        %v1606 = vpop.f32.mrf.mxu0
        %v1607 = vadd.f32 0.0, %v1606
        %v1608 = vpop.f32.mrf.mxu0
        %v1609 = vadd.f32 0.0, %v1608
        %1610 = vmatmul.bf16.gmra.mxu0 %v1514
        %v1611 = vpop.f32.mrf.mxu0
        %v1612 = vadd.f32 0.0, %v1611
        %v1613 = vpop.f32.mrf.mxu0
        %v1614 = vadd.f32 0.0, %v1613
        %1615 = vmatmul.bf16.gmra.mxu0 %v1515
        %v1616 = vpop.f32.mrf.mxu0
        %v1617 = vadd.f32 0.0, %v1616
        %v1618 = vpop.f32.mrf.mxu0
        %v1619 = vadd.f32 0.0, %v1618
        %1620 = vdwg.mxu0
        %v1621 = vadd.f32 %v1321, %v1582
        %v1622 = vadd.f32 %v1323, %v1584
        %v1623 = vadd.f32 %v1326, %v1587
        %v1624 = vadd.f32 %v1328, %v1589
        %v1625 = vadd.f32 %v1331, %v1592
        %v1626 = vadd.f32 %v1333, %v1594
        %v1627 = vadd.f32 %v1336, %v1597
        %v1628 = vadd.f32 %v1338, %v1599
        %v1629 = vadd.f32 %v1341, %v1602
        %v1630 = vadd.f32 %v1343, %v1604
        %v1631 = vadd.f32 %v1346, %v1607
        %v1632 = vadd.f32 %v1348, %v1609
        %v1633 = vadd.f32 %v1351, %v1612
        %v1634 = vadd.f32 %v1353, %v1614
        %v1635 = vadd.f32 %v1356, %v1617
        %v1636 = vadd.f32 %v1358, %v1619
        %s1637 = scalar_lea.vmem %s0, 8
        %v1638 = vld [vmem:[%s1637] sm:$0xf]
        %v1639 = vld [vmem:[%s1637 + $0x8] sm:$0xf]
        %v1640 = vld [vmem:[%s1637 + $0x10] sm:$0xf]
        %v1641 = vld [vmem:[%s1637 + $0x18] sm:$0xf]
        %v1642 = vld [vmem:[%s1637 + $0x20] sm:$0xf]
        %v1643 = vld [vmem:[%s1637 + $0x28] sm:$0xf]
        %v1644 = vld [vmem:[%s1637 + $0x30] sm:$0xf]
        %v1645 = vld [vmem:[%s1637 + $0x38] sm:$0xf]
        %v1646 = vld [vmem:[%s1637 + $0x50] sm:$0xf]
        %v1647 = vld [vmem:[%s1637 + $0x58] sm:$0xf]
        %v1648 = vld [vmem:[%s1637 + $0x60] sm:$0xf]
        %v1649 = vld [vmem:[%s1637 + $0x68] sm:$0xf]
        %v1650 = vld [vmem:[%s1637 + $0x70] sm:$0xf]
        %v1651 = vld [vmem:[%s1637 + $0x78] sm:$0xf]
        %v1652 = vld [vmem:[%s1637 + $0x80] sm:$0xf]
        %v1653 = vld [vmem:[%s1637 + $0x88] sm:$0xf]
        %s1654 = scalar_lea.vmem %s768, 192 [#allocation2]
        %v1655 = vld [vmem:[%s1654] sm:$0xf]
        %v1656 = vld [vmem:[%s1654 + $0x4] sm:$0xf]
        %v1657 = vld [vmem:[%s1654 + $0x8] sm:$0xf]
        %v1658 = vld [vmem:[%s1654 + $0xc] sm:$0xf]
        %v1659 = vld [vmem:[%s1654 + $0x10] sm:$0xf]
        %v1660 = vld [vmem:[%s1654 + $0x14] sm:$0xf]
        %v1661 = vld [vmem:[%s1654 + $0x18] sm:$0xf]
        %v1662 = vld [vmem:[%s1654 + $0x1c] sm:$0xf]
        %v1663 = vld [vmem:[%s1654 + $0x20] sm:$0xf]
        %v1664 = vld [vmem:[%s1654 + $0x24] sm:$0xf]
        %v1665 = vld [vmem:[%s1654 + $0x28] sm:$0xf]
        %v1666 = vld [vmem:[%s1654 + $0x2c] sm:$0xf]
        %v1667 = vld [vmem:[%s1654 + $0x30] sm:$0xf]
        %v1668 = vld [vmem:[%s1654 + $0x34] sm:$0xf]
        %v1669 = vld [vmem:[%s1654 + $0x38] sm:$0xf]
        %v1670 = vld [vmem:[%s1654 + $0x3c] sm:$0xf]
        %v1687 = vunpack.c.l.b16 %v1638
        %v1688 = vunpack.c.l.b16 %v1639
        %v1689 = vunpack.c.l.b16 %v1640
        %v1690 = vunpack.c.l.b16 %v1641
        %v1691 = vunpack.c.l.b16 %v1642
        %v1692 = vunpack.c.l.b16 %v1643
        %v1693 = vunpack.c.l.b16 %v1644
        %v1694 = vunpack.c.l.b16 %v1645
        %v1695 = vunpack.c.l.b16 %v1646
        %v1696 = vunpack.c.l.b16 %v1647
        %v1697 = vunpack.c.l.b16 %v1648
        %v1698 = vunpack.c.l.b16 %v1649
        %v1699 = vunpack.c.l.b16 %v1650
        %v1700 = vunpack.c.l.b16 %v1651
        %v1701 = vunpack.c.l.b16 %v1652
        %v1702 = vunpack.c.l.b16 %v1653
        %v1703 = vpack.c.b16 %v1688, %v1687
        %v1704 = vpack.c.b16 %v1690, %v1689
        %v1705 = vpack.c.b16 %v1692, %v1691
        %v1706 = vpack.c.b16 %v1694, %v1693
        %v1707 = vpack.c.b16 %v1696, %v1695
        %v1708 = vpack.c.b16 %v1698, %v1697
        %v1709 = vpack.c.b16 %v1700, %v1699
        %v1710 = vpack.c.b16 %v1702, %v1701
        %v1735 = vunpack.c.l.b16 %v1655
        %v1736 = vunpack.c.l.b16 %v1656
        %v1737 = vunpack.c.l.b16 %v1657
        %v1738 = vunpack.c.l.b16 %v1658
        %v1739 = vunpack.c.l.b16 %v1659
        %v1740 = vunpack.c.l.b16 %v1660
        %v1741 = vunpack.c.l.b16 %v1661
        %v1742 = vunpack.c.l.b16 %v1662
        %v1743 = vunpack.c.l.b16 %v1663
        %v1744 = vunpack.c.l.b16 %v1664
        %v1745 = vunpack.c.l.b16 %v1665
        %v1746 = vunpack.c.l.b16 %v1666
        %v1747 = vunpack.c.l.b16 %v1667
        %v1748 = vunpack.c.l.b16 %v1668
        %v1749 = vunpack.c.l.b16 %v1669
        %v1750 = vunpack.c.l.b16 %v1670
        %v1751 = vpack.c.b16 %v1736, %v1735
        %v1752 = vpack.c.b16 %v1738, %v1737
        %v1753 = vpack.c.b16 %v1740, %v1739
        %v1754 = vpack.c.b16 %v1742, %v1741
        %v1755 = vpack.c.b16 %v1744, %v1743
        %v1756 = vpack.c.b16 %v1746, %v1745
        %v1757 = vpack.c.b16 %v1748, %v1747
        %v1758 = vpack.c.b16 %v1750, %v1749
        %1767 = vmatpush.bf16.msra.mxu0 %v1758
        %1768 = vmatpush.bf16.msra.mxu0 %v1757
        %1769 = vmatpush.bf16.msra.mxu0 %v1756
        %1770 = vmatpush.bf16.msra.mxu0 %v1755
        %1771 = vmatpush.bf16.msra.mxu0 %v1754
        %1772 = vmatpush.bf16.msra.mxu0 %v1753
        %1773 = vmatpush.bf16.msra.mxu0 %v1752
        %1774 = vmatpush.bf16.msra.mxu0 %v1751
        %1775 = vmatmul.bf16.gmra.mxu0 %v1703
        %v1776 = vpop.f32.mrf.mxu0
        %v1777 = vadd.f32 0.0, %v1776
        %v1778 = vpop.f32.mrf.mxu0
        %v1779 = vadd.f32 0.0, %v1778
        %1780 = vmatmul.bf16.gmra.mxu0 %v1704
        %v1781 = vpop.f32.mrf.mxu0
        %v1782 = vadd.f32 0.0, %v1781
        %v1783 = vpop.f32.mrf.mxu0
        %v1784 = vadd.f32 0.0, %v1783
        %1785 = vmatmul.bf16.gmra.mxu0 %v1705
        %v1786 = vpop.f32.mrf.mxu0
        %v1787 = vadd.f32 0.0, %v1786
        %v1788 = vpop.f32.mrf.mxu0
        %v1789 = vadd.f32 0.0, %v1788
        %1790 = vmatmul.bf16.gmra.mxu0 %v1706
        %v1791 = vpop.f32.mrf.mxu0
        %v1792 = vadd.f32 0.0, %v1791
        %v1793 = vpop.f32.mrf.mxu0
        %v1794 = vadd.f32 0.0, %v1793
        %1795 = vmatmul.bf16.gmra.mxu0 %v1707
        %v1796 = vpop.f32.mrf.mxu0
        %v1797 = vadd.f32 0.0, %v1796
        %v1798 = vpop.f32.mrf.mxu0
        %v1799 = vadd.f32 0.0, %v1798
        %1800 = vmatmul.bf16.gmra.mxu0 %v1708
        %v1801 = vpop.f32.mrf.mxu0
        %v1802 = vadd.f32 0.0, %v1801
        %v1803 = vpop.f32.mrf.mxu0
        %v1804 = vadd.f32 0.0, %v1803
        %1805 = vmatmul.bf16.gmra.mxu0 %v1709
        %v1806 = vpop.f32.mrf.mxu0
        %v1807 = vadd.f32 0.0, %v1806
        %v1808 = vpop.f32.mrf.mxu0
        %v1809 = vadd.f32 0.0, %v1808
        %1810 = vmatmul.bf16.gmra.mxu0 %v1710
        %v1811 = vpop.f32.mrf.mxu0
        %v1812 = vadd.f32 0.0, %v1811
        %v1813 = vpop.f32.mrf.mxu0
        %v1814 = vadd.f32 0.0, %v1813
        %1815 = vdwg.mxu0
        %v1816 = vadd.f32 %v1621, %v1777
        %v1817 = vadd.f32 %v1622, %v1779
        %v1818 = vadd.f32 %v1623, %v1782
        %v1819 = vadd.f32 %v1624, %v1784
        %v1820 = vadd.f32 %v1625, %v1787
        %v1821 = vadd.f32 %v1626, %v1789
        %v1822 = vadd.f32 %v1627, %v1792
        %v1823 = vadd.f32 %v1628, %v1794
        %v1824 = vadd.f32 %v1629, %v1797
        %v1825 = vadd.f32 %v1630, %v1799
        %v1826 = vadd.f32 %v1631, %v1802
        %v1827 = vadd.f32 %v1632, %v1804
        %v1828 = vadd.f32 %v1633, %v1807
        %v1829 = vadd.f32 %v1634, %v1809
        %v1830 = vadd.f32 %v1635, %v1812
        %v1831 = vadd.f32 %v1636, %v1814
        %v1832 = vld [vmem:[%s1637] sm:$0xf]
        %v1833 = vld [vmem:[%s1637 + $0x4] sm:$0x1]
        %v1834 = vld [vmem:[%s1637 + $0x8] sm:$0xf]
        %v1835 = vld [vmem:[%s1637 + $0xc] sm:$0x1]
        %v1836 = vld [vmem:[%s1637 + $0x10] sm:$0xf]
        %v1837 = vld [vmem:[%s1637 + $0x14] sm:$0x1]
        %v1838 = vld [vmem:[%s1637 + $0x18] sm:$0xf]
        %v1839 = vld [vmem:[%s1637 + $0x1c] sm:$0x1]
        %v1840 = vld [vmem:[%s1637 + $0x20] sm:$0xf]
        %v1841 = vld [vmem:[%s1637 + $0x24] sm:$0x1]
        %v1842 = vld [vmem:[%s1637 + $0x28] sm:$0xf]
        %v1843 = vld [vmem:[%s1637 + $0x2c] sm:$0x1]
        %v1844 = vld [vmem:[%s1637 + $0x30] sm:$0xf]
        %v1845 = vld [vmem:[%s1637 + $0x34] sm:$0x1]
        %v1846 = vld [vmem:[%s1637 + $0x38] sm:$0xf]
        %v1847 = vld [vmem:[%s1637 + $0x3c] sm:$0x1]
        %v1848 = vld [vmem:[%s1637 + $0x50] sm:$0xf]
        %v1849 = vld [vmem:[%s1637 + $0x54] sm:$0x1]
        %v1850 = vld [vmem:[%s1637 + $0x58] sm:$0xf]
        %v1851 = vld [vmem:[%s1637 + $0x5c] sm:$0x1]
        %v1852 = vld [vmem:[%s1637 + $0x60] sm:$0xf]
        %v1853 = vld [vmem:[%s1637 + $0x64] sm:$0x1]
        %v1854 = vld [vmem:[%s1637 + $0x68] sm:$0xf]
        %v1855 = vld [vmem:[%s1637 + $0x6c] sm:$0x1]
        %v1856 = vld [vmem:[%s1637 + $0x70] sm:$0xf]
        %v1857 = vld [vmem:[%s1637 + $0x74] sm:$0x1]
        %v1858 = vld [vmem:[%s1637 + $0x78] sm:$0xf]
        %v1859 = vld [vmem:[%s1637 + $0x7c] sm:$0x1]
        %v1860 = vld [vmem:[%s1637 + $0x80] sm:$0xf]
        %v1861 = vld [vmem:[%s1637 + $0x84] sm:$0x1]
        %v1862 = vld [vmem:[%s1637 + $0x88] sm:$0xf]
        %v1863 = vld [vmem:[%s1637 + $0x8c] sm:$0x1]
        %v1865 = vshrl.u32 %v1832, 16
        %v1867 = vrot.slane %v1865, 4
        %v1868 = vshll.u32 %v1832, 16
        %v1870 = vrot.slane %v1868, 5
        %v1871 = vor.u32 %v1867, %v1870
        %v1872 = vrot.slane %v1871, 4
        %v1874 = vshll.u32 %v1833, 16
        %v1876 = vrot.slane %v1874, 5
        %v1877 = vsel %vm844, %v1872, %v1876
        %v1879 = vshrl.u32 %v1834, 16
        %v1881 = vrot.slane %v1879, 4
        %v1882 = vshll.u32 %v1834, 16
        %v1884 = vrot.slane %v1882, 5
        %v1885 = vor.u32 %v1881, %v1884
        %v1886 = vrot.slane %v1885, 4
        %v1888 = vshll.u32 %v1835, 16
        %v1890 = vrot.slane %v1888, 5
        %v1891 = vsel %vm844, %v1886, %v1890
        %v1893 = vshrl.u32 %v1836, 16
        %v1895 = vrot.slane %v1893, 4
        %v1896 = vshll.u32 %v1836, 16
        %v1898 = vrot.slane %v1896, 5
        %v1899 = vor.u32 %v1895, %v1898
        %v1900 = vrot.slane %v1899, 4
        %v1902 = vshll.u32 %v1837, 16
        %v1904 = vrot.slane %v1902, 5
        %v1905 = vsel %vm844, %v1900, %v1904
        %v1907 = vshrl.u32 %v1838, 16
        %v1909 = vrot.slane %v1907, 4
        %v1910 = vshll.u32 %v1838, 16
        %v1912 = vrot.slane %v1910, 5
        %v1913 = vor.u32 %v1909, %v1912
        %v1914 = vrot.slane %v1913, 4
        %v1916 = vshll.u32 %v1839, 16
        %v1918 = vrot.slane %v1916, 5
        %v1919 = vsel %vm844, %v1914, %v1918
        %v1921 = vshrl.u32 %v1840, 16
        %v1923 = vrot.slane %v1921, 4
        %v1924 = vshll.u32 %v1840, 16
        %v1926 = vrot.slane %v1924, 5
        %v1927 = vor.u32 %v1923, %v1926
        %v1928 = vrot.slane %v1927, 4
        %v1930 = vshll.u32 %v1841, 16
        %v1932 = vrot.slane %v1930, 5
        %v1933 = vsel %vm844, %v1928, %v1932
        %v1935 = vshrl.u32 %v1842, 16
        %v1937 = vrot.slane %v1935, 4
        %v1938 = vshll.u32 %v1842, 16
        %v1940 = vrot.slane %v1938, 5
        %v1941 = vor.u32 %v1937, %v1940
        %v1942 = vrot.slane %v1941, 4
        %v1944 = vshll.u32 %v1843, 16
        %v1946 = vrot.slane %v1944, 5
        %v1947 = vsel %vm844, %v1942, %v1946
        %v1949 = vshrl.u32 %v1844, 16
        %v1951 = vrot.slane %v1949, 4
        %v1952 = vshll.u32 %v1844, 16
        %v1954 = vrot.slane %v1952, 5
        %v1955 = vor.u32 %v1951, %v1954
        %v1956 = vrot.slane %v1955, 4
        %v1958 = vshll.u32 %v1845, 16
        %v1960 = vrot.slane %v1958, 5
        %v1961 = vsel %vm844, %v1956, %v1960
        %v1963 = vshrl.u32 %v1846, 16
        %v1965 = vrot.slane %v1963, 4
        %v1966 = vshll.u32 %v1846, 16
        %v1968 = vrot.slane %v1966, 5
        %v1969 = vor.u32 %v1965, %v1968
        %v1970 = vrot.slane %v1969, 4
        %v1972 = vshll.u32 %v1847, 16
        %v1974 = vrot.slane %v1972, 5
        %v1975 = vsel %vm844, %v1970, %v1974
        %v1977 = vshrl.u32 %v1848, 16
        %v1979 = vrot.slane %v1977, 4
        %v1980 = vshll.u32 %v1848, 16
        %v1982 = vrot.slane %v1980, 5
        %v1983 = vor.u32 %v1979, %v1982
        %v1984 = vrot.slane %v1983, 4
        %v1986 = vshll.u32 %v1849, 16
        %v1988 = vrot.slane %v1986, 5
        %v1989 = vsel %vm844, %v1984, %v1988
        %v1991 = vshrl.u32 %v1850, 16
        %v1993 = vrot.slane %v1991, 4
        %v1994 = vshll.u32 %v1850, 16
        %v1996 = vrot.slane %v1994, 5
        %v1997 = vor.u32 %v1993, %v1996
        %v1998 = vrot.slane %v1997, 4
        %v2000 = vshll.u32 %v1851, 16
        %v2002 = vrot.slane %v2000, 5
        %v2003 = vsel %vm844, %v1998, %v2002
        %v2005 = vshrl.u32 %v1852, 16
        %v2007 = vrot.slane %v2005, 4
        %v2008 = vshll.u32 %v1852, 16
        %v2010 = vrot.slane %v2008, 5
        %v2011 = vor.u32 %v2007, %v2010
        %v2012 = vrot.slane %v2011, 4
        %v2014 = vshll.u32 %v1853, 16
        %v2016 = vrot.slane %v2014, 5
        %v2017 = vsel %vm844, %v2012, %v2016
        %v2019 = vshrl.u32 %v1854, 16
        %v2021 = vrot.slane %v2019, 4
        %v2022 = vshll.u32 %v1854, 16
        %v2024 = vrot.slane %v2022, 5
        %v2025 = vor.u32 %v2021, %v2024
        %v2026 = vrot.slane %v2025, 4
        %v2028 = vshll.u32 %v1855, 16
        %v2030 = vrot.slane %v2028, 5
        %v2031 = vsel %vm844, %v2026, %v2030
        %v2033 = vshrl.u32 %v1856, 16
        %v2035 = vrot.slane %v2033, 4
        %v2036 = vshll.u32 %v1856, 16
        %v2038 = vrot.slane %v2036, 5
        %v2039 = vor.u32 %v2035, %v2038
        %v2040 = vrot.slane %v2039, 4
        %v2042 = vshll.u32 %v1857, 16
        %v2044 = vrot.slane %v2042, 5
        %v2045 = vsel %vm844, %v2040, %v2044
        %v2047 = vshrl.u32 %v1858, 16
        %v2049 = vrot.slane %v2047, 4
        %v2050 = vshll.u32 %v1858, 16
        %v2052 = vrot.slane %v2050, 5
        %v2053 = vor.u32 %v2049, %v2052
        %v2054 = vrot.slane %v2053, 4
        %v2056 = vshll.u32 %v1859, 16
        %v2058 = vrot.slane %v2056, 5
        %v2059 = vsel %vm844, %v2054, %v2058
        %v2061 = vshrl.u32 %v1860, 16
        %v2063 = vrot.slane %v2061, 4
        %v2064 = vshll.u32 %v1860, 16
        %v2066 = vrot.slane %v2064, 5
        %v2067 = vor.u32 %v2063, %v2066
        %v2068 = vrot.slane %v2067, 4
        %v2070 = vshll.u32 %v1861, 16
        %v2072 = vrot.slane %v2070, 5
        %v2073 = vsel %vm844, %v2068, %v2072
        %v2075 = vshrl.u32 %v1862, 16
        %v2077 = vrot.slane %v2075, 4
        %v2078 = vshll.u32 %v1862, 16
        %v2080 = vrot.slane %v2078, 5
        %v2081 = vor.u32 %v2077, %v2080
        %v2082 = vrot.slane %v2081, 4
        %v2084 = vshll.u32 %v1863, 16
        %v2086 = vrot.slane %v2084, 5
        %v2087 = vsel %vm844, %v2082, %v2086
        %s2088 = scalar_lea.vmem %s768, 256 [#allocation2]
        %v2089 = vld [vmem:[%s2088] sm:$0xf]
        %v2090 = vld [vmem:[%s2088 + $0x4] sm:$0xf]
        %v2091 = vld [vmem:[%s2088 + $0x8] sm:$0xf]
        %v2092 = vld [vmem:[%s2088 + $0xc] sm:$0xf]
        %v2093 = vld [vmem:[%s2088 + $0x10] sm:$0xf]
        %v2094 = vld [vmem:[%s2088 + $0x14] sm:$0xf]
        %v2095 = vld [vmem:[%s2088 + $0x18] sm:$0xf]
        %v2096 = vld [vmem:[%s2088 + $0x1c] sm:$0xf]
        %v2097 = vld [vmem:[%s2088 + $0x20] sm:$0xf]
        %v2098 = vld [vmem:[%s2088 + $0x24] sm:$0xf]
        %v2099 = vld [vmem:[%s2088 + $0x28] sm:$0xf]
        %v2100 = vld [vmem:[%s2088 + $0x2c] sm:$0xf]
        %v2101 = vld [vmem:[%s2088 + $0x30] sm:$0xf]
        %v2102 = vld [vmem:[%s2088 + $0x34] sm:$0xf]
        %v2103 = vld [vmem:[%s2088 + $0x38] sm:$0xf]
        %v2104 = vld [vmem:[%s2088 + $0x3c] sm:$0xf]
        %v2105 = vunpack.c.l.b16 %v1877
        %v2106 = vunpack.c.l.b16 %v1891
        %v2107 = vunpack.c.l.b16 %v1905
        %v2108 = vunpack.c.l.b16 %v1919
        %v2109 = vunpack.c.l.b16 %v1933
        %v2110 = vunpack.c.l.b16 %v1947
        %v2111 = vunpack.c.l.b16 %v1961
        %v2112 = vunpack.c.l.b16 %v1975
        %v2113 = vunpack.c.l.b16 %v1989
        %v2114 = vunpack.c.l.b16 %v2003
        %v2115 = vunpack.c.l.b16 %v2017
        %v2116 = vunpack.c.l.b16 %v2031
        %v2117 = vunpack.c.l.b16 %v2045
        %v2118 = vunpack.c.l.b16 %v2059
        %v2119 = vunpack.c.l.b16 %v2073
        %v2120 = vunpack.c.l.b16 %v2087
        %v2121 = vpack.c.b16 %v2106, %v2105
        %v2122 = vpack.c.b16 %v2108, %v2107
        %v2123 = vpack.c.b16 %v2110, %v2109
        %v2124 = vpack.c.b16 %v2112, %v2111
        %v2125 = vpack.c.b16 %v2114, %v2113
        %v2126 = vpack.c.b16 %v2116, %v2115
        %v2127 = vpack.c.b16 %v2118, %v2117
        %v2128 = vpack.c.b16 %v2120, %v2119
        %v2153 = vunpack.c.l.b16 %v2089
        %v2154 = vunpack.c.l.b16 %v2090
        %v2155 = vunpack.c.l.b16 %v2091
        %v2156 = vunpack.c.l.b16 %v2092
        %v2157 = vunpack.c.l.b16 %v2093
        %v2158 = vunpack.c.l.b16 %v2094
        %v2159 = vunpack.c.l.b16 %v2095
        %v2160 = vunpack.c.l.b16 %v2096
        %v2161 = vunpack.c.l.b16 %v2097
        %v2162 = vunpack.c.l.b16 %v2098
        %v2163 = vunpack.c.l.b16 %v2099
        %v2164 = vunpack.c.l.b16 %v2100
        %v2165 = vunpack.c.l.b16 %v2101
        %v2166 = vunpack.c.l.b16 %v2102
        %v2167 = vunpack.c.l.b16 %v2103
        %v2168 = vunpack.c.l.b16 %v2104
        %v2169 = vpack.c.b16 %v2154, %v2153
        %v2170 = vpack.c.b16 %v2156, %v2155
        %v2171 = vpack.c.b16 %v2158, %v2157
        %v2172 = vpack.c.b16 %v2160, %v2159
        %v2173 = vpack.c.b16 %v2162, %v2161
        %v2174 = vpack.c.b16 %v2164, %v2163
        %v2175 = vpack.c.b16 %v2166, %v2165
        %v2176 = vpack.c.b16 %v2168, %v2167
        %2185 = vmatpush.bf16.msra.mxu0 %v2176
        %2186 = vmatpush.bf16.msra.mxu0 %v2175
        %2187 = vmatpush.bf16.msra.mxu0 %v2174
        %2188 = vmatpush.bf16.msra.mxu0 %v2173
        %2189 = vmatpush.bf16.msra.mxu0 %v2172
        %2190 = vmatpush.bf16.msra.mxu0 %v2171
        %2191 = vmatpush.bf16.msra.mxu0 %v2170
        %2192 = vmatpush.bf16.msra.mxu0 %v2169
        %2193 = vmatmul.bf16.gmra.mxu0 %v2121
        %v2194 = vpop.f32.mrf.mxu0
        %v2195 = vadd.f32 0.0, %v2194
        %v2196 = vpop.f32.mrf.mxu0
        %v2197 = vadd.f32 0.0, %v2196
        %2198 = vmatmul.bf16.gmra.mxu0 %v2122
        %v2199 = vpop.f32.mrf.mxu0
        %v2200 = vadd.f32 0.0, %v2199
        %v2201 = vpop.f32.mrf.mxu0
        %v2202 = vadd.f32 0.0, %v2201
        %2203 = vmatmul.bf16.gmra.mxu0 %v2123
        %v2204 = vpop.f32.mrf.mxu0
        %v2205 = vadd.f32 0.0, %v2204
        %v2206 = vpop.f32.mrf.mxu0
        %v2207 = vadd.f32 0.0, %v2206
        %2208 = vmatmul.bf16.gmra.mxu0 %v2124
        %v2209 = vpop.f32.mrf.mxu0
        %v2210 = vadd.f32 0.0, %v2209
        %v2211 = vpop.f32.mrf.mxu0
        %v2212 = vadd.f32 0.0, %v2211
        %2213 = vmatmul.bf16.gmra.mxu0 %v2125
        %v2214 = vpop.f32.mrf.mxu0
        %v2215 = vadd.f32 0.0, %v2214
        %v2216 = vpop.f32.mrf.mxu0
        %v2217 = vadd.f32 0.0, %v2216
        %2218 = vmatmul.bf16.gmra.mxu0 %v2126
        %v2219 = vpop.f32.mrf.mxu0
        %v2220 = vadd.f32 0.0, %v2219
        %v2221 = vpop.f32.mrf.mxu0
        %v2222 = vadd.f32 0.0, %v2221
        %2223 = vmatmul.bf16.gmra.mxu0 %v2127
        %v2224 = vpop.f32.mrf.mxu0
        %v2225 = vadd.f32 0.0, %v2224
        %v2226 = vpop.f32.mrf.mxu0
        %v2227 = vadd.f32 0.0, %v2226
        %2228 = vmatmul.bf16.gmra.mxu0 %v2128
        %v2229 = vpop.f32.mrf.mxu0
        %v2230 = vadd.f32 0.0, %v2229
        %v2231 = vpop.f32.mrf.mxu0
        %v2232 = vadd.f32 0.0, %v2231
        %2233 = vdwg.mxu0
        %v2234 = vadd.f32 %v1816, %v2195
        %v2235 = vadd.f32 %v1817, %v2197
        %v2236 = vadd.f32 %v1818, %v2200
        %v2237 = vadd.f32 %v1819, %v2202
        %v2238 = vadd.f32 %v1820, %v2205
        %v2239 = vadd.f32 %v1821, %v2207
        %v2240 = vadd.f32 %v1822, %v2210
        %v2241 = vadd.f32 %v1823, %v2212
        %v2242 = vadd.f32 %v1824, %v2215
        %v2243 = vadd.f32 %v1825, %v2217
        %v2244 = vadd.f32 %v1826, %v2220
        %v2245 = vadd.f32 %v1827, %v2222
        %v2246 = vadd.f32 %v1828, %v2225
        %v2247 = vadd.f32 %v1829, %v2227
        %v2248 = vadd.f32 %v1830, %v2230
        %v2249 = vadd.f32 %v1831, %v2232
        %v2250 = vld [vmem:[%s1637] sm:$0xe]
        %v2251 = vld [vmem:[%s1637 + $0x8] sm:$0xe]
        %v2252 = vld [vmem:[%s1637 + $0x10] sm:$0xe]
        %v2253 = vld [vmem:[%s1637 + $0x18] sm:$0xe]
        %v2254 = vld [vmem:[%s1637 + $0x20] sm:$0xe]
        %v2255 = vld [vmem:[%s1637 + $0x28] sm:$0xe]
        %v2256 = vld [vmem:[%s1637 + $0x30] sm:$0xe]
        %v2257 = vld [vmem:[%s1637 + $0x38] sm:$0xe]
        %v2258 = vld [vmem:[%s1637 + $0x50] sm:$0xe]
        %v2259 = vld [vmem:[%s1637 + $0x58] sm:$0xe]
        %v2260 = vld [vmem:[%s1637 + $0x60] sm:$0xe]
        %v2261 = vld [vmem:[%s1637 + $0x68] sm:$0xe]
        %v2262 = vld [vmem:[%s1637 + $0x70] sm:$0xe]
        %v2263 = vld [vmem:[%s1637 + $0x78] sm:$0xe]
        %v2264 = vld [vmem:[%s1637 + $0x80] sm:$0xe]
        %v2265 = vld [vmem:[%s1637 + $0x88] sm:$0xe]
        %v2298 = vrot.slane %v2250, 5
        %v2299 = vrot.slane %v2298, 4
        %v2300 = vrot.slane %v1833, 5
        %v2301 = vsel %vm1410, %v2299, %v2300
        %v2302 = vrot.slane %v2251, 5
        %v2303 = vrot.slane %v2302, 4
        %v2304 = vrot.slane %v1835, 5
        %v2305 = vsel %vm1410, %v2303, %v2304
        %v2306 = vrot.slane %v2252, 5
        %v2307 = vrot.slane %v2306, 4
        %v2308 = vrot.slane %v1837, 5
        %v2309 = vsel %vm1410, %v2307, %v2308
        %v2310 = vrot.slane %v2253, 5
        %v2311 = vrot.slane %v2310, 4
        %v2312 = vrot.slane %v1839, 5
        %v2313 = vsel %vm1410, %v2311, %v2312
        %v2314 = vrot.slane %v2254, 5
        %v2315 = vrot.slane %v2314, 4
        %v2316 = vrot.slane %v1841, 5
        %v2317 = vsel %vm1410, %v2315, %v2316
        %v2318 = vrot.slane %v2255, 5
        %v2319 = vrot.slane %v2318, 4
        %v2320 = vrot.slane %v1843, 5
        %v2321 = vsel %vm1410, %v2319, %v2320
        %v2322 = vrot.slane %v2256, 5
        %v2323 = vrot.slane %v2322, 4
        %v2324 = vrot.slane %v1845, 5
        %v2325 = vsel %vm1410, %v2323, %v2324
        %v2326 = vrot.slane %v2257, 5
        %v2327 = vrot.slane %v2326, 4
        %v2328 = vrot.slane %v1847, 5
        %v2329 = vsel %vm1410, %v2327, %v2328
        %v2330 = vrot.slane %v2258, 5
        %v2331 = vrot.slane %v2330, 4
        %v2332 = vrot.slane %v1849, 5
        %v2333 = vsel %vm1410, %v2331, %v2332
        %v2334 = vrot.slane %v2259, 5
        %v2335 = vrot.slane %v2334, 4
        %v2336 = vrot.slane %v1851, 5
        %v2337 = vsel %vm1410, %v2335, %v2336
        %v2338 = vrot.slane %v2260, 5
        %v2339 = vrot.slane %v2338, 4
        %v2340 = vrot.slane %v1853, 5
        %v2341 = vsel %vm1410, %v2339, %v2340
        %v2342 = vrot.slane %v2261, 5
        %v2343 = vrot.slane %v2342, 4
        %v2344 = vrot.slane %v1855, 5
        %v2345 = vsel %vm1410, %v2343, %v2344
        %v2346 = vrot.slane %v2262, 5
        %v2347 = vrot.slane %v2346, 4
        %v2348 = vrot.slane %v1857, 5
        %v2349 = vsel %vm1410, %v2347, %v2348
        %v2350 = vrot.slane %v2263, 5
        %v2351 = vrot.slane %v2350, 4
        %v2352 = vrot.slane %v1859, 5
        %v2353 = vsel %vm1410, %v2351, %v2352
        %v2354 = vrot.slane %v2264, 5
        %v2355 = vrot.slane %v2354, 4
        %v2356 = vrot.slane %v1861, 5
        %v2357 = vsel %vm1410, %v2355, %v2356
        %v2358 = vrot.slane %v2265, 5
        %v2359 = vrot.slane %v2358, 4
        %v2360 = vrot.slane %v1863, 5
        %v2361 = vsel %vm1410, %v2359, %v2360
        %s2362 = scalar_lea.vmem %s768, 320 [#allocation2]
        %v2363 = vld [vmem:[%s2362] sm:$0xf]
        %v2364 = vld [vmem:[%s2362 + $0x4] sm:$0xf]
        %v2365 = vld [vmem:[%s2362 + $0x8] sm:$0xf]
        %v2366 = vld [vmem:[%s2362 + $0xc] sm:$0xf]
        %v2367 = vld [vmem:[%s2362 + $0x10] sm:$0xf]
        %v2368 = vld [vmem:[%s2362 + $0x14] sm:$0xf]
        %v2369 = vld [vmem:[%s2362 + $0x18] sm:$0xf]
        %v2370 = vld [vmem:[%s2362 + $0x1c] sm:$0xf]
        %v2371 = vld [vmem:[%s2362 + $0x20] sm:$0xf]
        %v2372 = vld [vmem:[%s2362 + $0x24] sm:$0xf]
        %v2373 = vld [vmem:[%s2362 + $0x28] sm:$0xf]
        %v2374 = vld [vmem:[%s2362 + $0x2c] sm:$0xf]
        %v2375 = vld [vmem:[%s2362 + $0x30] sm:$0xf]
        %v2376 = vld [vmem:[%s2362 + $0x34] sm:$0xf]
        %v2377 = vld [vmem:[%s2362 + $0x38] sm:$0xf]
        %v2378 = vld [vmem:[%s2362 + $0x3c] sm:$0xf]
        %v2379 = vunpack.c.l.b16 %v2301
        %v2380 = vunpack.c.l.b16 %v2305
        %v2381 = vunpack.c.l.b16 %v2309
        %v2382 = vunpack.c.l.b16 %v2313
        %v2383 = vunpack.c.l.b16 %v2317
        %v2384 = vunpack.c.l.b16 %v2321
        %v2385 = vunpack.c.l.b16 %v2325
        %v2386 = vunpack.c.l.b16 %v2329
        %v2387 = vunpack.c.l.b16 %v2333
        %v2388 = vunpack.c.l.b16 %v2337
        %v2389 = vunpack.c.l.b16 %v2341
        %v2390 = vunpack.c.l.b16 %v2345
        %v2391 = vunpack.c.l.b16 %v2349
        %v2392 = vunpack.c.l.b16 %v2353
        %v2393 = vunpack.c.l.b16 %v2357
        %v2394 = vunpack.c.l.b16 %v2361
        %v2395 = vpack.c.b16 %v2380, %v2379
        %v2396 = vpack.c.b16 %v2382, %v2381
        %v2397 = vpack.c.b16 %v2384, %v2383
        %v2398 = vpack.c.b16 %v2386, %v2385
        %v2399 = vpack.c.b16 %v2388, %v2387
        %v2400 = vpack.c.b16 %v2390, %v2389
        %v2401 = vpack.c.b16 %v2392, %v2391
        %v2402 = vpack.c.b16 %v2394, %v2393
        %v2427 = vunpack.c.l.b16 %v2363
        %v2428 = vunpack.c.l.b16 %v2364
        %v2429 = vunpack.c.l.b16 %v2365
        %v2430 = vunpack.c.l.b16 %v2366
        %v2431 = vunpack.c.l.b16 %v2367
        %v2432 = vunpack.c.l.b16 %v2368
        %v2433 = vunpack.c.l.b16 %v2369
        %v2434 = vunpack.c.l.b16 %v2370
        %v2435 = vunpack.c.l.b16 %v2371
        %v2436 = vunpack.c.l.b16 %v2372
        %v2437 = vunpack.c.l.b16 %v2373
        %v2438 = vunpack.c.l.b16 %v2374
        %v2439 = vunpack.c.l.b16 %v2375
        %v2440 = vunpack.c.l.b16 %v2376
        %v2441 = vunpack.c.l.b16 %v2377
        %v2442 = vunpack.c.l.b16 %v2378
        %v2443 = vpack.c.b16 %v2428, %v2427
        %v2444 = vpack.c.b16 %v2430, %v2429
        %v2445 = vpack.c.b16 %v2432, %v2431
        %v2446 = vpack.c.b16 %v2434, %v2433
        %v2447 = vpack.c.b16 %v2436, %v2435
        %v2448 = vpack.c.b16 %v2438, %v2437
        %v2449 = vpack.c.b16 %v2440, %v2439
        %v2450 = vpack.c.b16 %v2442, %v2441
        %2459 = vmatpush.bf16.msra.mxu0 %v2450
        %2460 = vmatpush.bf16.msra.mxu0 %v2449
        %2461 = vmatpush.bf16.msra.mxu0 %v2448
        %2462 = vmatpush.bf16.msra.mxu0 %v2447
        %2463 = vmatpush.bf16.msra.mxu0 %v2446
        %2464 = vmatpush.bf16.msra.mxu0 %v2445
        %2465 = vmatpush.bf16.msra.mxu0 %v2444
        %2466 = vmatpush.bf16.msra.mxu0 %v2443
        %2467 = vmatmul.bf16.gmra.mxu0 %v2395
        %v2468 = vpop.f32.mrf.mxu0
        %v2469 = vadd.f32 0.0, %v2468
        %v2470 = vpop.f32.mrf.mxu0
        %v2471 = vadd.f32 0.0, %v2470
        %2472 = vmatmul.bf16.gmra.mxu0 %v2396
        %v2473 = vpop.f32.mrf.mxu0
        %v2474 = vadd.f32 0.0, %v2473
        %v2475 = vpop.f32.mrf.mxu0
        %v2476 = vadd.f32 0.0, %v2475
        %2477 = vmatmul.bf16.gmra.mxu0 %v2397
        %v2478 = vpop.f32.mrf.mxu0
        %v2479 = vadd.f32 0.0, %v2478
        %v2480 = vpop.f32.mrf.mxu0
        %v2481 = vadd.f32 0.0, %v2480
        %2482 = vmatmul.bf16.gmra.mxu0 %v2398
        %v2483 = vpop.f32.mrf.mxu0
        %v2484 = vadd.f32 0.0, %v2483
        %v2485 = vpop.f32.mrf.mxu0
        %v2486 = vadd.f32 0.0, %v2485
        %2487 = vmatmul.bf16.gmra.mxu0 %v2399
        %v2488 = vpop.f32.mrf.mxu0
        %v2489 = vadd.f32 0.0, %v2488
        %v2490 = vpop.f32.mrf.mxu0
        %v2491 = vadd.f32 0.0, %v2490
        %2492 = vmatmul.bf16.gmra.mxu0 %v2400
        %v2493 = vpop.f32.mrf.mxu0
        %v2494 = vadd.f32 0.0, %v2493
        %v2495 = vpop.f32.mrf.mxu0
        %v2496 = vadd.f32 0.0, %v2495
        %2497 = vmatmul.bf16.gmra.mxu0 %v2401
        %v2498 = vpop.f32.mrf.mxu0
        %v2499 = vadd.f32 0.0, %v2498
        %v2500 = vpop.f32.mrf.mxu0
        %v2501 = vadd.f32 0.0, %v2500
        %2502 = vmatmul.bf16.gmra.mxu0 %v2402
        %v2503 = vpop.f32.mrf.mxu0
        %v2504 = vadd.f32 0.0, %v2503
        %v2505 = vpop.f32.mrf.mxu0
        %v2506 = vadd.f32 0.0, %v2505
        %2507 = vdwg.mxu0
        %v2508 = vadd.f32 %v2234, %v2469
        %v2509 = vadd.f32 %v2235, %v2471
        %v2510 = vadd.f32 %v2236, %v2474
        %v2511 = vadd.f32 %v2237, %v2476
        %v2512 = vadd.f32 %v2238, %v2479
        %v2513 = vadd.f32 %v2239, %v2481
        %v2514 = vadd.f32 %v2240, %v2484
        %v2515 = vadd.f32 %v2241, %v2486
        %v2516 = vadd.f32 %v2242, %v2489
        %v2517 = vadd.f32 %v2243, %v2491
        %v2518 = vadd.f32 %v2244, %v2494
        %v2519 = vadd.f32 %v2245, %v2496
        %v2520 = vadd.f32 %v2246, %v2499
        %v2521 = vadd.f32 %v2247, %v2501
        %v2522 = vadd.f32 %v2248, %v2504
        %v2523 = vadd.f32 %v2249, %v2506
        %s2524 = scalar_lea.vmem %s0, 16
        %v2525 = vld [vmem:[%s2524] sm:$0xf]
        %v2526 = vld [vmem:[%s2524 + $0x8] sm:$0xf]
        %v2527 = vld [vmem:[%s2524 + $0x10] sm:$0xf]
        %v2528 = vld [vmem:[%s2524 + $0x18] sm:$0xf]
        %v2529 = vld [vmem:[%s2524 + $0x20] sm:$0xf]
        %v2530 = vld [vmem:[%s2524 + $0x28] sm:$0xf]
        %v2531 = vld [vmem:[%s2524 + $0x30] sm:$0xf]
        %v2532 = vld [vmem:[%s2524 + $0x38] sm:$0xf]
        %v2533 = vld [vmem:[%s2524 + $0x50] sm:$0xf]
        %v2534 = vld [vmem:[%s2524 + $0x58] sm:$0xf]
        %v2535 = vld [vmem:[%s2524 + $0x60] sm:$0xf]
        %v2536 = vld [vmem:[%s2524 + $0x68] sm:$0xf]
        %v2537 = vld [vmem:[%s2524 + $0x70] sm:$0xf]
        %v2538 = vld [vmem:[%s2524 + $0x78] sm:$0xf]
        %v2539 = vld [vmem:[%s2524 + $0x80] sm:$0xf]
        %v2540 = vld [vmem:[%s2524 + $0x88] sm:$0xf]
        %s2541 = scalar_lea.vmem %s768, 384 [#allocation2]
        %v2542 = vld [vmem:[%s2541] sm:$0xf]
        %v2543 = vld [vmem:[%s2541 + $0x4] sm:$0xf]
        %v2544 = vld [vmem:[%s2541 + $0x8] sm:$0xf]
        %v2545 = vld [vmem:[%s2541 + $0xc] sm:$0xf]
        %v2546 = vld [vmem:[%s2541 + $0x10] sm:$0xf]
        %v2547 = vld [vmem:[%s2541 + $0x14] sm:$0xf]
        %v2548 = vld [vmem:[%s2541 + $0x18] sm:$0xf]
        %v2549 = vld [vmem:[%s2541 + $0x1c] sm:$0xf]
        %v2550 = vld [vmem:[%s2541 + $0x20] sm:$0xf]
        %v2551 = vld [vmem:[%s2541 + $0x24] sm:$0xf]
        %v2552 = vld [vmem:[%s2541 + $0x28] sm:$0xf]
        %v2553 = vld [vmem:[%s2541 + $0x2c] sm:$0xf]
        %v2554 = vld [vmem:[%s2541 + $0x30] sm:$0xf]
        %v2555 = vld [vmem:[%s2541 + $0x34] sm:$0xf]
        %v2556 = vld [vmem:[%s2541 + $0x38] sm:$0xf]
        %v2557 = vld [vmem:[%s2541 + $0x3c] sm:$0xf]
        %v2574 = vunpack.c.l.b16 %v2525
        %v2575 = vunpack.c.l.b16 %v2526
        %v2576 = vunpack.c.l.b16 %v2527
        %v2577 = vunpack.c.l.b16 %v2528
        %v2578 = vunpack.c.l.b16 %v2529
        %v2579 = vunpack.c.l.b16 %v2530
        %v2580 = vunpack.c.l.b16 %v2531
        %v2581 = vunpack.c.l.b16 %v2532
        %v2582 = vunpack.c.l.b16 %v2533
        %v2583 = vunpack.c.l.b16 %v2534
        %v2584 = vunpack.c.l.b16 %v2535
        %v2585 = vunpack.c.l.b16 %v2536
        %v2586 = vunpack.c.l.b16 %v2537
        %v2587 = vunpack.c.l.b16 %v2538
        %v2588 = vunpack.c.l.b16 %v2539
        %v2589 = vunpack.c.l.b16 %v2540
        %v2590 = vpack.c.b16 %v2575, %v2574
        %v2591 = vpack.c.b16 %v2577, %v2576
        %v2592 = vpack.c.b16 %v2579, %v2578
        %v2593 = vpack.c.b16 %v2581, %v2580
        %v2594 = vpack.c.b16 %v2583, %v2582
        %v2595 = vpack.c.b16 %v2585, %v2584
        %v2596 = vpack.c.b16 %v2587, %v2586
        %v2597 = vpack.c.b16 %v2589, %v2588
        %v2622 = vunpack.c.l.b16 %v2542
        %v2623 = vunpack.c.l.b16 %v2543
        %v2624 = vunpack.c.l.b16 %v2544
        %v2625 = vunpack.c.l.b16 %v2545
        %v2626 = vunpack.c.l.b16 %v2546
        %v2627 = vunpack.c.l.b16 %v2547
        %v2628 = vunpack.c.l.b16 %v2548
        %v2629 = vunpack.c.l.b16 %v2549
        %v2630 = vunpack.c.l.b16 %v2550
        %v2631 = vunpack.c.l.b16 %v2551
        %v2632 = vunpack.c.l.b16 %v2552
        %v2633 = vunpack.c.l.b16 %v2553
        %v2634 = vunpack.c.l.b16 %v2554
        %v2635 = vunpack.c.l.b16 %v2555
        %v2636 = vunpack.c.l.b16 %v2556
        %v2637 = vunpack.c.l.b16 %v2557
        %v2638 = vpack.c.b16 %v2623, %v2622
        %v2639 = vpack.c.b16 %v2625, %v2624
        %v2640 = vpack.c.b16 %v2627, %v2626
        %v2641 = vpack.c.b16 %v2629, %v2628
        %v2642 = vpack.c.b16 %v2631, %v2630
        %v2643 = vpack.c.b16 %v2633, %v2632
        %v2644 = vpack.c.b16 %v2635, %v2634
        %v2645 = vpack.c.b16 %v2637, %v2636
        %2654 = vmatpush.bf16.msra.mxu0 %v2645
        %2655 = vmatpush.bf16.msra.mxu0 %v2644
        %2656 = vmatpush.bf16.msra.mxu0 %v2643
        %2657 = vmatpush.bf16.msra.mxu0 %v2642
        %2658 = vmatpush.bf16.msra.mxu0 %v2641
        %2659 = vmatpush.bf16.msra.mxu0 %v2640
        %2660 = vmatpush.bf16.msra.mxu0 %v2639
        %2661 = vmatpush.bf16.msra.mxu0 %v2638
        %2662 = vmatmul.bf16.gmra.mxu0 %v2590
        %v2663 = vpop.f32.mrf.mxu0
        %v2664 = vadd.f32 0.0, %v2663
        %v2665 = vpop.f32.mrf.mxu0
        %v2666 = vadd.f32 0.0, %v2665
        %2667 = vmatmul.bf16.gmra.mxu0 %v2591
        %v2668 = vpop.f32.mrf.mxu0
        %v2669 = vadd.f32 0.0, %v2668
        %v2670 = vpop.f32.mrf.mxu0
        %v2671 = vadd.f32 0.0, %v2670
        %2672 = vmatmul.bf16.gmra.mxu0 %v2592
        %v2673 = vpop.f32.mrf.mxu0
        %v2674 = vadd.f32 0.0, %v2673
        %v2675 = vpop.f32.mrf.mxu0
        %v2676 = vadd.f32 0.0, %v2675
        %2677 = vmatmul.bf16.gmra.mxu0 %v2593
        %v2678 = vpop.f32.mrf.mxu0
        %v2679 = vadd.f32 0.0, %v2678
        %v2680 = vpop.f32.mrf.mxu0
        %v2681 = vadd.f32 0.0, %v2680
        %2682 = vmatmul.bf16.gmra.mxu0 %v2594
        %v2683 = vpop.f32.mrf.mxu0
        %v2684 = vadd.f32 0.0, %v2683
        %v2685 = vpop.f32.mrf.mxu0
        %v2686 = vadd.f32 0.0, %v2685
        %2687 = vmatmul.bf16.gmra.mxu0 %v2595
        %v2688 = vpop.f32.mrf.mxu0
        %v2689 = vadd.f32 0.0, %v2688
        %v2690 = vpop.f32.mrf.mxu0
        %v2691 = vadd.f32 0.0, %v2690
        %2692 = vmatmul.bf16.gmra.mxu0 %v2596
        %v2693 = vpop.f32.mrf.mxu0
        %v2694 = vadd.f32 0.0, %v2693
        %v2695 = vpop.f32.mrf.mxu0
        %v2696 = vadd.f32 0.0, %v2695
        %2697 = vmatmul.bf16.gmra.mxu0 %v2597
        %v2698 = vpop.f32.mrf.mxu0
        %v2699 = vadd.f32 0.0, %v2698
        %v2700 = vpop.f32.mrf.mxu0
        %v2701 = vadd.f32 0.0, %v2700
        %2702 = vdwg.mxu0
        %v2703 = vadd.f32 %v2508, %v2664
        %v2704 = vadd.f32 %v2509, %v2666
        %v2705 = vadd.f32 %v2510, %v2669
        %v2706 = vadd.f32 %v2511, %v2671
        %v2707 = vadd.f32 %v2512, %v2674
        %v2708 = vadd.f32 %v2513, %v2676
        %v2709 = vadd.f32 %v2514, %v2679
        %v2710 = vadd.f32 %v2515, %v2681
        %v2711 = vadd.f32 %v2516, %v2684
        %v2712 = vadd.f32 %v2517, %v2686
        %v2713 = vadd.f32 %v2518, %v2689
        %v2714 = vadd.f32 %v2519, %v2691
        %v2715 = vadd.f32 %v2520, %v2694
        %v2716 = vadd.f32 %v2521, %v2696
        %v2717 = vadd.f32 %v2522, %v2699
        %v2718 = vadd.f32 %v2523, %v2701
        %v2719 = vld [vmem:[%s2524] sm:$0xf]
        %v2720 = vld [vmem:[%s2524 + $0x4] sm:$0x1]
        %v2721 = vld [vmem:[%s2524 + $0x8] sm:$0xf]
        %v2722 = vld [vmem:[%s2524 + $0xc] sm:$0x1]
        %v2723 = vld [vmem:[%s2524 + $0x10] sm:$0xf]
        %v2724 = vld [vmem:[%s2524 + $0x14] sm:$0x1]
        %v2725 = vld [vmem:[%s2524 + $0x18] sm:$0xf]
        %v2726 = vld [vmem:[%s2524 + $0x1c] sm:$0x1]
        %v2727 = vld [vmem:[%s2524 + $0x20] sm:$0xf]
        %v2728 = vld [vmem:[%s2524 + $0x24] sm:$0x1]
        %v2729 = vld [vmem:[%s2524 + $0x28] sm:$0xf]
        %v2730 = vld [vmem:[%s2524 + $0x2c] sm:$0x1]
        %v2731 = vld [vmem:[%s2524 + $0x30] sm:$0xf]
        %v2732 = vld [vmem:[%s2524 + $0x34] sm:$0x1]
        %v2733 = vld [vmem:[%s2524 + $0x38] sm:$0xf]
        %v2734 = vld [vmem:[%s2524 + $0x3c] sm:$0x1]
        %v2735 = vld [vmem:[%s2524 + $0x50] sm:$0xf]
        %v2736 = vld [vmem:[%s2524 + $0x54] sm:$0x1]
        %v2737 = vld [vmem:[%s2524 + $0x58] sm:$0xf]
        %v2738 = vld [vmem:[%s2524 + $0x5c] sm:$0x1]
        %v2739 = vld [vmem:[%s2524 + $0x60] sm:$0xf]
        %v2740 = vld [vmem:[%s2524 + $0x64] sm:$0x1]
        %v2741 = vld [vmem:[%s2524 + $0x68] sm:$0xf]
        %v2742 = vld [vmem:[%s2524 + $0x6c] sm:$0x1]
        %v2743 = vld [vmem:[%s2524 + $0x70] sm:$0xf]
        %v2744 = vld [vmem:[%s2524 + $0x74] sm:$0x1]
        %v2745 = vld [vmem:[%s2524 + $0x78] sm:$0xf]
        %v2746 = vld [vmem:[%s2524 + $0x7c] sm:$0x1]
        %v2747 = vld [vmem:[%s2524 + $0x80] sm:$0xf]
        %v2748 = vld [vmem:[%s2524 + $0x84] sm:$0x1]
        %v2749 = vld [vmem:[%s2524 + $0x88] sm:$0xf]
        %v2750 = vld [vmem:[%s2524 + $0x8c] sm:$0x1]
        %v2752 = vshrl.u32 %v2719, 16
        %v2754 = vrot.slane %v2752, 4
        %v2755 = vshll.u32 %v2719, 16
        %v2757 = vrot.slane %v2755, 5
        %v2758 = vor.u32 %v2754, %v2757
        %v2759 = vrot.slane %v2758, 4
        %v2761 = vshll.u32 %v2720, 16
        %v2763 = vrot.slane %v2761, 5
        %v2764 = vsel %vm844, %v2759, %v2763
        %v2766 = vshrl.u32 %v2721, 16
        %v2768 = vrot.slane %v2766, 4
        %v2769 = vshll.u32 %v2721, 16
        %v2771 = vrot.slane %v2769, 5
        %v2772 = vor.u32 %v2768, %v2771
        %v2773 = vrot.slane %v2772, 4
        %v2775 = vshll.u32 %v2722, 16
        %v2777 = vrot.slane %v2775, 5
        %v2778 = vsel %vm844, %v2773, %v2777
        %v2780 = vshrl.u32 %v2723, 16
        %v2782 = vrot.slane %v2780, 4
        %v2783 = vshll.u32 %v2723, 16
        %v2785 = vrot.slane %v2783, 5
        %v2786 = vor.u32 %v2782, %v2785
        %v2787 = vrot.slane %v2786, 4
        %v2789 = vshll.u32 %v2724, 16
        %v2791 = vrot.slane %v2789, 5
        %v2792 = vsel %vm844, %v2787, %v2791
        %v2794 = vshrl.u32 %v2725, 16
        %v2796 = vrot.slane %v2794, 4
        %v2797 = vshll.u32 %v2725, 16
        %v2799 = vrot.slane %v2797, 5
        %v2800 = vor.u32 %v2796, %v2799
        %v2801 = vrot.slane %v2800, 4
        %v2803 = vshll.u32 %v2726, 16
        %v2805 = vrot.slane %v2803, 5
        %v2806 = vsel %vm844, %v2801, %v2805
        %v2808 = vshrl.u32 %v2727, 16
        %v2810 = vrot.slane %v2808, 4
        %v2811 = vshll.u32 %v2727, 16
        %v2813 = vrot.slane %v2811, 5
        %v2814 = vor.u32 %v2810, %v2813
        %v2815 = vrot.slane %v2814, 4
        %v2817 = vshll.u32 %v2728, 16
        %v2819 = vrot.slane %v2817, 5
        %v2820 = vsel %vm844, %v2815, %v2819
        %v2822 = vshrl.u32 %v2729, 16
        %v2824 = vrot.slane %v2822, 4
        %v2825 = vshll.u32 %v2729, 16
        %v2827 = vrot.slane %v2825, 5
        %v2828 = vor.u32 %v2824, %v2827
        %v2829 = vrot.slane %v2828, 4
        %v2831 = vshll.u32 %v2730, 16
        %v2833 = vrot.slane %v2831, 5
        %v2834 = vsel %vm844, %v2829, %v2833
        %v2836 = vshrl.u32 %v2731, 16
        %v2838 = vrot.slane %v2836, 4
        %v2839 = vshll.u32 %v2731, 16
        %v2841 = vrot.slane %v2839, 5
        %v2842 = vor.u32 %v2838, %v2841
        %v2843 = vrot.slane %v2842, 4
        %v2845 = vshll.u32 %v2732, 16
        %v2847 = vrot.slane %v2845, 5
        %v2848 = vsel %vm844, %v2843, %v2847
        %v2850 = vshrl.u32 %v2733, 16
        %v2852 = vrot.slane %v2850, 4
        %v2853 = vshll.u32 %v2733, 16
        %v2855 = vrot.slane %v2853, 5
        %v2856 = vor.u32 %v2852, %v2855
        %v2857 = vrot.slane %v2856, 4
        %v2859 = vshll.u32 %v2734, 16
        %v2861 = vrot.slane %v2859, 5
        %v2862 = vsel %vm844, %v2857, %v2861
        %v2864 = vshrl.u32 %v2735, 16
        %v2866 = vrot.slane %v2864, 4
        %v2867 = vshll.u32 %v2735, 16
        %v2869 = vrot.slane %v2867, 5
        %v2870 = vor.u32 %v2866, %v2869
        %v2871 = vrot.slane %v2870, 4
        %v2873 = vshll.u32 %v2736, 16
        %v2875 = vrot.slane %v2873, 5
        %v2876 = vsel %vm844, %v2871, %v2875
        %v2878 = vshrl.u32 %v2737, 16
        %v2880 = vrot.slane %v2878, 4
        %v2881 = vshll.u32 %v2737, 16
        %v2883 = vrot.slane %v2881, 5
        %v2884 = vor.u32 %v2880, %v2883
        %v2885 = vrot.slane %v2884, 4
        %v2887 = vshll.u32 %v2738, 16
        %v2889 = vrot.slane %v2887, 5
        %v2890 = vsel %vm844, %v2885, %v2889
        %v2892 = vshrl.u32 %v2739, 16
        %v2894 = vrot.slane %v2892, 4
        %v2895 = vshll.u32 %v2739, 16
        %v2897 = vrot.slane %v2895, 5
        %v2898 = vor.u32 %v2894, %v2897
        %v2899 = vrot.slane %v2898, 4
        %v2901 = vshll.u32 %v2740, 16
        %v2903 = vrot.slane %v2901, 5
        %v2904 = vsel %vm844, %v2899, %v2903
        %v2906 = vshrl.u32 %v2741, 16
        %v2908 = vrot.slane %v2906, 4
        %v2909 = vshll.u32 %v2741, 16
        %v2911 = vrot.slane %v2909, 5
        %v2912 = vor.u32 %v2908, %v2911
        %v2913 = vrot.slane %v2912, 4
        %v2915 = vshll.u32 %v2742, 16
        %v2917 = vrot.slane %v2915, 5
        %v2918 = vsel %vm844, %v2913, %v2917
        %v2920 = vshrl.u32 %v2743, 16
        %v2922 = vrot.slane %v2920, 4
        %v2923 = vshll.u32 %v2743, 16
        %v2925 = vrot.slane %v2923, 5
        %v2926 = vor.u32 %v2922, %v2925
        %v2927 = vrot.slane %v2926, 4
        %v2929 = vshll.u32 %v2744, 16
        %v2931 = vrot.slane %v2929, 5
        %v2932 = vsel %vm844, %v2927, %v2931
        %v2934 = vshrl.u32 %v2745, 16
        %v2936 = vrot.slane %v2934, 4
        %v2937 = vshll.u32 %v2745, 16
        %v2939 = vrot.slane %v2937, 5
        %v2940 = vor.u32 %v2936, %v2939
        %v2941 = vrot.slane %v2940, 4
        %v2943 = vshll.u32 %v2746, 16
        %v2945 = vrot.slane %v2943, 5
        %v2946 = vsel %vm844, %v2941, %v2945
        %v2948 = vshrl.u32 %v2747, 16
        %v2950 = vrot.slane %v2948, 4
        %v2951 = vshll.u32 %v2747, 16
        %v2953 = vrot.slane %v2951, 5
        %v2954 = vor.u32 %v2950, %v2953
        %v2955 = vrot.slane %v2954, 4
        %v2957 = vshll.u32 %v2748, 16
        %v2959 = vrot.slane %v2957, 5
        %v2960 = vsel %vm844, %v2955, %v2959
        %v2962 = vshrl.u32 %v2749, 16
        %v2964 = vrot.slane %v2962, 4
        %v2965 = vshll.u32 %v2749, 16
        %v2967 = vrot.slane %v2965, 5
        %v2968 = vor.u32 %v2964, %v2967
        %v2969 = vrot.slane %v2968, 4
        %v2971 = vshll.u32 %v2750, 16
        %v2973 = vrot.slane %v2971, 5
        %v2974 = vsel %vm844, %v2969, %v2973
        %s2975 = scalar_lea.vmem %s768, 448 [#allocation2]
        %v2976 = vld [vmem:[%s2975] sm:$0xf]
        %v2977 = vld [vmem:[%s2975 + $0x4] sm:$0xf]
        %v2978 = vld [vmem:[%s2975 + $0x8] sm:$0xf]
        %v2979 = vld [vmem:[%s2975 + $0xc] sm:$0xf]
        %v2980 = vld [vmem:[%s2975 + $0x10] sm:$0xf]
        %v2981 = vld [vmem:[%s2975 + $0x14] sm:$0xf]
        %v2982 = vld [vmem:[%s2975 + $0x18] sm:$0xf]
        %v2983 = vld [vmem:[%s2975 + $0x1c] sm:$0xf]
        %v2984 = vld [vmem:[%s2975 + $0x20] sm:$0xf]
        %v2985 = vld [vmem:[%s2975 + $0x24] sm:$0xf]
        %v2986 = vld [vmem:[%s2975 + $0x28] sm:$0xf]
        %v2987 = vld [vmem:[%s2975 + $0x2c] sm:$0xf]
        %v2988 = vld [vmem:[%s2975 + $0x30] sm:$0xf]
        %v2989 = vld [vmem:[%s2975 + $0x34] sm:$0xf]
        %v2990 = vld [vmem:[%s2975 + $0x38] sm:$0xf]
        %v2991 = vld [vmem:[%s2975 + $0x3c] sm:$0xf]
        %v2992 = vunpack.c.l.b16 %v2764
        %v2993 = vunpack.c.l.b16 %v2778
        %v2994 = vunpack.c.l.b16 %v2792
        %v2995 = vunpack.c.l.b16 %v2806
        %v2996 = vunpack.c.l.b16 %v2820
        %v2997 = vunpack.c.l.b16 %v2834
        %v2998 = vunpack.c.l.b16 %v2848
        %v2999 = vunpack.c.l.b16 %v2862
        %v3000 = vunpack.c.l.b16 %v2876
        %v3001 = vunpack.c.l.b16 %v2890
        %v3002 = vunpack.c.l.b16 %v2904
        %v3003 = vunpack.c.l.b16 %v2918
        %v3004 = vunpack.c.l.b16 %v2932
        %v3005 = vunpack.c.l.b16 %v2946
        %v3006 = vunpack.c.l.b16 %v2960
        %v3007 = vunpack.c.l.b16 %v2974
        %v3008 = vpack.c.b16 %v2993, %v2992
        %v3009 = vpack.c.b16 %v2995, %v2994
        %v3010 = vpack.c.b16 %v2997, %v2996
        %v3011 = vpack.c.b16 %v2999, %v2998
        %v3012 = vpack.c.b16 %v3001, %v3000
        %v3013 = vpack.c.b16 %v3003, %v3002
        %v3014 = vpack.c.b16 %v3005, %v3004
        %v3015 = vpack.c.b16 %v3007, %v3006
        %v3040 = vunpack.c.l.b16 %v2976
        %v3041 = vunpack.c.l.b16 %v2977
        %v3042 = vunpack.c.l.b16 %v2978
        %v3043 = vunpack.c.l.b16 %v2979
        %v3044 = vunpack.c.l.b16 %v2980
        %v3045 = vunpack.c.l.b16 %v2981
        %v3046 = vunpack.c.l.b16 %v2982
        %v3047 = vunpack.c.l.b16 %v2983
        %v3048 = vunpack.c.l.b16 %v2984
        %v3049 = vunpack.c.l.b16 %v2985
        %v3050 = vunpack.c.l.b16 %v2986
        %v3051 = vunpack.c.l.b16 %v2987
        %v3052 = vunpack.c.l.b16 %v2988
        %v3053 = vunpack.c.l.b16 %v2989
        %v3054 = vunpack.c.l.b16 %v2990
        %v3055 = vunpack.c.l.b16 %v2991
        %v3056 = vpack.c.b16 %v3041, %v3040
        %v3057 = vpack.c.b16 %v3043, %v3042
        %v3058 = vpack.c.b16 %v3045, %v3044
        %v3059 = vpack.c.b16 %v3047, %v3046
        %v3060 = vpack.c.b16 %v3049, %v3048
        %v3061 = vpack.c.b16 %v3051, %v3050
        %v3062 = vpack.c.b16 %v3053, %v3052
        %v3063 = vpack.c.b16 %v3055, %v3054
        %3072 = vmatpush.bf16.msra.mxu0 %v3063
        %3073 = vmatpush.bf16.msra.mxu0 %v3062
        %3074 = vmatpush.bf16.msra.mxu0 %v3061
        %3075 = vmatpush.bf16.msra.mxu0 %v3060
        %3076 = vmatpush.bf16.msra.mxu0 %v3059
        %3077 = vmatpush.bf16.msra.mxu0 %v3058
        %3078 = vmatpush.bf16.msra.mxu0 %v3057
        %3079 = vmatpush.bf16.msra.mxu0 %v3056
        %3080 = vmatmul.bf16.gmra.mxu0 %v3008
        %v3081 = vpop.f32.mrf.mxu0
        %v3082 = vadd.f32 0.0, %v3081
        %v3083 = vpop.f32.mrf.mxu0
        %v3084 = vadd.f32 0.0, %v3083
        %3085 = vmatmul.bf16.gmra.mxu0 %v3009
        %v3086 = vpop.f32.mrf.mxu0
        %v3087 = vadd.f32 0.0, %v3086
        %v3088 = vpop.f32.mrf.mxu0
        %v3089 = vadd.f32 0.0, %v3088
        %3090 = vmatmul.bf16.gmra.mxu0 %v3010
        %v3091 = vpop.f32.mrf.mxu0
        %v3092 = vadd.f32 0.0, %v3091
        %v3093 = vpop.f32.mrf.mxu0
        %v3094 = vadd.f32 0.0, %v3093
        %3095 = vmatmul.bf16.gmra.mxu0 %v3011
        %v3096 = vpop.f32.mrf.mxu0
        %v3097 = vadd.f32 0.0, %v3096
        %v3098 = vpop.f32.mrf.mxu0
        %v3099 = vadd.f32 0.0, %v3098
        %3100 = vmatmul.bf16.gmra.mxu0 %v3012
        %v3101 = vpop.f32.mrf.mxu0
        %v3102 = vadd.f32 0.0, %v3101
        %v3103 = vpop.f32.mrf.mxu0
        %v3104 = vadd.f32 0.0, %v3103
        %3105 = vmatmul.bf16.gmra.mxu0 %v3013
        %v3106 = vpop.f32.mrf.mxu0
        %v3107 = vadd.f32 0.0, %v3106
        %v3108 = vpop.f32.mrf.mxu0
        %v3109 = vadd.f32 0.0, %v3108
        %3110 = vmatmul.bf16.gmra.mxu0 %v3014
        %v3111 = vpop.f32.mrf.mxu0
        %v3112 = vadd.f32 0.0, %v3111
        %v3113 = vpop.f32.mrf.mxu0
        %v3114 = vadd.f32 0.0, %v3113
        %3115 = vmatmul.bf16.gmra.mxu0 %v3015
        %v3116 = vpop.f32.mrf.mxu0
        %v3117 = vadd.f32 0.0, %v3116
        %v3118 = vpop.f32.mrf.mxu0
        %v3119 = vadd.f32 0.0, %v3118
        %3120 = vdwg.mxu0
        %v3121 = vadd.f32 %v2703, %v3082
        %v3122 = vadd.f32 %v2704, %v3084
        %v3123 = vadd.f32 %v2705, %v3087
        %v3124 = vadd.f32 %v2706, %v3089
        %v3125 = vadd.f32 %v2707, %v3092
        %v3126 = vadd.f32 %v2708, %v3094
        %v3127 = vadd.f32 %v2709, %v3097
        %v3128 = vadd.f32 %v2710, %v3099
        %v3129 = vadd.f32 %v2711, %v3102
        %v3130 = vadd.f32 %v2712, %v3104
        %v3131 = vadd.f32 %v2713, %v3107
        %v3132 = vadd.f32 %v2714, %v3109
        %v3133 = vadd.f32 %v2715, %v3112
        %v3134 = vadd.f32 %v2716, %v3114
        %v3135 = vadd.f32 %v2717, %v3117
        %v3136 = vadd.f32 %v2718, %v3119
        %v3137 = vld [vmem:[%s2524] sm:$0xe]
        %v3138 = vld [vmem:[%s2524 + $0x8] sm:$0xe]
        %v3139 = vld [vmem:[%s2524 + $0x10] sm:$0xe]
        %v3140 = vld [vmem:[%s2524 + $0x18] sm:$0xe]
        %v3141 = vld [vmem:[%s2524 + $0x20] sm:$0xe]
        %v3142 = vld [vmem:[%s2524 + $0x28] sm:$0xe]
        %v3143 = vld [vmem:[%s2524 + $0x30] sm:$0xe]
        %v3144 = vld [vmem:[%s2524 + $0x38] sm:$0xe]
        %v3145 = vld [vmem:[%s2524 + $0x50] sm:$0xe]
        %v3146 = vld [vmem:[%s2524 + $0x58] sm:$0xe]
        %v3147 = vld [vmem:[%s2524 + $0x60] sm:$0xe]
        %v3148 = vld [vmem:[%s2524 + $0x68] sm:$0xe]
        %v3149 = vld [vmem:[%s2524 + $0x70] sm:$0xe]
        %v3150 = vld [vmem:[%s2524 + $0x78] sm:$0xe]
        %v3151 = vld [vmem:[%s2524 + $0x80] sm:$0xe]
        %v3152 = vld [vmem:[%s2524 + $0x88] sm:$0xe]
        %v3185 = vrot.slane %v3137, 5
        %v3186 = vrot.slane %v3185, 4
        %v3187 = vrot.slane %v2720, 5
        %v3188 = vsel %vm1410, %v3186, %v3187
        %v3189 = vrot.slane %v3138, 5
        %v3190 = vrot.slane %v3189, 4
        %v3191 = vrot.slane %v2722, 5
        %v3192 = vsel %vm1410, %v3190, %v3191
        %v3193 = vrot.slane %v3139, 5
        %v3194 = vrot.slane %v3193, 4
        %v3195 = vrot.slane %v2724, 5
        %v3196 = vsel %vm1410, %v3194, %v3195
        %v3197 = vrot.slane %v3140, 5
        %v3198 = vrot.slane %v3197, 4
        %v3199 = vrot.slane %v2726, 5
        %v3200 = vsel %vm1410, %v3198, %v3199
        %v3201 = vrot.slane %v3141, 5
        %v3202 = vrot.slane %v3201, 4
        %v3203 = vrot.slane %v2728, 5
        %v3204 = vsel %vm1410, %v3202, %v3203
        %v3205 = vrot.slane %v3142, 5
        %v3206 = vrot.slane %v3205, 4
        %v3207 = vrot.slane %v2730, 5
        %v3208 = vsel %vm1410, %v3206, %v3207
        %v3209 = vrot.slane %v3143, 5
        %v3210 = vrot.slane %v3209, 4
        %v3211 = vrot.slane %v2732, 5
        %v3212 = vsel %vm1410, %v3210, %v3211
        %v3213 = vrot.slane %v3144, 5
        %v3214 = vrot.slane %v3213, 4
        %v3215 = vrot.slane %v2734, 5
        %v3216 = vsel %vm1410, %v3214, %v3215
        %v3217 = vrot.slane %v3145, 5
        %v3218 = vrot.slane %v3217, 4
        %v3219 = vrot.slane %v2736, 5
        %v3220 = vsel %vm1410, %v3218, %v3219
        %v3221 = vrot.slane %v3146, 5
        %v3222 = vrot.slane %v3221, 4
        %v3223 = vrot.slane %v2738, 5
        %v3224 = vsel %vm1410, %v3222, %v3223
        %v3225 = vrot.slane %v3147, 5
        %v3226 = vrot.slane %v3225, 4
        %v3227 = vrot.slane %v2740, 5
        %v3228 = vsel %vm1410, %v3226, %v3227
        %v3229 = vrot.slane %v3148, 5
        %v3230 = vrot.slane %v3229, 4
        %v3231 = vrot.slane %v2742, 5
        %v3232 = vsel %vm1410, %v3230, %v3231
        %v3233 = vrot.slane %v3149, 5
        %v3234 = vrot.slane %v3233, 4
        %v3235 = vrot.slane %v2744, 5
        %v3236 = vsel %vm1410, %v3234, %v3235
        %v3237 = vrot.slane %v3150, 5
        %v3238 = vrot.slane %v3237, 4
        %v3239 = vrot.slane %v2746, 5
        %v3240 = vsel %vm1410, %v3238, %v3239
        %v3241 = vrot.slane %v3151, 5
        %v3242 = vrot.slane %v3241, 4
        %v3243 = vrot.slane %v2748, 5
        %v3244 = vsel %vm1410, %v3242, %v3243
        %v3245 = vrot.slane %v3152, 5
        %v3246 = vrot.slane %v3245, 4
        %v3247 = vrot.slane %v2750, 5
        %v3248 = vsel %vm1410, %v3246, %v3247
        %s3249 = scalar_lea.vmem %s768, 512 [#allocation2]
        %v3250 = vld [vmem:[%s3249] sm:$0xf]
        %v3251 = vld [vmem:[%s3249 + $0x4] sm:$0xf]
        %v3252 = vld [vmem:[%s3249 + $0x8] sm:$0xf]
        %v3253 = vld [vmem:[%s3249 + $0xc] sm:$0xf]
        %v3254 = vld [vmem:[%s3249 + $0x10] sm:$0xf]
        %v3255 = vld [vmem:[%s3249 + $0x14] sm:$0xf]
        %v3256 = vld [vmem:[%s3249 + $0x18] sm:$0xf]
        %v3257 = vld [vmem:[%s3249 + $0x1c] sm:$0xf]
        %v3258 = vld [vmem:[%s3249 + $0x20] sm:$0xf]
        %v3259 = vld [vmem:[%s3249 + $0x24] sm:$0xf]
        %v3260 = vld [vmem:[%s3249 + $0x28] sm:$0xf]
        %v3261 = vld [vmem:[%s3249 + $0x2c] sm:$0xf]
        %v3262 = vld [vmem:[%s3249 + $0x30] sm:$0xf]
        %v3263 = vld [vmem:[%s3249 + $0x34] sm:$0xf]
        %v3264 = vld [vmem:[%s3249 + $0x38] sm:$0xf]
        %v3265 = vld [vmem:[%s3249 + $0x3c] sm:$0xf]
        %v3266 = vunpack.c.l.b16 %v3188
        %v3267 = vunpack.c.l.b16 %v3192
        %v3268 = vunpack.c.l.b16 %v3196
        %v3269 = vunpack.c.l.b16 %v3200
        %v3270 = vunpack.c.l.b16 %v3204
        %v3271 = vunpack.c.l.b16 %v3208
        %v3272 = vunpack.c.l.b16 %v3212
        %v3273 = vunpack.c.l.b16 %v3216
        %v3274 = vunpack.c.l.b16 %v3220
        %v3275 = vunpack.c.l.b16 %v3224
        %v3276 = vunpack.c.l.b16 %v3228
        %v3277 = vunpack.c.l.b16 %v3232
        %v3278 = vunpack.c.l.b16 %v3236
        %v3279 = vunpack.c.l.b16 %v3240
        %v3280 = vunpack.c.l.b16 %v3244
        %v3281 = vunpack.c.l.b16 %v3248
        %v3282 = vpack.c.b16 %v3267, %v3266
        %v3283 = vpack.c.b16 %v3269, %v3268
        %v3284 = vpack.c.b16 %v3271, %v3270
        %v3285 = vpack.c.b16 %v3273, %v3272
        %v3286 = vpack.c.b16 %v3275, %v3274
        %v3287 = vpack.c.b16 %v3277, %v3276
        %v3288 = vpack.c.b16 %v3279, %v3278
        %v3289 = vpack.c.b16 %v3281, %v3280
        %v3314 = vunpack.c.l.b16 %v3250
        %v3315 = vunpack.c.l.b16 %v3251
        %v3316 = vunpack.c.l.b16 %v3252
        %v3317 = vunpack.c.l.b16 %v3253
        %v3318 = vunpack.c.l.b16 %v3254
        %v3319 = vunpack.c.l.b16 %v3255
        %v3320 = vunpack.c.l.b16 %v3256
        %v3321 = vunpack.c.l.b16 %v3257
        %v3322 = vunpack.c.l.b16 %v3258
        %v3323 = vunpack.c.l.b16 %v3259
        %v3324 = vunpack.c.l.b16 %v3260
        %v3325 = vunpack.c.l.b16 %v3261
        %v3326 = vunpack.c.l.b16 %v3262
        %v3327 = vunpack.c.l.b16 %v3263
        %v3328 = vunpack.c.l.b16 %v3264
        %v3329 = vunpack.c.l.b16 %v3265
        %v3330 = vpack.c.b16 %v3315, %v3314
        %v3331 = vpack.c.b16 %v3317, %v3316
        %v3332 = vpack.c.b16 %v3319, %v3318
        %v3333 = vpack.c.b16 %v3321, %v3320
        %v3334 = vpack.c.b16 %v3323, %v3322
        %v3335 = vpack.c.b16 %v3325, %v3324
        %v3336 = vpack.c.b16 %v3327, %v3326
        %v3337 = vpack.c.b16 %v3329, %v3328
        %3346 = vmatpush.bf16.msra.mxu0 %v3337
        %3347 = vmatpush.bf16.msra.mxu0 %v3336
        %3348 = vmatpush.bf16.msra.mxu0 %v3335
        %3349 = vmatpush.bf16.msra.mxu0 %v3334
        %3350 = vmatpush.bf16.msra.mxu0 %v3333
        %3351 = vmatpush.bf16.msra.mxu0 %v3332
        %3352 = vmatpush.bf16.msra.mxu0 %v3331
        %3353 = vmatpush.bf16.msra.mxu0 %v3330
        %3354 = vmatmul.bf16.gmra.mxu0 %v3282
        %v3355 = vpop.f32.mrf.mxu0
        %v3356 = vadd.f32 0.0, %v3355
        %v3357 = vpop.f32.mrf.mxu0
        %v3358 = vadd.f32 0.0, %v3357
        %3359 = vmatmul.bf16.gmra.mxu0 %v3283
        %v3360 = vpop.f32.mrf.mxu0
        %v3361 = vadd.f32 0.0, %v3360
        %v3362 = vpop.f32.mrf.mxu0
        %v3363 = vadd.f32 0.0, %v3362
        %3364 = vmatmul.bf16.gmra.mxu0 %v3284
        %v3365 = vpop.f32.mrf.mxu0
        %v3366 = vadd.f32 0.0, %v3365
        %v3367 = vpop.f32.mrf.mxu0
        %v3368 = vadd.f32 0.0, %v3367
        %3369 = vmatmul.bf16.gmra.mxu0 %v3285
        %v3370 = vpop.f32.mrf.mxu0
        %v3371 = vadd.f32 0.0, %v3370
        %v3372 = vpop.f32.mrf.mxu0
        %v3373 = vadd.f32 0.0, %v3372
        %3374 = vmatmul.bf16.gmra.mxu0 %v3286
        %v3375 = vpop.f32.mrf.mxu0
        %v3376 = vadd.f32 0.0, %v3375
        %v3377 = vpop.f32.mrf.mxu0
        %v3378 = vadd.f32 0.0, %v3377
        %3379 = vmatmul.bf16.gmra.mxu0 %v3287
        %v3380 = vpop.f32.mrf.mxu0
        %v3381 = vadd.f32 0.0, %v3380
        %v3382 = vpop.f32.mrf.mxu0
        %v3383 = vadd.f32 0.0, %v3382
        %3384 = vmatmul.bf16.gmra.mxu0 %v3288
        %v3385 = vpop.f32.mrf.mxu0
        %v3386 = vadd.f32 0.0, %v3385
        %v3387 = vpop.f32.mrf.mxu0
        %v3388 = vadd.f32 0.0, %v3387
        %3389 = vmatmul.bf16.gmra.mxu0 %v3289
        %v3390 = vpop.f32.mrf.mxu0
        %v3391 = vadd.f32 0.0, %v3390
        %v3392 = vpop.f32.mrf.mxu0
        %v3393 = vadd.f32 0.0, %v3392
        %3394 = vdwg.mxu0
        %v3395 = vadd.f32 %v3121, %v3356
        %v3396 = vadd.f32 %v3122, %v3358
        %v3397 = vadd.f32 %v3123, %v3361
        %v3398 = vadd.f32 %v3124, %v3363
        %v3399 = vadd.f32 %v3125, %v3366
        %v3400 = vadd.f32 %v3126, %v3368
        %v3401 = vadd.f32 %v3127, %v3371
        %v3402 = vadd.f32 %v3128, %v3373
        %v3403 = vadd.f32 %v3129, %v3376
        %v3404 = vadd.f32 %v3130, %v3378
        %v3405 = vadd.f32 %v3131, %v3381
        %v3406 = vadd.f32 %v3132, %v3383
        %v3407 = vadd.f32 %v3133, %v3386
        %v3408 = vadd.f32 %v3134, %v3388
        %v3409 = vadd.f32 %v3135, %v3391
        %v3410 = vadd.f32 %v3136, %v3393
        %v3411 = vld [vmem:[%s793] sm:$0x1]
        %v3413 = vperm.slane %v3411, 0
        %v3415 = vadd.f32 %v3395, %v3413
        %v3416 = vadd.f32 %v3396, %v3413
        %v3417 = vadd.f32 %v3397, %v3413
        %v3418 = vadd.f32 %v3398, %v3413
        %v3419 = vadd.f32 %v3399, %v3413
        %v3420 = vadd.f32 %v3400, %v3413
        %v3421 = vadd.f32 %v3401, %v3413
        %v3422 = vadd.f32 %v3402, %v3413
        %v3423 = vadd.f32 %v3403, %v3413
        %v3424 = vadd.f32 %v3404, %v3413
        %v3425 = vadd.f32 %v3405, %v3413
        %v3426 = vadd.f32 %v3406, %v3413
        %v3427 = vadd.f32 %v3407, %v3413
        %v3428 = vadd.f32 %v3408, %v3413
        %v3429 = vadd.f32 %v3409, %v3413
        %v3430 = vadd.f32 %v3410, %v3413
        %vm3431 = vcmp.ge.f32.partialorder %v3415, 0.0
        %vm3432 = vcmp.ge.f32.partialorder %v3416, 0.0
        %vm3433 = vcmp.ge.f32.partialorder %v3417, 0.0
        %vm3434 = vcmp.ge.f32.partialorder %v3418, 0.0
        %vm3435 = vcmp.ge.f32.partialorder %v3419, 0.0
        %vm3436 = vcmp.ge.f32.partialorder %v3420, 0.0
        %vm3437 = vcmp.ge.f32.partialorder %v3421, 0.0
        %vm3438 = vcmp.ge.f32.partialorder %v3422, 0.0
        %vm3439 = vcmp.ge.f32.partialorder %v3423, 0.0
        %vm3440 = vcmp.ge.f32.partialorder %v3424, 0.0
        %vm3441 = vcmp.ge.f32.partialorder %v3425, 0.0
        %vm3442 = vcmp.ge.f32.partialorder %v3426, 0.0
        %vm3443 = vcmp.ge.f32.partialorder %v3427, 0.0
        %vm3444 = vcmp.ge.f32.partialorder %v3428, 0.0
        %vm3445 = vcmp.ge.f32.partialorder %v3429, 0.0
        %vm3446 = vcmp.ge.f32.partialorder %v3430, 0.0
        %v3447 = vmul.f32 %v3415, 0.1
        %v3448 = vmul.f32 %v3416, 0.1
        %v3449 = vmul.f32 %v3417, 0.1
        %v3450 = vmul.f32 %v3418, 0.1
        %v3451 = vmul.f32 %v3419, 0.1
        %v3452 = vmul.f32 %v3420, 0.1
        %v3453 = vmul.f32 %v3421, 0.1
        %v3454 = vmul.f32 %v3422, 0.1
        %v3455 = vmul.f32 %v3423, 0.1
        %v3456 = vmul.f32 %v3424, 0.1
        %v3457 = vmul.f32 %v3425, 0.1
        %v3458 = vmul.f32 %v3426, 0.1
        %v3459 = vmul.f32 %v3427, 0.1
        %v3460 = vmul.f32 %v3428, 0.1
        %v3461 = vmul.f32 %v3429, 0.1
        %v3462 = vmul.f32 %v3430, 0.1
        %v3463 = vsel %vm3431, %v3415, %v3447
        %v3464 = vsel %vm3432, %v3416, %v3448
        %v3465 = vsel %vm3433, %v3417, %v3449
        %v3466 = vsel %vm3434, %v3418, %v3450
        %v3467 = vsel %vm3435, %v3419, %v3451
        %v3468 = vsel %vm3436, %v3420, %v3452
        %v3469 = vsel %vm3437, %v3421, %v3453
        %v3470 = vsel %vm3438, %v3422, %v3454
        %v3471 = vsel %vm3439, %v3423, %v3455
        %v3472 = vsel %vm3440, %v3424, %v3456
        %v3473 = vsel %vm3441, %v3425, %v3457
        %v3474 = vsel %vm3442, %v3426, %v3458
        %v3475 = vsel %vm3443, %v3427, %v3459
        %v3476 = vsel %vm3444, %v3428, %v3460
        %v3477 = vsel %vm3445, %v3429, %v3461
        %v3478 = vsel %vm3446, %v3430, %v3462
        %v3479 = vpack.c.bf16 %v3463, %v3463
        %v3480 = vpack.c.bf16 %v3464, %v3464
        %v3481 = vpack.c.bf16 %v3465, %v3465
        %v3482 = vpack.c.bf16 %v3466, %v3466
        %v3483 = vpack.c.bf16 %v3467, %v3467
        %v3484 = vpack.c.bf16 %v3468, %v3468
        %v3485 = vpack.c.bf16 %v3469, %v3469
        %v3486 = vpack.c.bf16 %v3470, %v3470
        %v3487 = vpack.c.bf16 %v3471, %v3471
        %v3488 = vpack.c.bf16 %v3472, %v3472
        %v3489 = vpack.c.bf16 %v3473, %v3473
        %v3490 = vpack.c.bf16 %v3474, %v3474
        %v3491 = vpack.c.bf16 %v3475, %v3475
        %v3492 = vpack.c.bf16 %v3476, %v3476
        %v3493 = vpack.c.bf16 %v3477, %v3477
        %v3494 = vpack.c.bf16 %v3478, %v3478
        %3495 = vst [vmem:[%s790] sm:$0xf] %v3479
        %3496 = vst [vmem:[%s790 + $0x4] sm:$0xf] %v3480
        %3497 = vst [vmem:[%s790 + $0x8] sm:$0xf] %v3481
        %3498 = vst [vmem:[%s790 + $0xc] sm:$0xf] %v3482
        %3499 = vst [vmem:[%s790 + $0x10] sm:$0xf] %v3483
        %3500 = vst [vmem:[%s790 + $0x14] sm:$0xf] %v3484
        %3501 = vst [vmem:[%s790 + $0x18] sm:$0xf] %v3485
        %3502 = vst [vmem:[%s790 + $0x1c] sm:$0xf] %v3486
        %3503 = vst [vmem:[%s790 + $0x20] sm:$0xf] %v3487
        %3504 = vst [vmem:[%s790 + $0x24] sm:$0xf] %v3488
        %3505 = vst [vmem:[%s790 + $0x28] sm:$0xf] %v3489
        %3506 = vst [vmem:[%s790 + $0x2c] sm:$0xf] %v3490
        %3507 = vst [vmem:[%s790 + $0x30] sm:$0xf] %v3491
        %3508 = vst [vmem:[%s790 + $0x34] sm:$0xf] %v3492
        %3509 = vst [vmem:[%s790 + $0x38] sm:$0xf] %v3493
        %3510 = vst [vmem:[%s790 + $0x3c] sm:$0xf] %v3494
        %s3511 = sand.u32 %s95, 1
        %s3512 = sand.u32 %s95, 1
        %s3513 = smul.addr %s3512, 64
        %s3514 = scalar_lea.vmem [#allocation3], %s3513
        // Predicated region
        $region74: #{upsample_forward.1} parent=68 // pred_check
          %p3515 = pneg %p105
        $region75: #{upsample_forward.1} parent=68 // pred_check_branch
          %3517 = sbr.rel (%p3515) target = $region77
        $region76: #{upsample_forward.1} parent=68 // pred_region
          %s3518 = smul.addr %s14, 4
          %s3519 = scalar_lea.vmem %s3, %s3518
          // Predicated region
          $region78: #{upsample_forward.1} parent=76 // pred_check
            _
          $region79: #{upsample_forward.1} parent=76 // pred_check_branch
            %3521 = sbr.rel (0) target = $region81
          $region80: #{upsample_forward.1} parent=76 // pred_region
            // Predicated region
            $region82: #{upsample_forward.1} parent=80 // pred_check
              _
            $region83: #{upsample_forward.1} parent=80 // pred_check_branch
              %3523 = sbr.rel target = $region85
            $region84: #{upsample_forward.1} parent=80 // pred_region
              // Predicated region
              $region97: #{upsample_forward.1} parent=84 // pred_check
                _
              $region98: #{upsample_forward.1} parent=84 // pred_check_branch
                %3569 = sbr.rel (0) target = $region100
              $region99: #{upsample_forward.1} parent=84 // pred_region
                loop: start=0, step=1, limit=1
                $region101: #{upsample_forward.1} parent=99 // loop_pre_header
                  _
                $region102: #{upsample_forward.1} parent=99 // loop_header
                  %s3571 = sphi 0, %s3575
                  %p3572 = scmp.ge.s32.totalorder %s3571, 1
                  %s3576 = sphi %s3514, %s3514
                  %s3577 = sphi %s3519, %s3519
                $region103: #{upsample_forward.1} parent=99 // loop_header_branch
                  %3574 = sbr.rel (%p3572) target = $region107
                $region104: #{upsample_forward.1} parent=99 // loop_body
                  _
                $region105: #{upsample_forward.1} parent=99 // loop_footer
                  %s3575 = sadd.s32 1, %s3571
                $region106: #{upsample_forward.1} parent=99 // loop_footer_branch
                  %3570 = sbr.rel target = $region102
                $region107: #{upsample_forward.1} parent=99 // loop_exit
                  _
                %s3579 = ssub.s32 16, 1
                loop: start=0, step=1, limit=1
                $region108: #{upsample_forward.1} parent=99 // loop_pre_header
                  _
                $region109: #{upsample_forward.1} parent=99 // loop_header
                  %s3581 = sphi 0, %s3585
                  %p3582 = scmp.ge.s32.totalorder %s3581, 1
                  %s3586 = sphi %s3514, %s3514
                  %s3587 = sphi %s3519, %s3519
                $region110: #{upsample_forward.1} parent=99 // loop_header_branch
                  %3584 = sbr.rel (%p3582) target = $region114
                $region111: #{upsample_forward.1} parent=99 // loop_body
                  %v3588 = vld [vmem:[%s3586] sm:%s3579]
                  %3589 = vst [vmem:[%s3587] sm:%s3579] %v3588
                  %v3590 = vld [vmem:[%s3586 + $0x4] sm:%s3579]
                  %3591 = vst [vmem:[%s3587 + $0x10] sm:%s3579] %v3590
                  %v3592 = vld [vmem:[%s3586 + $0x8] sm:%s3579]
                  %3593 = vst [vmem:[%s3587 + $0x20] sm:%s3579] %v3592
                  %v3594 = vld [vmem:[%s3586 + $0xc] sm:%s3579]
                  %3595 = vst [vmem:[%s3587 + $0x30] sm:%s3579] %v3594
                  %v3596 = vld [vmem:[%s3586 + $0x10] sm:%s3579]
                  %3597 = vst [vmem:[%s3587 + $0x40] sm:%s3579] %v3596
                  %v3598 = vld [vmem:[%s3586 + $0x14] sm:%s3579]
                  %3599 = vst [vmem:[%s3587 + $0x50] sm:%s3579] %v3598
                  %v3600 = vld [vmem:[%s3586 + $0x18] sm:%s3579]
                  %3601 = vst [vmem:[%s3587 + $0x60] sm:%s3579] %v3600
                  %v3602 = vld [vmem:[%s3586 + $0x1c] sm:%s3579]
                  %3603 = vst [vmem:[%s3587 + $0x70] sm:%s3579] %v3602
                  %v3604 = vld [vmem:[%s3586 + $0x20] sm:%s3579]
                  %3605 = vst [vmem:[%s3587 + $0x80] sm:%s3579] %v3604
                  %v3606 = vld [vmem:[%s3586 + $0x24] sm:%s3579]
                  %3607 = vst [vmem:[%s3587 + $0x90] sm:%s3579] %v3606
                  %v3608 = vld [vmem:[%s3586 + $0x28] sm:%s3579]
                  %3609 = vst [vmem:[%s3587 + $0xa0] sm:%s3579] %v3608
                  %v3610 = vld [vmem:[%s3586 + $0x2c] sm:%s3579]
                  %3611 = vst [vmem:[%s3587 + $0xb0] sm:%s3579] %v3610
                  %v3612 = vld [vmem:[%s3586 + $0x30] sm:%s3579]
                  %3613 = vst [vmem:[%s3587 + $0xc0] sm:%s3579] %v3612
                  %v3614 = vld [vmem:[%s3586 + $0x34] sm:%s3579]
                  %3615 = vst [vmem:[%s3587 + $0xd0] sm:%s3579] %v3614
                  %v3616 = vld [vmem:[%s3586 + $0x38] sm:%s3579]
                  %3617 = vst [vmem:[%s3587 + $0xe0] sm:%s3579] %v3616
                  %v3618 = vld [vmem:[%s3586 + $0x3c] sm:%s3579]
                  %3619 = vst [vmem:[%s3587 + $0xf0] sm:%s3579] %v3618
                $region112: #{upsample_forward.1} parent=99 // loop_footer
                  %s3585 = sadd.s32 1, %s3581
                $region113: #{upsample_forward.1} parent=99 // loop_footer_branch
                  %3580 = sbr.rel target = $region109
                $region114: #{upsample_forward.1} parent=99 // loop_exit
                  _
              $region100: #{upsample_forward.1} parent=84 // pred_fallthru
                _
            $region85: #{upsample_forward.1} parent=80 // pred_fallthru
              _
            // Predicated region
            $region86: #{upsample_forward.1} parent=80 // pred_check
              _
            $region87: #{upsample_forward.1} parent=80 // pred_check_branch
              %3525 = sbr.rel (0) target = $region89
            $region88: #{upsample_forward.1} parent=80 // pred_region
              %s3527 = ssub.s32 16, 1
              loop: start=0, step=1, limit=1
              $region90: #{upsample_forward.1} parent=88 // loop_pre_header
                _
              $region91: #{upsample_forward.1} parent=88 // loop_header
                %s3529 = sphi 0, %s3533
                %p3530 = scmp.ge.s32.totalorder %s3529, 1
                %s3534 = sphi %s3514, %s3514
                %s3535 = sphi %s3519, %s3519
              $region92: #{upsample_forward.1} parent=88 // loop_header_branch
                %3532 = sbr.rel (%p3530) target = $region96
              $region93: #{upsample_forward.1} parent=88 // loop_body
                %v3536 = vld [vmem:[%s3534] sm:%s3527]
                %3537 = vst [vmem:[%s3535] sm:%s3527] %v3536
                %v3538 = vld [vmem:[%s3534 + $0x4] sm:%s3527]
                %3539 = vst [vmem:[%s3535 + $0x10] sm:%s3527] %v3538
                %v3540 = vld [vmem:[%s3534 + $0x8] sm:%s3527]
                %3541 = vst [vmem:[%s3535 + $0x20] sm:%s3527] %v3540
                %v3542 = vld [vmem:[%s3534 + $0xc] sm:%s3527]
                %3543 = vst [vmem:[%s3535 + $0x30] sm:%s3527] %v3542
                %v3544 = vld [vmem:[%s3534 + $0x10] sm:%s3527]
                %3545 = vst [vmem:[%s3535 + $0x40] sm:%s3527] %v3544
                %v3546 = vld [vmem:[%s3534 + $0x14] sm:%s3527]
                %3547 = vst [vmem:[%s3535 + $0x50] sm:%s3527] %v3546
                %v3548 = vld [vmem:[%s3534 + $0x18] sm:%s3527]
                %3549 = vst [vmem:[%s3535 + $0x60] sm:%s3527] %v3548
                %v3550 = vld [vmem:[%s3534 + $0x1c] sm:%s3527]
                %3551 = vst [vmem:[%s3535 + $0x70] sm:%s3527] %v3550
                %v3552 = vld [vmem:[%s3534 + $0x20] sm:%s3527]
                %3553 = vst [vmem:[%s3535 + $0x80] sm:%s3527] %v3552
                %v3554 = vld [vmem:[%s3534 + $0x24] sm:%s3527]
                %3555 = vst [vmem:[%s3535 + $0x90] sm:%s3527] %v3554
                %v3556 = vld [vmem:[%s3534 + $0x28] sm:%s3527]
                %3557 = vst [vmem:[%s3535 + $0xa0] sm:%s3527] %v3556
                %v3558 = vld [vmem:[%s3534 + $0x2c] sm:%s3527]
                %3559 = vst [vmem:[%s3535 + $0xb0] sm:%s3527] %v3558
                %v3560 = vld [vmem:[%s3534 + $0x30] sm:%s3527]
                %3561 = vst [vmem:[%s3535 + $0xc0] sm:%s3527] %v3560
                %v3562 = vld [vmem:[%s3534 + $0x34] sm:%s3527]
                %3563 = vst [vmem:[%s3535 + $0xd0] sm:%s3527] %v3562
                %v3564 = vld [vmem:[%s3534 + $0x38] sm:%s3527]
                %3565 = vst [vmem:[%s3535 + $0xe0] sm:%s3527] %v3564
                %v3566 = vld [vmem:[%s3534 + $0x3c] sm:%s3527]
                %3567 = vst [vmem:[%s3535 + $0xf0] sm:%s3527] %v3566
              $region94: #{upsample_forward.1} parent=88 // loop_footer
                %s3533 = sadd.s32 1, %s3529
              $region95: #{upsample_forward.1} parent=88 // loop_footer_branch
                %3528 = sbr.rel target = $region91
              $region96: #{upsample_forward.1} parent=88 // loop_exit
                _
            $region89: #{upsample_forward.1} parent=80 // pred_fallthru
              _
          $region81: #{upsample_forward.1} parent=76 // pred_fallthru
            _
          %3620 = vnop
        $region77: #{upsample_forward.1} parent=68 // pred_fallthru
          _
      $region69: #{upsample_forward.1} parent=5 // pred_fallthru
        _
      %p3621 = scmp.le.s32.totalorder 2, %s9
      // Predicated region
      $region115: #{upsample_forward.1} parent=5 // pred_check
        %p3622 = pneg %p3621
      $region116: #{upsample_forward.1} parent=5 // pred_check_branch
        %3624 = sbr.rel (%p3622) target = $region118
      $region117: #{upsample_forward.1} parent=5 // pred_region
        %s3625 = ssub.s32 %s9, 2
        // Predicated region
        $region119: #{upsample_forward.1} parent=117 // pred_check
          %p3626 = pneg %p111
        $region120: #{upsample_forward.1} parent=117 // pred_check_branch
          %3628 = sbr.rel (%p3626) target = $region122
        $region121: #{upsample_forward.1} parent=117 // pred_region
          %s3629 = sand.u32 %s96, 1
          %s3630 = sand.u32 %s96, 1
          %s3631 = smul.addr %s3630, 64
          %s3632 = scalar_lea.vmem [#allocation3], %s3631
        $region122: #{upsample_forward.1} parent=117 // pred_fallthru
          _
      $region118: #{upsample_forward.1} parent=5 // pred_fallthru
        _
    $region6: #{upsample_forward.1} parent=1 // loop_footer
      %s13 = sadd.s32 1, %s9
    $region7: #{upsample_forward.1} parent=1 // loop_footer_branch
      %8 = sbr.rel target = $region3
    $region8: #{upsample_forward.1} parent=1 // loop_exit
      _

</llo_original>
